<compile_context>
chip_gen: v7x
topology: tpu7x:2x2x1
jax: 0.10.0
libtpu: 0.0.40
codegen_flags: <defaults>
</compile_context>

<pallas_src>
import jax
import jax.numpy as jnp
from jax.experimental import pallas as pl
from jax.experimental.pallas import tpu as pltpu


TB = 8     # batch rows per grid step (sublane-aligned)
H = 512    # hidden dim, padded 500 -> 512 (lane/MXU aligned)


# ------------------------------- kernel ------------------------------------ #
def _fused_head_kernel(x_ref, wh_ref, bh_ref, wfc_ref, bfc_ref, o_ref):
    # x_ref:   (TB, Kp)   f32   flattened, zero-padded NCHW input rows
    # wh_ref:  (Kp, H)    bf16  folded conv1*conv2 weights (zero-padded)
    # bh_ref:  (1, H)     f32   folded bias (zero-padded)
    # wfc_ref: (H, 2)     f32   fc1 weights (zero-padded rows)
    # bfc_ref: (1, 2)     f32
    # o_ref:   (TB, 2)    f32   log-probabilities
    xb = x_ref[...].astype(jnp.bfloat16)
    z = jnp.dot(xb, wh_ref[...], preferred_element_type=jnp.float32)
    z = jnp.maximum(z + bh_ref[...], 0.0)                     # relu(conv2(conv1(x)))
    logits = (
        jnp.dot(z, wfc_ref[...], preferred_element_type=jnp.float32) + bfc_ref[...]
    )
    m = jnp.max(logits, axis=1, keepdims=True)
    s = logits - m
    lse = jnp.log(jnp.sum(jnp.exp(s), axis=1, keepdims=True))
    o_ref[...] = s - lse                                      # log_softmax(dim=1)


# --------------------------- one-time weight prep --------------------------- #
def prepare_head_params(params, dis_num):
    """Fold conv1 into conv2, pad to MXU/lane-friendly shapes, cast the streamed
    weight to bf16.  Runs ONCE; the forward only consumes the result."""
    W1, b1, W2, b2, Wfc, bfc = params
    K = 3 * dis_num * 201
    # Pad contraction dim to a multiple of 256 (full passes on v6e/v7x 256-wide
    # MXU; 128-wide v5e is trivially also aligned).  Zero padding is inert.
    Kp = ((K + 255) // 256) * 256

    W1m = W1[:, :, :, 0]                   # (40, 3, dis_num)
    W2m = W2[:, :, 0, :]                   # (500, 40, 201)

    # Folded weight, rows in native NCHW flatten order (c, k, w).
    W_head = jnp.einsum("ock,pow->ckwp", W1m, W2m).reshape(K, 500)
    b_head = b2 + jnp.einsum("o,pow->p", b1, W2m)

    W_head = jnp.pad(W_head, ((0, Kp - K), (0, H - 500))).astype(jnp.bfloat16)
    b_head = jnp.pad(b_head, (0, H - 500)).reshape(1, H).astype(jnp.float32)
    Wfc_p = jnp.pad(Wfc.T, ((0, H - 500), (0, 0))).astype(jnp.float32)   # (H, 2)
    bfc_p = bfc.reshape(1, 2).astype(jnp.float32)
    return (W_head, b_head, Wfc_p, bfc_p)


# -------------------------------- forward ----------------------------------- #
def classify_forward(x, head_params):
    """x: (B, 3, dis_num, 201) NCHW float32 -> (B, 2) log-probs."""
    W_head, b_head, Wfc_p, bfc_p = head_params
    B = x.shape[0]
    K = x.shape[1] * x.shape[2] * x.shape[3]
    Kp, Hh = W_head.shape

    # Pad batch to a TB multiple and contraction to Kp (both zero, matmul-inert;
    # padded rows are sliced off below).
    Bp = ((B + TB - 1) // TB) * TB
    x_flat = x.reshape(B, K)
    x_flat = jnp.pad(x_flat, ((0, Bp - B), (0, Kp - K)))

    grid = (Bp // TB,)
    out = pl.pallas_call(
        _fused_head_kernel,
        out_shape=jax.ShapeDtypeStruct((Bp, 2), jnp.float32),
        grid=grid,
        in_specs=[
            # x: tiled over batch rows.
            pl.BlockSpec((TB, Kp), lambda i: (i, 0)),
            # Weights/biases: constant block index -> DMA'd once per call and
            # kept VMEM-resident across all grid steps (no re-streaming).
            pl.BlockSpec((Kp, Hh), lambda i: (0, 0)),
            pl.BlockSpec((1, Hh), lambda i: (0, 0)),
            pl.BlockSpec((Hh, 2), lambda i: (0, 0)),
            pl.BlockSpec((1, 2), lambda i: (0, 0)),
        ],
        out_specs=pl.BlockSpec((TB, 2), lambda i: (i, 0)),
        compiler_params=pltpu.CompilerParams(
            # Batch rows are independent -> shard grid steps across TensorCores
            # (uses both cores on v7x; harmless on single-TC v5e/v6e).
            dimension_semantics=("parallel",),
            # Working set (incl. double-buffering of the bf16 W_head) is ~5.4 MB;
            # 12 MiB is 2x headroom while staying well under v7x's scoped VMEM.
            vmem_limit_bytes=12 * 1024 * 1024,
        ),
    )(x_flat, W_head, b_head, Wfc_p, bfc_p)

    return out[:B] if Bp != B else out


# ------------------------------- references --------------------------------- #
def classify_forward_ref(x, params):
    """Pure-JAX f32 reference mirroring the PyTorch forward exactly."""
    W1, b1, W2, b2, Wfc, bfc = params
    y1 = jnp.einsum("bckw,ock->bow", x, W1[:, :, :, 0]) + b1[None, :, None]
    z = jnp.einsum("bow,pow->bp", y1, W2[:, :, 0, :]) + b2[None, :]
    z = jax.nn.relu(z)
    logits = z @ Wfc.T + bfc[None, :]
    return jax.nn.log_softmax(logits, axis=1)


def classify_forward_folded_ref(x, head_params):
    """Pure-JAX reference of the folded/bf16 math (tight check of the kernel)."""
    W_head, b_head, Wfc_p, bfc_p = head_params
    B = x.shape[0]
    K = x.shape[1] * x.shape[2] * x.shape[3]
    Kp = W_head.shape[0]
    x_flat = jnp.pad(x.reshape(B, K), ((0, 0), (0, Kp - K))).astype(jnp.bfloat16)
    z = jnp.dot(x_flat, W_head, preferred_element_type=jnp.float32) + b_head
    z = jax.nn.relu(z)
    logits = jnp.dot(z, Wfc_p, preferred_element_type=jnp.float32) + bfc_p
    return jax.nn.log_softmax(logits, axis=1)


# --------------------------------- params ----------------------------------- #
def init_params(key, dis_num):
    ks = jax.random.split(key, 6)

    def u(k, shape, fan_in):
        bound = 1.0 / jnp.sqrt(jnp.float32(fan_in))
        return jax.random.uniform(k, shape, jnp.float32, -bound, bound)

    W1 = u(ks[0], (40, 3, dis_num, 1), 3 * dis_num * 1)
    b1 = u(ks[1], (40,), 3 * dis_num * 1)
    W2 = u(ks[2], (500, 40, 1, 201), 40 * 1 * 201)
    b2 = u(ks[3], (500,), 40 * 1 * 201)
    Wfc = u(ks[4], (2, 500), 500)
    bfc = u(ks[5], (2,), 500)
    return (W1, b1, W2, b2, Wfc, bfc)


# ---------------------------------- main ------------------------------------ #
if __name__ == "__main__":
    dis_num = 4
    B = 16  # multiple of 8: dense sublane packing + both grid blocks full
    key = jax.random.PRNGKey(0)
    kx, kp = jax.random.split(key)

    # NCHW input for Conv2d(3,40,(dis_num,1)) then Conv2d(40,500,(1,201)):
    x = jax.random.normal(kx, (B, 3, dis_num, 201), jnp.float32)
    params = init_params(kp, dis_num)

    # One-time parameter prep (folding + padding + bf16 cast) outside forward.
    head_params = jax.tree_util.tree_map(
        jax.block_until_ready, prepare_head_params(params, dis_num)
    )

    fwd = jax.jit(classify_forward)
    out = jax.block_until_ready(fwd(x, head_params))
    assert out.shape == (B, 2)

    # Tight check against the folded bf16 math (verifies the kernel itself).
    ref_folded = classify_forward_folded_ref(x, head_params)
    assert jnp.allclose(out, ref_folded, rtol=5e-3, atol=5e-3), (out, ref_folded)

    # Looser check against the exact f32 PyTorch-semantics reference
    # (bf16 weight streaming introduces ~1e-3 level error).
    ref = classify_forward_ref(x, params)
    assert jnp.allclose(out, ref, rtol=2e-2, atol=2e-2), (out, ref)

    print("KERNEL_OK")
</pallas_src>

<mosaic_0001>
module attributes {stable_mosaic.version = 11 : i64} {
  func.func @_fused_head_kernel(%arg0: i32, %arg1: memref<8x2560xf32, #tpu.memory_space<vmem>>, %arg2: memref<2560x512xbf16, #tpu.memory_space<vmem>>, %arg3: memref<1x512xf32, #tpu.memory_space<vmem>>, %arg4: memref<512x2xf32, #tpu.memory_space<vmem>>, %arg5: memref<1x2xf32, #tpu.memory_space<vmem>>, %arg6: memref<8x2xf32, #tpu.memory_space<vmem>>) attributes {dimension_semantics = [#tpu.dimension_semantics<parallel>], iteration_bounds = array<i64: 2>, scalar_prefetch = 0 : i64, scratch_operands = 0 : i64, tpu.core_type = #tpu.core_type<tc>, window_params = [{transform_indices = @transform_0, window_bounds = array<i64: 8, 2560>}, {pipeline_mode = #tpu.pipeline_mode<synchronous>, transform_indices = @transform_1, window_bounds = array<i64: 2560, 512>}, {pipeline_mode = #tpu.pipeline_mode<synchronous>, transform_indices = @transform_2, window_bounds = array<i64: 1, 512>}, {pipeline_mode = #tpu.pipeline_mode<synchronous>, transform_indices = @transform_3, window_bounds = array<i64: 512, 2>}, {pipeline_mode = #tpu.pipeline_mode<synchronous>, transform_indices = @transform_4, window_bounds = array<i64: 1, 2>}, {transform_indices = @transform_5, window_bounds = array<i64: 8, 2>}]} {
    %c0 = arith.constant 0 : index
    %c0_0 = arith.constant 0 : index
    %0 = vector.load %arg1[%c0, %c0_0] : memref<8x2560xf32, #tpu.memory_space<vmem>>, vector<8x2560xf32>
    %1 = arith.truncf %0 : vector<8x2560xf32> to vector<8x2560xbf16>
    %c0_1 = arith.constant 0 : index
    %c0_2 = arith.constant 0 : index
    %2 = vector.load %arg2[%c0_1, %c0_2] : memref<2560x512xbf16, #tpu.memory_space<vmem>>, vector<2560x512xbf16>
    %cst = arith.constant dense<0.000000e+00> : vector<8x512xf32>
    %3 = tpu.matmul %1, %2, %cst {dimension_numbers = #tpu.dot_dimension_numbers<[1], [0], [0], [1], [0, 0, 1, 1], [], []>} : vector<8x2560xbf16>, vector<2560x512xbf16>, vector<8x512xf32> -> vector<8x512xf32>
    %c0_3 = arith.constant 0 : index
    %c0_4 = arith.constant 0 : index
    %4 = vector.load %arg3[%c0_3, %c0_4] : memref<1x512xf32, #tpu.memory_space<vmem>>, vector<1x512xf32>
    %5 = vector.broadcast %4 : vector<1x512xf32> to vector<8x512xf32>
    %6 = arith.addf %3, %5 : vector<8x512xf32>
    %cst_5 = arith.constant 0.000000e+00 : f32
    %7 = vector.broadcast %cst_5 : f32 to vector<8x512xf32>
    %8 = arith.maximumf %6, %7 : vector<8x512xf32>
    %c0_6 = arith.constant 0 : index
    %c0_7 = arith.constant 0 : index
    %9 = vector.load %arg4[%c0_6, %c0_7] : memref<512x2xf32, #tpu.memory_space<vmem>>, vector<512x2xf32>
    %cst_8 = arith.constant dense<0.000000e+00> : vector<8x2xf32>
    %10 = tpu.matmul %8, %9, %cst_8 {dimension_numbers = #tpu.dot_dimension_numbers<[1], [0], [0], [1], [0, 0, 1, 1], [], []>} : vector<8x512xf32>, vector<512x2xf32>, vector<8x2xf32> -> vector<8x2xf32>
    %c0_9 = arith.constant 0 : index
    %c0_10 = arith.constant 0 : index
    %11 = vector.load %arg5[%c0_9, %c0_10] : memref<1x2xf32, #tpu.memory_space<vmem>>, vector<1x2xf32>
    %12 = vector.broadcast %11 : vector<1x2xf32> to vector<8x2xf32>
    %13 = arith.addf %10, %12 : vector<8x2xf32>
    %cst_11 = arith.constant dense<0xFF800000> : vector<8xf32>
    %14 = vector.multi_reduction <maximumf>, %13, %cst_11 [1] : vector<8x2xf32> to vector<8xf32>
    %15 = vector.shape_cast %14 : vector<8xf32> to vector<8x1xf32>
    %16 = vector.broadcast %15 : vector<8x1xf32> to vector<8x2xf32>
    %17 = arith.subf %13, %16 : vector<8x2xf32>
    %18 = math.exp %17 : vector<8x2xf32>
    %cst_12 = arith.constant dense<0.000000e+00> : vector<8xf32>
    %19 = vector.multi_reduction <add>, %18, %cst_12 [1] : vector<8x2xf32> to vector<8xf32>
    %20 = vector.shape_cast %19 : vector<8xf32> to vector<8x1xf32>
    %21 = math.log %20 : vector<8x1xf32>
    %22 = vector.broadcast %21 : vector<8x1xf32> to vector<8x2xf32>
    %23 = arith.subf %17, %22 : vector<8x2xf32>
    %c0_13 = arith.constant 0 : index
    %c0_14 = arith.constant 0 : index
    %24 = vector.load %arg6[%c0_13, %c0_14] : memref<8x2xf32, #tpu.memory_space<vmem>>, vector<8x2xf32>
    tpu.vector_store %arg6[%c0_13, %c0_14], %23 {strides = array<i32>} : memref<8x2xf32, #tpu.memory_space<vmem>>, vector<8x2xf32>,
    return
  }
  func.func @transform_0(%arg0: i32) -> (i32, i32) {
    %c0_i32 = arith.constant 0 : i32
    %c0_i32_0 = arith.constant 0 : i32
    return %arg0, %c0_i32 : i32, i32
  }
  func.func @transform_1(%arg0: i32) -> (i32, i32) {
    %c0_i32 = arith.constant 0 : i32
    %c0_i32_0 = arith.constant 0 : i32
    %c0_i32_1 = arith.constant 0 : i32
    return %c0_i32, %c0_i32_0 : i32, i32
  }
  func.func @transform_2(%arg0: i32) -> (i32, i32) {
    %c0_i32 = arith.constant 0 : i32
    %c0_i32_0 = arith.constant 0 : i32
    %c0_i32_1 = arith.constant 0 : i32
    return %c0_i32, %c0_i32_0 : i32, i32
  }
  func.func @transform_3(%arg0: i32) -> (i32, i32) {
    %c0_i32 = arith.constant 0 : i32
    %c0_i32_0 = arith.constant 0 : i32
    %c0_i32_1 = arith.constant 0 : i32
    return %c0_i32, %c0_i32_0 : i32, i32
  }
  func.func @transform_4(%arg0: i32) -> (i32, i32) {
    %c0_i32 = arith.constant 0 : i32
    %c0_i32_0 = arith.constant 0 : i32
    %c0_i32_1 = arith.constant 0 : i32
    return %c0_i32, %c0_i32_0 : i32, i32
  }
  func.func @transform_5(%arg0: i32) -> (i32, i32) {
    %c0_i32 = arith.constant 0 : i32
    %c0_i32_0 = arith.constant 0 : i32
    return %arg0, %c0_i32 : i32, i32
  }
}

</mosaic_0001>

<llo_original>
// kernel: classify_forward.1
$region0: #{classify_forward.1}
  #allocation0 [shape = 'u32[]', space=smem, size = 0x4, offset = 0x4, fixed_abs, tag = 'smem constant byte address 0x4 - core index']
  #allocation1 [shape = 'u32[144,128]{1,0:T(1,128)}', space=vmem, size = 0x12000, scoped, tag = 'internal scratch']
  %s0 = inlined_call_operand.vmem [shape: f32[16,2560], index: 0, kind: input, shape index: {}]
  %s1 = inlined_call_operand.hbm [shape: bf16[2560,512], index: 1, kind: input, shape index: {}]
  %s2 = inlined_call_operand.hbm [shape: f32[1,512], index: 2, kind: input, shape index: {}]
  %s3 = inlined_call_operand.vmem [shape: f32[512,2], index: 3, kind: input, shape index: {}]
  %s4 = inlined_call_operand.hbm [shape: f32[1,2], index: 4, kind: input, shape index: {}]
  %s5 = inlined_call_operand.vmem [shape: f32[16,2], index: 5, kind: output, shape index: {}]
  %s6 = sld [smem:[#allocation0]]
  $region65: #{classify_forward.1} parent=0
    _
  %s8 = ssub.s32 1, %s6
  %s9 = scalar_select 0, %s8, %s6
  $region1: #{classify_forward.1} parent=0
    #allocation2 [shape = 'u8[2621440]{0}', space=vmem, size = 0x280000, scoped, tag = 'input window, operand 1, single buffered']
    #allocation3 [shape = 's32[2]{0}', space=sflag, size = 0x8, scoped, tag = 'scoped memory for classify_forward.1']
    #allocation4 [shape = 'u8[2048]{0}', space=vmem, size = 0x800, scoped, tag = 'input window, operand 2, single buffered']
    #allocation5 [shape = 's32[1]{0}', space=sflag, size = 0x4, scoped, tag = 'scoped memory for classify_forward.1']
    #allocation6 [shape = 'u8[512]{0}', space=vmem, size = 0x400, scoped, tag = 'input window, operand 4, single buffered']
    %10 = vsyncpa [#allocation3], 0
    %11 = vsyncpa [#allocation5], 0
    loop: start=0, step=1, limit=4
    $region2: #{classify_forward.1} parent=1 // loop_pre_header
      _
    $region3: #{classify_forward.1} parent=1 // loop_header
      %s13 = sphi 0, %s17
      %p14 = scmp.ge.s32.totalorder %s13, 4
      %s23 = sphi 0, %s25
      %s26 = sphi 0, %s23
      %s27 = sphi 0, %s26
      %s43 = sphi 0, %s27
      %s47 = sphi 0, %s47
      %s49 = sphi 0, %s47
      %s50 = sphi 0, %s49
      %s64 = sphi 0, %s50
      %s68 = sphi 0, %s68
      %s70 = sphi 0, %s68
      %s71 = sphi 0, %s70
      %s85 = sphi 0, %s71
      %s89 = sphi 0, %s89
      %s91 = sphi 0, %s89
      %s92 = sphi 0, %s91
      %s106 = sphi 0, %s92
      %s110 = sphi 0, %s110
      %s112 = sphi 0, %s110
      %s113 = sphi 0, %s112
      %s127 = sphi 0, %s113
      %s133 = sphi 0, %s135
      %s136 = sphi 0, %s133
      %s137 = sphi 0, %s136
      %s153 = sphi 0, %s137
    $region4: #{classify_forward.1} parent=1 // loop_header_branch
      %16 = sbr.rel (%p14) target = $region8
    $region5: #{classify_forward.1} parent=1 // loop_body
      %s18 = ssub.s32 %s13, 1
      %s19 = ssub.s32 %s13, 2
      %s20 = sadd.s32 %s13, 1
      %s21 = ssub.s32 %s13, %s20
      %p22 = scmp.eq.s32.totalorder %s21, 0
      %s24 = sadd.s32 %s23, 1
      %s25 = scalar_select %p22, %s23, %s24
      %p28 = pneg %p22
      %p29 = scmp.eq.s32.totalorder %s13, 1
      %p30 = por %p28, %p29
      %p31 = scmp.ne.s32.totalorder %s23, %s26
      %p32 = scmp.eq.s32.totalorder %s13, 0
      %p33 = por %p31, %p32
      %p34 = scmp.ne.s32.totalorder %s23, %s26
      %p35 = scmp.eq.s32.totalorder %s18, 1
      %p36 = por %p34, %p35
      %p37 = scmp.ne.s32.totalorder %s26, %s27
      %p38 = scmp.eq.s32.totalorder %s18, 0
      %p39 = por %p37, %p38
      %p40 = scmp.ne.s32.totalorder %s26, %s27
      %p41 = scmp.eq.s32.totalorder %s19, 1
      %p42 = por %p40, %p41
      %p44 = scmp.ne.s32.totalorder %s27, %s43
      %p45 = scmp.eq.s32.totalorder %s19, 0
      %p46 = por %p44, %p45
      %s48 = sadd.s32 %s47, 1
      %p51 = scmp.eq.s32.totalorder %s13, 1
      %p52 = scmp.ne.s32.totalorder %s47, %s49
      %p53 = scmp.eq.s32.totalorder %s13, 0
      %p54 = por %p52, %p53
      %p55 = scmp.ne.s32.totalorder %s47, %s49
      %p56 = scmp.eq.s32.totalorder %s18, 1
      %p57 = por %p55, %p56
      %p58 = scmp.ne.s32.totalorder %s49, %s50
      %p59 = scmp.eq.s32.totalorder %s18, 0
      %p60 = por %p58, %p59
      %p61 = scmp.ne.s32.totalorder %s49, %s50
      %p62 = scmp.eq.s32.totalorder %s19, 1
      %p63 = por %p61, %p62
      %p65 = scmp.ne.s32.totalorder %s50, %s64
      %p66 = scmp.eq.s32.totalorder %s19, 0
      %p67 = por %p65, %p66
      %s69 = sadd.s32 %s68, 1
      %p72 = scmp.eq.s32.totalorder %s13, 1
      %p73 = scmp.ne.s32.totalorder %s68, %s70
      %p74 = scmp.eq.s32.totalorder %s13, 0
      %p75 = por %p73, %p74
      %p76 = scmp.ne.s32.totalorder %s68, %s70
      %p77 = scmp.eq.s32.totalorder %s18, 1
      %p78 = por %p76, %p77
      %p79 = scmp.ne.s32.totalorder %s70, %s71
      %p80 = scmp.eq.s32.totalorder %s18, 0
      %p81 = por %p79, %p80
      %p82 = scmp.ne.s32.totalorder %s70, %s71
      %p83 = scmp.eq.s32.totalorder %s19, 1
      %p84 = por %p82, %p83
      %p86 = scmp.ne.s32.totalorder %s71, %s85
      %p87 = scmp.eq.s32.totalorder %s19, 0
      %p88 = por %p86, %p87
      %s90 = sadd.s32 %s89, 1
      %p93 = scmp.eq.s32.totalorder %s13, 1
      %p94 = scmp.ne.s32.totalorder %s89, %s91
      %p95 = scmp.eq.s32.totalorder %s13, 0
      %p96 = por %p94, %p95
      %p97 = scmp.ne.s32.totalorder %s89, %s91
      %p98 = scmp.eq.s32.totalorder %s18, 1
      %p99 = por %p97, %p98
      %p100 = scmp.ne.s32.totalorder %s91, %s92
      %p101 = scmp.eq.s32.totalorder %s18, 0
      %p102 = por %p100, %p101
      %p103 = scmp.ne.s32.totalorder %s91, %s92
      %p104 = scmp.eq.s32.totalorder %s19, 1
      %p105 = por %p103, %p104
      %p107 = scmp.ne.s32.totalorder %s92, %s106
      %p108 = scmp.eq.s32.totalorder %s19, 0
      %p109 = por %p107, %p108
      %s111 = sadd.s32 %s110, 1
      %p114 = scmp.eq.s32.totalorder %s13, 1
      %p115 = scmp.ne.s32.totalorder %s110, %s112
      %p116 = scmp.eq.s32.totalorder %s13, 0
      %p117 = por %p115, %p116
      %p118 = scmp.ne.s32.totalorder %s110, %s112
      %p119 = scmp.eq.s32.totalorder %s18, 1
      %p120 = por %p118, %p119
      %p121 = scmp.ne.s32.totalorder %s112, %s113
      %p122 = scmp.eq.s32.totalorder %s18, 0
      %p123 = por %p121, %p122
      %p124 = scmp.ne.s32.totalorder %s112, %s113
      %p125 = scmp.eq.s32.totalorder %s19, 1
      %p126 = por %p124, %p125
      %p128 = scmp.ne.s32.totalorder %s113, %s127
      %p129 = scmp.eq.s32.totalorder %s19, 0
      %p130 = por %p128, %p129
      %s131 = ssub.s32 %s13, %s20
      %p132 = scmp.eq.s32.totalorder %s131, 0
      %s134 = sadd.s32 %s133, 1
      %s135 = scalar_select %p132, %s133, %s134
      %p138 = pneg %p132
      %p139 = scmp.eq.s32.totalorder %s13, 1
      %p140 = por %p138, %p139
      %p141 = scmp.ne.s32.totalorder %s133, %s136
      %p142 = scmp.eq.s32.totalorder %s13, 0
      %p143 = por %p141, %p142
      %p144 = scmp.ne.s32.totalorder %s133, %s136
      %p145 = scmp.eq.s32.totalorder %s18, 1
      %p146 = por %p144, %p145
      %p147 = scmp.ne.s32.totalorder %s136, %s137
      %p148 = scmp.eq.s32.totalorder %s18, 0
      %p149 = por %p147, %p148
      %p150 = scmp.ne.s32.totalorder %s136, %s137
      %p151 = scmp.eq.s32.totalorder %s19, 1
      %p152 = por %p150, %p151
      %p154 = scmp.ne.s32.totalorder %s137, %s153
      %p155 = scmp.eq.s32.totalorder %s19, 0
      %p156 = por %p154, %p155
      %p157 = scmp.le.s32.totalorder 1, %s13
      %p158 = scmp.lt.s32.totalorder %s13, 3
      %p159 = pnand %p157, %p158
      %p160 = pneg %p159
      // Predicated region
      $region9: #{classify_forward.1} parent=5 // pred_check
        _
      $region10: #{classify_forward.1} parent=5 // pred_check_branch
        %162 = sbr.rel (%p159) target = $region12
      $region11: #{classify_forward.1} parent=5 // pred_region
        %s163 = ssub.s32 %s13, 1
        // Predicated region
        $region13: #{classify_forward.1} parent=11 // pred_check
          %p164 = pneg %p60
        $region14: #{classify_forward.1} parent=11 // pred_check_branch
          %166 = sbr.rel (%p164) target = $region16
        $region15: #{classify_forward.1} parent=11 // pred_region
          %s168 = ssub.s32 81920, 81920
          %169 = vsyncadd [#allocation3], %s168
          %s170 = sshll.u32 [#allocation2], 4
          %s171 = int_to_ptr.vmem [resolvable:$true] %s170
          %176 = dma.hbm_to_vmem [thread:$0]  %s1, 81920, %s171, [#allocation3], 256, 256, 16
        $region16: #{classify_forward.1} parent=11 // pred_fallthru
          _
        // Predicated region
        $region17: #{classify_forward.1} parent=11 // pred_check
          %p177 = pneg %p81
        $region18: #{classify_forward.1} parent=11 // pred_check_branch
          %179 = sbr.rel (%p177) target = $region20
        $region19: #{classify_forward.1} parent=11 // pred_region
          %s181 = ssub.s32 64, 64
          %182 = vsyncadd [#allocation5], %s181
          %s184 = sshll.u32 [#allocation4], 4
          %s185 = int_to_ptr.vmem [resolvable:$true] %s184
          %187 = dma.hbm_to_vmem [thread:$0]  %s2, 64, %s185, [#allocation5]
        $region20: #{classify_forward.1} parent=11 // pred_fallthru
          _
        // Predicated region
        $region21: #{classify_forward.1} parent=11 // pred_check
          %p188 = pneg %p102
        $region22: #{classify_forward.1} parent=11 // pred_check_branch
          %190 = sbr.rel (%p188) target = $region24
        $region23: #{classify_forward.1} parent=11 // pred_region
          _
        $region24: #{classify_forward.1} parent=11 // pred_fallthru
          _
        // Predicated region
        $region25: #{classify_forward.1} parent=11 // pred_check
          %p191 = pneg %p123
        $region26: #{classify_forward.1} parent=11 // pred_check_branch
          %193 = sbr.rel (%p191) target = $region28
        $region27: #{classify_forward.1} parent=11 // pred_region
          %s195 = ssub.s32 16, 16
          %196 = vsyncadd [#allocation5], %s195
          %s198 = sshll.u32 [#allocation6], 4
          %s199 = int_to_ptr.vmem [resolvable:$true] %s198
          %201 = dma.hbm_to_vmem [thread:$0]  %s4, 16, %s199, [#allocation5]
        $region28: #{classify_forward.1} parent=11 // pred_fallthru
          _
      $region12: #{classify_forward.1} parent=5 // pred_fallthru
        _
      %p202 = scmp.lt.s32.totalorder %s13, 2
      // Predicated region
      $region29: #{classify_forward.1} parent=5 // pred_check
        %p203 = pneg %p202
      $region30: #{classify_forward.1} parent=5 // pred_check_branch
        %205 = sbr.rel (%p203) target = $region32
      $region31: #{classify_forward.1} parent=5 // pred_region
        // Predicated region
        $region33: #{classify_forward.1} parent=31 // pred_check
          %p206 = pneg %p33
        $region34: #{classify_forward.1} parent=31 // pred_check_branch
          %208 = sbr.rel (%p206) target = $region36
        $region35: #{classify_forward.1} parent=31 // pred_region
          %p209 = scmp.lt.s32.totalorder %s13, 1
          %s210 = scalar_select %p209, %s13, 1
          %s211 = smul.addr %s210, 20
          %s212 = smul.addr %s211, 8
          %s213 = scalar_lea.vmem %s0, %s212
        $region36: #{classify_forward.1} parent=31 // pred_fallthru
          _
      $region32: #{classify_forward.1} parent=5 // pred_fallthru
        _
      %p214 = scmp.le.s32.totalorder 1, %s13
      %p215 = scmp.lt.s32.totalorder %s13, 3
      %p216 = pnand %p214, %p215
      %p217 = pneg %p216
      // Predicated region
      $region37: #{classify_forward.1} parent=5 // pred_check
        _
      $region38: #{classify_forward.1} parent=5 // pred_check_branch
        %219 = sbr.rel (%p216) target = $region40
      $region39: #{classify_forward.1} parent=5 // pred_region
        %s220 = ssub.s32 %s13, 1
        // Predicated region
        $region41: #{classify_forward.1} parent=39 // pred_check
          %p221 = pneg %p60
        $region42: #{classify_forward.1} parent=39 // pred_check_branch
          %223 = sbr.rel (%p221) target = $region44
        $region43: #{classify_forward.1} parent=39 // pred_region
          %224 = dma.done [#allocation3], 81920
        $region44: #{classify_forward.1} parent=39 // pred_fallthru
          _
        // Predicated region
        $region45: #{classify_forward.1} parent=39 // pred_check
          %p225 = pneg %p81
        $region46: #{classify_forward.1} parent=39 // pred_check_branch
          %227 = sbr.rel (%p225) target = $region48
        $region47: #{classify_forward.1} parent=39 // pred_region
          %228 = dma.done [#allocation5], 64
        $region48: #{classify_forward.1} parent=39 // pred_fallthru
          _
        // Predicated region
        $region49: #{classify_forward.1} parent=39 // pred_check
          %p229 = pneg %p123
        $region50: #{classify_forward.1} parent=39 // pred_check_branch
          %231 = sbr.rel (%p229) target = $region52
        $region51: #{classify_forward.1} parent=39 // pred_region
          %232 = dma.done [#allocation5], 16
        $region52: #{classify_forward.1} parent=39 // pred_fallthru
          _
        %p233 = scmp.lt.s32.totalorder %s18, 1
        %s234 = scalar_select %p233, %s18, 1
        %s235 = smul.addr %s234, 20
        %s236 = smul.addr %s235, 8
        %s237 = scalar_lea.vmem %s0, %s236
        %p238 = pneg %p39
        %p239 = pneg %p36
        %p240 = pneg %p60
        %p241 = pneg %p57
        %p242 = pneg %p81
        %p243 = pneg %p78
        %p244 = pneg %p102
        %p245 = pneg %p99
        %p246 = pneg %p123
        %p247 = pneg %p120
        %p248 = pneg %p149
        %p249 = pneg %p146
        %p250 = scmp.lt.s32.totalorder %s18, 1
        %s251 = scalar_select %p250, %s18, 1
        %s252 = smul.addr %s251, 8
        %s253 = scalar_lea.vmem %s5, %s252
        %p254 = scmp.lt.s32.totalorder %s18, 1
        %s255 = scalar_select %p254, %s18, 1
        %s256 = smul.addr %s255, 20
        %s257 = smul.addr %s256, 8
        %s258 = scalar_lea.vmem %s0, %s257
        %p259 = scmp.lt.s32.totalorder %s18, 1
        %s260 = scalar_select %p259, %s18, 1
        %s261 = smul.addr %s260, 8
        %s262 = scalar_lea.vmem %s5, %s261
        %v263 = vld [vmem:[%s258] sm:$0xff]
        %v264 = vld [vmem:[%s258 + $0x8] sm:$0xff]
        %v265 = vld [vmem:[%s258 + $0x10] sm:$0xff]
        %v266 = vld [vmem:[%s258 + $0x18] sm:$0xff]
        %v267 = vld [vmem:[%s258 + $0x20] sm:$0xff]
        %v268 = vld [vmem:[%s258 + $0x28] sm:$0xff]
        %v269 = vld [vmem:[%s258 + $0x30] sm:$0xff]
        %v270 = vld [vmem:[%s258 + $0x38] sm:$0xff]
        %v271 = vld [vmem:[%s258 + $0x40] sm:$0xff]
        %v272 = vld [vmem:[%s258 + $0x48] sm:$0xff]
        %v273 = vld [vmem:[%s258 + $0x50] sm:$0xff]
        %v274 = vld [vmem:[%s258 + $0x58] sm:$0xff]
        %v275 = vld [vmem:[%s258 + $0x60] sm:$0xff]
        %v276 = vld [vmem:[%s258 + $0x68] sm:$0xff]
        %v277 = vld [vmem:[%s258 + $0x70] sm:$0xff]
        %v278 = vld [vmem:[%s258 + $0x78] sm:$0xff]
        %v279 = vld [vmem:[%s258 + $0x80] sm:$0xff]
        %v280 = vld [vmem:[%s258 + $0x88] sm:$0xff]
        %v281 = vld [vmem:[%s258 + $0x90] sm:$0xff]
        %v282 = vld [vmem:[%s258 + $0x98] sm:$0xff]
        %v283 = vpack.c.bf16 %v263, %v263
        %v284 = vpack.c.bf16 %v264, %v264
        %v285 = vpack.c.bf16 %v265, %v265
        %v286 = vpack.c.bf16 %v266, %v266
        %v287 = vpack.c.bf16 %v267, %v267
        %v288 = vpack.c.bf16 %v268, %v268
        %v289 = vpack.c.bf16 %v269, %v269
        %v290 = vpack.c.bf16 %v270, %v270
        %v291 = vpack.c.bf16 %v271, %v271
        %v292 = vpack.c.bf16 %v272, %v272
        %v293 = vpack.c.bf16 %v273, %v273
        %v294 = vpack.c.bf16 %v274, %v274
        %v295 = vpack.c.bf16 %v275, %v275
        %v296 = vpack.c.bf16 %v276, %v276
        %v297 = vpack.c.bf16 %v277, %v277
        %v298 = vpack.c.bf16 %v278, %v278
        %v299 = vpack.c.bf16 %v279, %v279
        %v300 = vpack.c.bf16 %v280, %v280
        %v301 = vpack.c.bf16 %v281, %v281
        %v302 = vpack.c.bf16 %v282, %v282
        %v303 = vld [vmem:[#allocation2] sm:$0xff]
        %v304 = vld [vmem:[#allocation2 + $0x8] sm:$0xff]
        %v305 = vld [vmem:[#allocation2 + $0x10] sm:$0xff]
        %v306 = vld [vmem:[#allocation2 + $0x18] sm:$0xff]
        %v307 = vld [vmem:[#allocation2 + $0x20] sm:$0xff]
        %v308 = vld [vmem:[#allocation2 + $0x28] sm:$0xff]
        %v309 = vld [vmem:[#allocation2 + $0x30] sm:$0xff]
        %v310 = vld [vmem:[#allocation2 + $0x38] sm:$0xff]
        %v311 = vld [vmem:[#allocation2 + $0x40] sm:$0xff]
        %v312 = vld [vmem:[#allocation2 + $0x48] sm:$0xff]
        %v313 = vld [vmem:[#allocation2 + $0x50] sm:$0xff]
        %v314 = vld [vmem:[#allocation2 + $0x58] sm:$0xff]
        %v315 = vld [vmem:[#allocation2 + $0x60] sm:$0xff]
        %v316 = vld [vmem:[#allocation2 + $0x68] sm:$0xff]
        %v317 = vld [vmem:[#allocation2 + $0x70] sm:$0xff]
        %v318 = vld [vmem:[#allocation2 + $0x78] sm:$0xff]
        %v319 = vld [vmem:[#allocation2 + $0x80] sm:$0xff]
        %v320 = vld [vmem:[#allocation2 + $0x88] sm:$0xff]
        %v321 = vld [vmem:[#allocation2 + $0x90] sm:$0xff]
        %v322 = vld [vmem:[#allocation2 + $0x98] sm:$0xff]
        %v323 = vld [vmem:[#allocation2 + $0xa0] sm:$0xff]
        %v324 = vld [vmem:[#allocation2 + $0xa8] sm:$0xff]
        %v325 = vld [vmem:[#allocation2 + $0xb0] sm:$0xff]
        %v326 = vld [vmem:[#allocation2 + $0xb8] sm:$0xff]
        %v327 = vld [vmem:[#allocation2 + $0xc0] sm:$0xff]
        %v328 = vld [vmem:[#allocation2 + $0xc8] sm:$0xff]
        %v329 = vld [vmem:[#allocation2 + $0xd0] sm:$0xff]
        %v330 = vld [vmem:[#allocation2 + $0xd8] sm:$0xff]
        %v331 = vld [vmem:[#allocation2 + $0xe0] sm:$0xff]
        %v332 = vld [vmem:[#allocation2 + $0xe8] sm:$0xff]
        %v333 = vld [vmem:[#allocation2 + $0xf0] sm:$0xff]
        %v334 = vld [vmem:[#allocation2 + $0xf8] sm:$0xff]
        %v335 = vld [vmem:[#allocation2 + $0x100] sm:$0xff]
        %v336 = vld [vmem:[#allocation2 + $0x108] sm:$0xff]
        %v337 = vld [vmem:[#allocation2 + $0x110] sm:$0xff]
        %v338 = vld [vmem:[#allocation2 + $0x118] sm:$0xff]
        %v339 = vld [vmem:[#allocation2 + $0x120] sm:$0xff]
        %v340 = vld [vmem:[#allocation2 + $0x128] sm:$0xff]
        %v341 = vld [vmem:[#allocation2 + $0x130] sm:$0xff]
        %v342 = vld [vmem:[#allocation2 + $0x138] sm:$0xff]
        %v343 = vld [vmem:[#allocation2 + $0x140] sm:$0xff]
        %v344 = vld [vmem:[#allocation2 + $0x148] sm:$0xff]
        %v345 = vld [vmem:[#allocation2 + $0x150] sm:$0xff]
        %v346 = vld [vmem:[#allocation2 + $0x158] sm:$0xff]
        %v347 = vld [vmem:[#allocation2 + $0x160] sm:$0xff]
        %v348 = vld [vmem:[#allocation2 + $0x168] sm:$0xff]
        %v349 = vld [vmem:[#allocation2 + $0x170] sm:$0xff]
        %v350 = vld [vmem:[#allocation2 + $0x178] sm:$0xff]
        %v351 = vld [vmem:[#allocation2 + $0x180] sm:$0xff]
        %v352 = vld [vmem:[#allocation2 + $0x188] sm:$0xff]
        %v353 = vld [vmem:[#allocation2 + $0x190] sm:$0xff]
        %v354 = vld [vmem:[#allocation2 + $0x198] sm:$0xff]
        %v355 = vld [vmem:[#allocation2 + $0x1a0] sm:$0xff]
        %v356 = vld [vmem:[#allocation2 + $0x1a8] sm:$0xff]
        %v357 = vld [vmem:[#allocation2 + $0x1b0] sm:$0xff]
        %v358 = vld [vmem:[#allocation2 + $0x1b8] sm:$0xff]
        %v359 = vld [vmem:[#allocation2 + $0x1c0] sm:$0xff]
        %v360 = vld [vmem:[#allocation2 + $0x1c8] sm:$0xff]
        %v361 = vld [vmem:[#allocation2 + $0x1d0] sm:$0xff]
        %v362 = vld [vmem:[#allocation2 + $0x1d8] sm:$0xff]
        %v363 = vld [vmem:[#allocation2 + $0x1e0] sm:$0xff]
        %v364 = vld [vmem:[#allocation2 + $0x1e8] sm:$0xff]
        %v365 = vld [vmem:[#allocation2 + $0x1f0] sm:$0xff]
        %v366 = vld [vmem:[#allocation2 + $0x1f8] sm:$0xff]
        %v367 = vld [vmem:[#allocation2 + $0x200] sm:$0xff]
        %v368 = vld [vmem:[#allocation2 + $0x208] sm:$0xff]
        %v369 = vld [vmem:[#allocation2 + $0x210] sm:$0xff]
        %v370 = vld [vmem:[#allocation2 + $0x218] sm:$0xff]
        %v371 = vld [vmem:[#allocation2 + $0x220] sm:$0xff]
        %v372 = vld [vmem:[#allocation2 + $0x228] sm:$0xff]
        %v373 = vld [vmem:[#allocation2 + $0x230] sm:$0xff]
        %v374 = vld [vmem:[#allocation2 + $0x238] sm:$0xff]
        %v375 = vld [vmem:[#allocation2 + $0x240] sm:$0xff]
        %v376 = vld [vmem:[#allocation2 + $0x248] sm:$0xff]
        %v377 = vld [vmem:[#allocation2 + $0x250] sm:$0xff]
        %v378 = vld [vmem:[#allocation2 + $0x258] sm:$0xff]
        %v379 = vld [vmem:[#allocation2 + $0x260] sm:$0xff]
        %v380 = vld [vmem:[#allocation2 + $0x268] sm:$0xff]
        %v381 = vld [vmem:[#allocation2 + $0x270] sm:$0xff]
        %v382 = vld [vmem:[#allocation2 + $0x278] sm:$0xff]
        %v383 = vld [vmem:[#allocation2 + $0x280] sm:$0xff]
        %v384 = vld [vmem:[#allocation2 + $0x288] sm:$0xff]
        %v385 = vld [vmem:[#allocation2 + $0x290] sm:$0xff]
        %v386 = vld [vmem:[#allocation2 + $0x298] sm:$0xff]
        %v387 = vld [vmem:[#allocation2 + $0x2a0] sm:$0xff]
        %v388 = vld [vmem:[#allocation2 + $0x2a8] sm:$0xff]
        %v389 = vld [vmem:[#allocation2 + $0x2b0] sm:$0xff]
        %v390 = vld [vmem:[#allocation2 + $0x2b8] sm:$0xff]
        %v391 = vld [vmem:[#allocation2 + $0x2c0] sm:$0xff]
        %v392 = vld [vmem:[#allocation2 + $0x2c8] sm:$0xff]
        %v393 = vld [vmem:[#allocation2 + $0x2d0] sm:$0xff]
        %v394 = vld [vmem:[#allocation2 + $0x2d8] sm:$0xff]
        %v395 = vld [vmem:[#allocation2 + $0x2e0] sm:$0xff]
        %v396 = vld [vmem:[#allocation2 + $0x2e8] sm:$0xff]
        %v397 = vld [vmem:[#allocation2 + $0x2f0] sm:$0xff]
        %v398 = vld [vmem:[#allocation2 + $0x2f8] sm:$0xff]
        %v399 = vld [vmem:[#allocation2 + $0x300] sm:$0xff]
        %v400 = vld [vmem:[#allocation2 + $0x308] sm:$0xff]
        %v401 = vld [vmem:[#allocation2 + $0x310] sm:$0xff]
        %v402 = vld [vmem:[#allocation2 + $0x318] sm:$0xff]
        %v403 = vld [vmem:[#allocation2 + $0x320] sm:$0xff]
        %v404 = vld [vmem:[#allocation2 + $0x328] sm:$0xff]
        %v405 = vld [vmem:[#allocation2 + $0x330] sm:$0xff]
        %v406 = vld [vmem:[#allocation2 + $0x338] sm:$0xff]
        %v407 = vld [vmem:[#allocation2 + $0x340] sm:$0xff]
        %v408 = vld [vmem:[#allocation2 + $0x348] sm:$0xff]
        %v409 = vld [vmem:[#allocation2 + $0x350] sm:$0xff]
        %v410 = vld [vmem:[#allocation2 + $0x358] sm:$0xff]
        %v411 = vld [vmem:[#allocation2 + $0x360] sm:$0xff]
        %v412 = vld [vmem:[#allocation2 + $0x368] sm:$0xff]
        %v413 = vld [vmem:[#allocation2 + $0x370] sm:$0xff]
        %v414 = vld [vmem:[#allocation2 + $0x378] sm:$0xff]
        %v415 = vld [vmem:[#allocation2 + $0x380] sm:$0xff]
        %v416 = vld [vmem:[#allocation2 + $0x388] sm:$0xff]
        %v417 = vld [vmem:[#allocation2 + $0x390] sm:$0xff]
        %v418 = vld [vmem:[#allocation2 + $0x398] sm:$0xff]
        %v419 = vld [vmem:[#allocation2 + $0x3a0] sm:$0xff]
        %v420 = vld [vmem:[#allocation2 + $0x3a8] sm:$0xff]
        %v421 = vld [vmem:[#allocation2 + $0x3b0] sm:$0xff]
        %v422 = vld [vmem:[#allocation2 + $0x3b8] sm:$0xff]
        %v423 = vld [vmem:[#allocation2 + $0x3c0] sm:$0xff]
        %v424 = vld [vmem:[#allocation2 + $0x3c8] sm:$0xff]
        %v425 = vld [vmem:[#allocation2 + $0x3d0] sm:$0xff]
        %v426 = vld [vmem:[#allocation2 + $0x3d8] sm:$0xff]
        %v427 = vld [vmem:[#allocation2 + $0x3e0] sm:$0xff]
        %v428 = vld [vmem:[#allocation2 + $0x3e8] sm:$0xff]
        %v429 = vld [vmem:[#allocation2 + $0x3f0] sm:$0xff]
        %v430 = vld [vmem:[#allocation2 + $0x3f8] sm:$0xff]
        %v431 = vld [vmem:[#allocation2 + $0x400] sm:$0xff]
        %v432 = vld [vmem:[#allocation2 + $0x408] sm:$0xff]
        %v433 = vld [vmem:[#allocation2 + $0x410] sm:$0xff]
        %v434 = vld [vmem:[#allocation2 + $0x418] sm:$0xff]
        %v435 = vld [vmem:[#allocation2 + $0x420] sm:$0xff]
        %v436 = vld [vmem:[#allocation2 + $0x428] sm:$0xff]
        %v437 = vld [vmem:[#allocation2 + $0x430] sm:$0xff]
        %v438 = vld [vmem:[#allocation2 + $0x438] sm:$0xff]
        %v439 = vld [vmem:[#allocation2 + $0x440] sm:$0xff]
        %v440 = vld [vmem:[#allocation2 + $0x448] sm:$0xff]
        %v441 = vld [vmem:[#allocation2 + $0x450] sm:$0xff]
        %v442 = vld [vmem:[#allocation2 + $0x458] sm:$0xff]
        %v443 = vld [vmem:[#allocation2 + $0x460] sm:$0xff]
        %v444 = vld [vmem:[#allocation2 + $0x468] sm:$0xff]
        %v445 = vld [vmem:[#allocation2 + $0x470] sm:$0xff]
        %v446 = vld [vmem:[#allocation2 + $0x478] sm:$0xff]
        %v447 = vld [vmem:[#allocation2 + $0x480] sm:$0xff]
        %v448 = vld [vmem:[#allocation2 + $0x488] sm:$0xff]
        %v449 = vld [vmem:[#allocation2 + $0x490] sm:$0xff]
        %v450 = vld [vmem:[#allocation2 + $0x498] sm:$0xff]
        %v451 = vld [vmem:[#allocation2 + $0x4a0] sm:$0xff]
        %v452 = vld [vmem:[#allocation2 + $0x4a8] sm:$0xff]
        %v453 = vld [vmem:[#allocation2 + $0x4b0] sm:$0xff]
        %v454 = vld [vmem:[#allocation2 + $0x4b8] sm:$0xff]
        %v455 = vld [vmem:[#allocation2 + $0x4c0] sm:$0xff]
        %v456 = vld [vmem:[#allocation2 + $0x4c8] sm:$0xff]
        %v457 = vld [vmem:[#allocation2 + $0x4d0] sm:$0xff]
        %v458 = vld [vmem:[#allocation2 + $0x4d8] sm:$0xff]
        %v459 = vld [vmem:[#allocation2 + $0x4e0] sm:$0xff]
        %v460 = vld [vmem:[#allocation2 + $0x4e8] sm:$0xff]
        %v461 = vld [vmem:[#allocation2 + $0x4f0] sm:$0xff]
        %v462 = vld [vmem:[#allocation2 + $0x4f8] sm:$0xff]
        %v463 = vld [vmem:[#allocation2 + $0x500] sm:$0xff]
        %v464 = vld [vmem:[#allocation2 + $0x508] sm:$0xff]
        %v465 = vld [vmem:[#allocation2 + $0x510] sm:$0xff]
        %v466 = vld [vmem:[#allocation2 + $0x518] sm:$0xff]
        %v467 = vld [vmem:[#allocation2 + $0x520] sm:$0xff]
        %v468 = vld [vmem:[#allocation2 + $0x528] sm:$0xff]
        %v469 = vld [vmem:[#allocation2 + $0x530] sm:$0xff]
        %v470 = vld [vmem:[#allocation2 + $0x538] sm:$0xff]
        %v471 = vld [vmem:[#allocation2 + $0x540] sm:$0xff]
        %v472 = vld [vmem:[#allocation2 + $0x548] sm:$0xff]
        %v473 = vld [vmem:[#allocation2 + $0x550] sm:$0xff]
        %v474 = vld [vmem:[#allocation2 + $0x558] sm:$0xff]
        %v475 = vld [vmem:[#allocation2 + $0x560] sm:$0xff]
        %v476 = vld [vmem:[#allocation2 + $0x568] sm:$0xff]
        %v477 = vld [vmem:[#allocation2 + $0x570] sm:$0xff]
        %v478 = vld [vmem:[#allocation2 + $0x578] sm:$0xff]
        %v479 = vld [vmem:[#allocation2 + $0x580] sm:$0xff]
        %v480 = vld [vmem:[#allocation2 + $0x588] sm:$0xff]
        %v481 = vld [vmem:[#allocation2 + $0x590] sm:$0xff]
        %v482 = vld [vmem:[#allocation2 + $0x598] sm:$0xff]
        %v483 = vld [vmem:[#allocation2 + $0x5a0] sm:$0xff]
        %v484 = vld [vmem:[#allocation2 + $0x5a8] sm:$0xff]
        %v485 = vld [vmem:[#allocation2 + $0x5b0] sm:$0xff]
        %v486 = vld [vmem:[#allocation2 + $0x5b8] sm:$0xff]
        %v487 = vld [vmem:[#allocation2 + $0x5c0] sm:$0xff]
        %v488 = vld [vmem:[#allocation2 + $0x5c8] sm:$0xff]
        %v489 = vld [vmem:[#allocation2 + $0x5d0] sm:$0xff]
        %v490 = vld [vmem:[#allocation2 + $0x5d8] sm:$0xff]
        %v491 = vld [vmem:[#allocation2 + $0x5e0] sm:$0xff]
        %v492 = vld [vmem:[#allocation2 + $0x5e8] sm:$0xff]
        %v493 = vld [vmem:[#allocation2 + $0x5f0] sm:$0xff]
        %v494 = vld [vmem:[#allocation2 + $0x5f8] sm:$0xff]
        %v495 = vld [vmem:[#allocation2 + $0x600] sm:$0xff]
        %v496 = vld [vmem:[#allocation2 + $0x608] sm:$0xff]
        %v497 = vld [vmem:[#allocation2 + $0x610] sm:$0xff]
        %v498 = vld [vmem:[#allocation2 + $0x618] sm:$0xff]
        %v499 = vld [vmem:[#allocation2 + $0x620] sm:$0xff]
        %v500 = vld [vmem:[#allocation2 + $0x628] sm:$0xff]
        %v501 = vld [vmem:[#allocation2 + $0x630] sm:$0xff]
        %v502 = vld [vmem:[#allocation2 + $0x638] sm:$0xff]
        %v503 = vld [vmem:[#allocation2 + $0x640] sm:$0xff]
        %v504 = vld [vmem:[#allocation2 + $0x648] sm:$0xff]
        %v505 = vld [vmem:[#allocation2 + $0x650] sm:$0xff]
        %v506 = vld [vmem:[#allocation2 + $0x658] sm:$0xff]
        %v507 = vld [vmem:[#allocation2 + $0x660] sm:$0xff]
        %v508 = vld [vmem:[#allocation2 + $0x668] sm:$0xff]
        %v509 = vld [vmem:[#allocation2 + $0x670] sm:$0xff]
        %v510 = vld [vmem:[#allocation2 + $0x678] sm:$0xff]
        %v511 = vld [vmem:[#allocation2 + $0x680] sm:$0xff]
        %v512 = vld [vmem:[#allocation2 + $0x688] sm:$0xff]
        %v513 = vld [vmem:[#allocation2 + $0x690] sm:$0xff]
        %v514 = vld [vmem:[#allocation2 + $0x698] sm:$0xff]
        %v515 = vld [vmem:[#allocation2 + $0x6a0] sm:$0xff]
        %v516 = vld [vmem:[#allocation2 + $0x6a8] sm:$0xff]
        %v517 = vld [vmem:[#allocation2 + $0x6b0] sm:$0xff]
        %v518 = vld [vmem:[#allocation2 + $0x6b8] sm:$0xff]
        %v519 = vld [vmem:[#allocation2 + $0x6c0] sm:$0xff]
        %v520 = vld [vmem:[#allocation2 + $0x6c8] sm:$0xff]
        %v521 = vld [vmem:[#allocation2 + $0x6d0] sm:$0xff]
        %v522 = vld [vmem:[#allocation2 + $0x6d8] sm:$0xff]
        %v523 = vld [vmem:[#allocation2 + $0x6e0] sm:$0xff]
        %v524 = vld [vmem:[#allocation2 + $0x6e8] sm:$0xff]
        %v525 = vld [vmem:[#allocation2 + $0x6f0] sm:$0xff]
        %v526 = vld [vmem:[#allocation2 + $0x6f8] sm:$0xff]
        %v527 = vld [vmem:[#allocation2 + $0x700] sm:$0xff]
        %v528 = vld [vmem:[#allocation2 + $0x708] sm:$0xff]
        %v529 = vld [vmem:[#allocation2 + $0x710] sm:$0xff]
        %v530 = vld [vmem:[#allocation2 + $0x718] sm:$0xff]
        %v531 = vld [vmem:[#allocation2 + $0x720] sm:$0xff]
        %v532 = vld [vmem:[#allocation2 + $0x728] sm:$0xff]
        %v533 = vld [vmem:[#allocation2 + $0x730] sm:$0xff]
        %v534 = vld [vmem:[#allocation2 + $0x738] sm:$0xff]
        %v535 = vld [vmem:[#allocation2 + $0x740] sm:$0xff]
        %v536 = vld [vmem:[#allocation2 + $0x748] sm:$0xff]
        %v537 = vld [vmem:[#allocation2 + $0x750] sm:$0xff]
        %v538 = vld [vmem:[#allocation2 + $0x758] sm:$0xff]
        %v539 = vld [vmem:[#allocation2 + $0x760] sm:$0xff]
        %v540 = vld [vmem:[#allocation2 + $0x768] sm:$0xff]
        %v541 = vld [vmem:[#allocation2 + $0x770] sm:$0xff]
        %v542 = vld [vmem:[#allocation2 + $0x778] sm:$0xff]
        %v543 = vld [vmem:[#allocation2 + $0x780] sm:$0xff]
        %v544 = vld [vmem:[#allocation2 + $0x788] sm:$0xff]
        %v545 = vld [vmem:[#allocation2 + $0x790] sm:$0xff]
        %v546 = vld [vmem:[#allocation2 + $0x798] sm:$0xff]
        %v547 = vld [vmem:[#allocation2 + $0x7a0] sm:$0xff]
        %v548 = vld [vmem:[#allocation2 + $0x7a8] sm:$0xff]
        %v549 = vld [vmem:[#allocation2 + $0x7b0] sm:$0xff]
        %v550 = vld [vmem:[#allocation2 + $0x7b8] sm:$0xff]
        %v551 = vld [vmem:[#allocation2 + $0x7c0] sm:$0xff]
        %v552 = vld [vmem:[#allocation2 + $0x7c8] sm:$0xff]
        %v553 = vld [vmem:[#allocation2 + $0x7d0] sm:$0xff]
        %v554 = vld [vmem:[#allocation2 + $0x7d8] sm:$0xff]
        %v555 = vld [vmem:[#allocation2 + $0x7e0] sm:$0xff]
        %v556 = vld [vmem:[#allocation2 + $0x7e8] sm:$0xff]
        %v557 = vld [vmem:[#allocation2 + $0x7f0] sm:$0xff]
        %v558 = vld [vmem:[#allocation2 + $0x7f8] sm:$0xff]
        %v559 = vld [vmem:[#allocation2 + $0x800] sm:$0xff]
        %v560 = vld [vmem:[#allocation2 + $0x808] sm:$0xff]
        %v561 = vld [vmem:[#allocation2 + $0x810] sm:$0xff]
        %v562 = vld [vmem:[#allocation2 + $0x818] sm:$0xff]
        %v563 = vld [vmem:[#allocation2 + $0x820] sm:$0xff]
        %v564 = vld [vmem:[#allocation2 + $0x828] sm:$0xff]
        %v565 = vld [vmem:[#allocation2 + $0x830] sm:$0xff]
        %v566 = vld [vmem:[#allocation2 + $0x838] sm:$0xff]
        %v567 = vld [vmem:[#allocation2 + $0x840] sm:$0xff]
        %v568 = vld [vmem:[#allocation2 + $0x848] sm:$0xff]
        %v569 = vld [vmem:[#allocation2 + $0x850] sm:$0xff]
        %v570 = vld [vmem:[#allocation2 + $0x858] sm:$0xff]
        %v571 = vld [vmem:[#allocation2 + $0x860] sm:$0xff]
        %v572 = vld [vmem:[#allocation2 + $0x868] sm:$0xff]
        %v573 = vld [vmem:[#allocation2 + $0x870] sm:$0xff]
        %v574 = vld [vmem:[#allocation2 + $0x878] sm:$0xff]
        %v575 = vld [vmem:[#allocation2 + $0x880] sm:$0xff]
        %v576 = vld [vmem:[#allocation2 + $0x888] sm:$0xff]
        %v577 = vld [vmem:[#allocation2 + $0x890] sm:$0xff]
        %v578 = vld [vmem:[#allocation2 + $0x898] sm:$0xff]
        %v579 = vld [vmem:[#allocation2 + $0x8a0] sm:$0xff]
        %v580 = vld [vmem:[#allocation2 + $0x8a8] sm:$0xff]
        %v581 = vld [vmem:[#allocation2 + $0x8b0] sm:$0xff]
        %v582 = vld [vmem:[#allocation2 + $0x8b8] sm:$0xff]
        %v583 = vld [vmem:[#allocation2 + $0x8c0] sm:$0xff]
        %v584 = vld [vmem:[#allocation2 + $0x8c8] sm:$0xff]
        %v585 = vld [vmem:[#allocation2 + $0x8d0] sm:$0xff]
        %v586 = vld [vmem:[#allocation2 + $0x8d8] sm:$0xff]
        %v587 = vld [vmem:[#allocation2 + $0x8e0] sm:$0xff]
        %v588 = vld [vmem:[#allocation2 + $0x8e8] sm:$0xff]
        %v589 = vld [vmem:[#allocation2 + $0x8f0] sm:$0xff]
        %v590 = vld [vmem:[#allocation2 + $0x8f8] sm:$0xff]
        %v591 = vld [vmem:[#allocation2 + $0x900] sm:$0xff]
        %v592 = vld [vmem:[#allocation2 + $0x908] sm:$0xff]
        %v593 = vld [vmem:[#allocation2 + $0x910] sm:$0xff]
        %v594 = vld [vmem:[#allocation2 + $0x918] sm:$0xff]
        %v595 = vld [vmem:[#allocation2 + $0x920] sm:$0xff]
        %v596 = vld [vmem:[#allocation2 + $0x928] sm:$0xff]
        %v597 = vld [vmem:[#allocation2 + $0x930] sm:$0xff]
        %v598 = vld [vmem:[#allocation2 + $0x938] sm:$0xff]
        %v599 = vld [vmem:[#allocation2 + $0x940] sm:$0xff]
        %v600 = vld [vmem:[#allocation2 + $0x948] sm:$0xff]
        %v601 = vld [vmem:[#allocation2 + $0x950] sm:$0xff]
        %v602 = vld [vmem:[#allocation2 + $0x958] sm:$0xff]
        %v603 = vld [vmem:[#allocation2 + $0x960] sm:$0xff]
        %v604 = vld [vmem:[#allocation2 + $0x968] sm:$0xff]
        %v605 = vld [vmem:[#allocation2 + $0x970] sm:$0xff]
        %v606 = vld [vmem:[#allocation2 + $0x978] sm:$0xff]
        %v607 = vld [vmem:[#allocation2 + $0x980] sm:$0xff]
        %v608 = vld [vmem:[#allocation2 + $0x988] sm:$0xff]
        %v609 = vld [vmem:[#allocation2 + $0x990] sm:$0xff]
        %v610 = vld [vmem:[#allocation2 + $0x998] sm:$0xff]
        %v611 = vld [vmem:[#allocation2 + $0x9a0] sm:$0xff]
        %v612 = vld [vmem:[#allocation2 + $0x9a8] sm:$0xff]
        %v613 = vld [vmem:[#allocation2 + $0x9b0] sm:$0xff]
        %v614 = vld [vmem:[#allocation2 + $0x9b8] sm:$0xff]
        %v615 = vld [vmem:[#allocation2 + $0x9c0] sm:$0xff]
        %v616 = vld [vmem:[#allocation2 + $0x9c8] sm:$0xff]
        %v617 = vld [vmem:[#allocation2 + $0x9d0] sm:$0xff]
        %v618 = vld [vmem:[#allocation2 + $0x9d8] sm:$0xff]
        %v619 = vld [vmem:[#allocation2 + $0x9e0] sm:$0xff]
        %v620 = vld [vmem:[#allocation2 + $0x9e8] sm:$0xff]
        %v621 = vld [vmem:[#allocation2 + $0x9f0] sm:$0xff]
        %v622 = vld [vmem:[#allocation2 + $0x9f8] sm:$0xff]
        %v623 = vld [vmem:[#allocation2 + $0xa00] sm:$0xff]
        %v624 = vld [vmem:[#allocation2 + $0xa08] sm:$0xff]
        %v625 = vld [vmem:[#allocation2 + $0xa10] sm:$0xff]
        %v626 = vld [vmem:[#allocation2 + $0xa18] sm:$0xff]
        %v627 = vld [vmem:[#allocation2 + $0xa20] sm:$0xff]
        %v628 = vld [vmem:[#allocation2 + $0xa28] sm:$0xff]
        %v629 = vld [vmem:[#allocation2 + $0xa30] sm:$0xff]
        %v630 = vld [vmem:[#allocation2 + $0xa38] sm:$0xff]
        %v631 = vld [vmem:[#allocation2 + $0xa40] sm:$0xff]
        %v632 = vld [vmem:[#allocation2 + $0xa48] sm:$0xff]
        %v633 = vld [vmem:[#allocation2 + $0xa50] sm:$0xff]
        %v634 = vld [vmem:[#allocation2 + $0xa58] sm:$0xff]
        %v635 = vld [vmem:[#allocation2 + $0xa60] sm:$0xff]
        %v636 = vld [vmem:[#allocation2 + $0xa68] sm:$0xff]
        %v637 = vld [vmem:[#allocation2 + $0xa70] sm:$0xff]
        %v638 = vld [vmem:[#allocation2 + $0xa78] sm:$0xff]
        %v639 = vld [vmem:[#allocation2 + $0xa80] sm:$0xff]
        %v640 = vld [vmem:[#allocation2 + $0xa88] sm:$0xff]
        %v641 = vld [vmem:[#allocation2 + $0xa90] sm:$0xff]
        %v642 = vld [vmem:[#allocation2 + $0xa98] sm:$0xff]
        %v643 = vld [vmem:[#allocation2 + $0xaa0] sm:$0xff]
        %v644 = vld [vmem:[#allocation2 + $0xaa8] sm:$0xff]
        %v645 = vld [vmem:[#allocation2 + $0xab0] sm:$0xff]
        %v646 = vld [vmem:[#allocation2 + $0xab8] sm:$0xff]
        %v647 = vld [vmem:[#allocation2 + $0xac0] sm:$0xff]
        %v648 = vld [vmem:[#allocation2 + $0xac8] sm:$0xff]
        %v649 = vld [vmem:[#allocation2 + $0xad0] sm:$0xff]
        %v650 = vld [vmem:[#allocation2 + $0xad8] sm:$0xff]
        %v651 = vld [vmem:[#allocation2 + $0xae0] sm:$0xff]
        %v652 = vld [vmem:[#allocation2 + $0xae8] sm:$0xff]
        %v653 = vld [vmem:[#allocation2 + $0xaf0] sm:$0xff]
        %v654 = vld [vmem:[#allocation2 + $0xaf8] sm:$0xff]
        %v655 = vld [vmem:[#allocation2 + $0xb00] sm:$0xff]
        %v656 = vld [vmem:[#allocation2 + $0xb08] sm:$0xff]
        %v657 = vld [vmem:[#allocation2 + $0xb10] sm:$0xff]
        %v658 = vld [vmem:[#allocation2 + $0xb18] sm:$0xff]
        %v659 = vld [vmem:[#allocation2 + $0xb20] sm:$0xff]
        %v660 = vld [vmem:[#allocation2 + $0xb28] sm:$0xff]
        %v661 = vld [vmem:[#allocation2 + $0xb30] sm:$0xff]
        %v662 = vld [vmem:[#allocation2 + $0xb38] sm:$0xff]
        %v663 = vld [vmem:[#allocation2 + $0xb40] sm:$0xff]
        %v664 = vld [vmem:[#allocation2 + $0xb48] sm:$0xff]
        %v665 = vld [vmem:[#allocation2 + $0xb50] sm:$0xff]
        %v666 = vld [vmem:[#allocation2 + $0xb58] sm:$0xff]
        %v667 = vld [vmem:[#allocation2 + $0xb60] sm:$0xff]
        %v668 = vld [vmem:[#allocation2 + $0xb68] sm:$0xff]
        %v669 = vld [vmem:[#allocation2 + $0xb70] sm:$0xff]
        %v670 = vld [vmem:[#allocation2 + $0xb78] sm:$0xff]
        %v671 = vld [vmem:[#allocation2 + $0xb80] sm:$0xff]
        %v672 = vld [vmem:[#allocation2 + $0xb88] sm:$0xff]
        %v673 = vld [vmem:[#allocation2 + $0xb90] sm:$0xff]
        %v674 = vld [vmem:[#allocation2 + $0xb98] sm:$0xff]
        %v675 = vld [vmem:[#allocation2 + $0xba0] sm:$0xff]
        %v676 = vld [vmem:[#allocation2 + $0xba8] sm:$0xff]
        %v677 = vld [vmem:[#allocation2 + $0xbb0] sm:$0xff]
        %v678 = vld [vmem:[#allocation2 + $0xbb8] sm:$0xff]
        %v679 = vld [vmem:[#allocation2 + $0xbc0] sm:$0xff]
        %v680 = vld [vmem:[#allocation2 + $0xbc8] sm:$0xff]
        %v681 = vld [vmem:[#allocation2 + $0xbd0] sm:$0xff]
        %v682 = vld [vmem:[#allocation2 + $0xbd8] sm:$0xff]
        %v683 = vld [vmem:[#allocation2 + $0xbe0] sm:$0xff]
        %v684 = vld [vmem:[#allocation2 + $0xbe8] sm:$0xff]
        %v685 = vld [vmem:[#allocation2 + $0xbf0] sm:$0xff]
        %v686 = vld [vmem:[#allocation2 + $0xbf8] sm:$0xff]
        %v687 = vld [vmem:[#allocation2 + $0xc00] sm:$0xff]
        %v688 = vld [vmem:[#allocation2 + $0xc08] sm:$0xff]
        %v689 = vld [vmem:[#allocation2 + $0xc10] sm:$0xff]
        %v690 = vld [vmem:[#allocation2 + $0xc18] sm:$0xff]
        %v691 = vld [vmem:[#allocation2 + $0xc20] sm:$0xff]
        %v692 = vld [vmem:[#allocation2 + $0xc28] sm:$0xff]
        %v693 = vld [vmem:[#allocation2 + $0xc30] sm:$0xff]
        %v694 = vld [vmem:[#allocation2 + $0xc38] sm:$0xff]
        %v695 = vld [vmem:[#allocation2 + $0xc40] sm:$0xff]
        %v696 = vld [vmem:[#allocation2 + $0xc48] sm:$0xff]
        %v697 = vld [vmem:[#allocation2 + $0xc50] sm:$0xff]
        %v698 = vld [vmem:[#allocation2 + $0xc58] sm:$0xff]
        %v699 = vld [vmem:[#allocation2 + $0xc60] sm:$0xff]
        %v700 = vld [vmem:[#allocation2 + $0xc68] sm:$0xff]
        %v701 = vld [vmem:[#allocation2 + $0xc70] sm:$0xff]
        %v702 = vld [vmem:[#allocation2 + $0xc78] sm:$0xff]
        %v703 = vld [vmem:[#allocation2 + $0xc80] sm:$0xff]
        %v704 = vld [vmem:[#allocation2 + $0xc88] sm:$0xff]
        %v705 = vld [vmem:[#allocation2 + $0xc90] sm:$0xff]
        %v706 = vld [vmem:[#allocation2 + $0xc98] sm:$0xff]
        %v707 = vld [vmem:[#allocation2 + $0xca0] sm:$0xff]
        %v708 = vld [vmem:[#allocation2 + $0xca8] sm:$0xff]
        %v709 = vld [vmem:[#allocation2 + $0xcb0] sm:$0xff]
        %v710 = vld [vmem:[#allocation2 + $0xcb8] sm:$0xff]
        %v711 = vld [vmem:[#allocation2 + $0xcc0] sm:$0xff]
        %v712 = vld [vmem:[#allocation2 + $0xcc8] sm:$0xff]
        %v713 = vld [vmem:[#allocation2 + $0xcd0] sm:$0xff]
        %v714 = vld [vmem:[#allocation2 + $0xcd8] sm:$0xff]
        %v715 = vld [vmem:[#allocation2 + $0xce0] sm:$0xff]
        %v716 = vld [vmem:[#allocation2 + $0xce8] sm:$0xff]
        %v717 = vld [vmem:[#allocation2 + $0xcf0] sm:$0xff]
        %v718 = vld [vmem:[#allocation2 + $0xcf8] sm:$0xff]
        %v719 = vld [vmem:[#allocation2 + $0xd00] sm:$0xff]
        %v720 = vld [vmem:[#allocation2 + $0xd08] sm:$0xff]
        %v721 = vld [vmem:[#allocation2 + $0xd10] sm:$0xff]
        %v722 = vld [vmem:[#allocation2 + $0xd18] sm:$0xff]
        %v723 = vld [vmem:[#allocation2 + $0xd20] sm:$0xff]
        %v724 = vld [vmem:[#allocation2 + $0xd28] sm:$0xff]
        %v725 = vld [vmem:[#allocation2 + $0xd30] sm:$0xff]
        %v726 = vld [vmem:[#allocation2 + $0xd38] sm:$0xff]
        %v727 = vld [vmem:[#allocation2 + $0xd40] sm:$0xff]
        %v728 = vld [vmem:[#allocation2 + $0xd48] sm:$0xff]
        %v729 = vld [vmem:[#allocation2 + $0xd50] sm:$0xff]
        %v730 = vld [vmem:[#allocation2 + $0xd58] sm:$0xff]
        %v731 = vld [vmem:[#allocation2 + $0xd60] sm:$0xff]
        %v732 = vld [vmem:[#allocation2 + $0xd68] sm:$0xff]
        %v733 = vld [vmem:[#allocation2 + $0xd70] sm:$0xff]
        %v734 = vld [vmem:[#allocation2 + $0xd78] sm:$0xff]
        %v735 = vld [vmem:[#allocation2 + $0xd80] sm:$0xff]
        %v736 = vld [vmem:[#allocation2 + $0xd88] sm:$0xff]
        %v737 = vld [vmem:[#allocation2 + $0xd90] sm:$0xff]
        %v738 = vld [vmem:[#allocation2 + $0xd98] sm:$0xff]
        %v739 = vld [vmem:[#allocation2 + $0xda0] sm:$0xff]
        %v740 = vld [vmem:[#allocation2 + $0xda8] sm:$0xff]
        %v741 = vld [vmem:[#allocation2 + $0xdb0] sm:$0xff]
        %v742 = vld [vmem:[#allocation2 + $0xdb8] sm:$0xff]
        %v743 = vld [vmem:[#allocation2 + $0xdc0] sm:$0xff]
        %v744 = vld [vmem:[#allocation2 + $0xdc8] sm:$0xff]
        %v745 = vld [vmem:[#allocation2 + $0xdd0] sm:$0xff]
        %v746 = vld [vmem:[#allocation2 + $0xdd8] sm:$0xff]
        %v747 = vld [vmem:[#allocation2 + $0xde0] sm:$0xff]
        %v748 = vld [vmem:[#allocation2 + $0xde8] sm:$0xff]
        %v749 = vld [vmem:[#allocation2 + $0xdf0] sm:$0xff]
        %v750 = vld [vmem:[#allocation2 + $0xdf8] sm:$0xff]
        %v751 = vld [vmem:[#allocation2 + $0xe00] sm:$0xff]
        %v752 = vld [vmem:[#allocation2 + $0xe08] sm:$0xff]
        %v753 = vld [vmem:[#allocation2 + $0xe10] sm:$0xff]
        %v754 = vld [vmem:[#allocation2 + $0xe18] sm:$0xff]
        %v755 = vld [vmem:[#allocation2 + $0xe20] sm:$0xff]
        %v756 = vld [vmem:[#allocation2 + $0xe28] sm:$0xff]
        %v757 = vld [vmem:[#allocation2 + $0xe30] sm:$0xff]
        %v758 = vld [vmem:[#allocation2 + $0xe38] sm:$0xff]
        %v759 = vld [vmem:[#allocation2 + $0xe40] sm:$0xff]
        %v760 = vld [vmem:[#allocation2 + $0xe48] sm:$0xff]
        %v761 = vld [vmem:[#allocation2 + $0xe50] sm:$0xff]
        %v762 = vld [vmem:[#allocation2 + $0xe58] sm:$0xff]
        %v763 = vld [vmem:[#allocation2 + $0xe60] sm:$0xff]
        %v764 = vld [vmem:[#allocation2 + $0xe68] sm:$0xff]
        %v765 = vld [vmem:[#allocation2 + $0xe70] sm:$0xff]
        %v766 = vld [vmem:[#allocation2 + $0xe78] sm:$0xff]
        %v767 = vld [vmem:[#allocation2 + $0xe80] sm:$0xff]
        %v768 = vld [vmem:[#allocation2 + $0xe88] sm:$0xff]
        %v769 = vld [vmem:[#allocation2 + $0xe90] sm:$0xff]
        %v770 = vld [vmem:[#allocation2 + $0xe98] sm:$0xff]
        %v771 = vld [vmem:[#allocation2 + $0xea0] sm:$0xff]
        %v772 = vld [vmem:[#allocation2 + $0xea8] sm:$0xff]
        %v773 = vld [vmem:[#allocation2 + $0xeb0] sm:$0xff]
        %v774 = vld [vmem:[#allocation2 + $0xeb8] sm:$0xff]
        %v775 = vld [vmem:[#allocation2 + $0xec0] sm:$0xff]
        %v776 = vld [vmem:[#allocation2 + $0xec8] sm:$0xff]
        %v777 = vld [vmem:[#allocation2 + $0xed0] sm:$0xff]
        %v778 = vld [vmem:[#allocation2 + $0xed8] sm:$0xff]
        %v779 = vld [vmem:[#allocation2 + $0xee0] sm:$0xff]
        %v780 = vld [vmem:[#allocation2 + $0xee8] sm:$0xff]
        %v781 = vld [vmem:[#allocation2 + $0xef0] sm:$0xff]
        %v782 = vld [vmem:[#allocation2 + $0xef8] sm:$0xff]
        %v783 = vld [vmem:[#allocation2 + $0xf00] sm:$0xff]
        %v784 = vld [vmem:[#allocation2 + $0xf08] sm:$0xff]
        %v785 = vld [vmem:[#allocation2 + $0xf10] sm:$0xff]
        %v786 = vld [vmem:[#allocation2 + $0xf18] sm:$0xff]
        %v787 = vld [vmem:[#allocation2 + $0xf20] sm:$0xff]
        %v788 = vld [vmem:[#allocation2 + $0xf28] sm:$0xff]
        %v789 = vld [vmem:[#allocation2 + $0xf30] sm:$0xff]
        %v790 = vld [vmem:[#allocation2 + $0xf38] sm:$0xff]
        %v791 = vld [vmem:[#allocation2 + $0xf40] sm:$0xff]
        %v792 = vld [vmem:[#allocation2 + $0xf48] sm:$0xff]
        %v793 = vld [vmem:[#allocation2 + $0xf50] sm:$0xff]
        %v794 = vld [vmem:[#allocation2 + $0xf58] sm:$0xff]
        %v795 = vld [vmem:[#allocation2 + $0xf60] sm:$0xff]
        %v796 = vld [vmem:[#allocation2 + $0xf68] sm:$0xff]
        %v797 = vld [vmem:[#allocation2 + $0xf70] sm:$0xff]
        %v798 = vld [vmem:[#allocation2 + $0xf78] sm:$0xff]
        %v799 = vld [vmem:[#allocation2 + $0xf80] sm:$0xff]
        %v800 = vld [vmem:[#allocation2 + $0xf88] sm:$0xff]
        %v801 = vld [vmem:[#allocation2 + $0xf90] sm:$0xff]
        %v802 = vld [vmem:[#allocation2 + $0xf98] sm:$0xff]
        %v803 = vld [vmem:[#allocation2 + $0xfa0] sm:$0xff]
        %v804 = vld [vmem:[#allocation2 + $0xfa8] sm:$0xff]
        %v805 = vld [vmem:[#allocation2 + $0xfb0] sm:$0xff]
        %v806 = vld [vmem:[#allocation2 + $0xfb8] sm:$0xff]
        %v807 = vld [vmem:[#allocation2 + $0xfc0] sm:$0xff]
        %v808 = vld [vmem:[#allocation2 + $0xfc8] sm:$0xff]
        %v809 = vld [vmem:[#allocation2 + $0xfd0] sm:$0xff]
        %v810 = vld [vmem:[#allocation2 + $0xfd8] sm:$0xff]
        %v811 = vld [vmem:[#allocation2 + $0xfe0] sm:$0xff]
        %v812 = vld [vmem:[#allocation2 + $0xfe8] sm:$0xff]
        %v813 = vld [vmem:[#allocation2 + $0xff0] sm:$0xff]
        %v814 = vld [vmem:[#allocation2 + $0xff8] sm:$0xff]
        %v815 = vld [vmem:[#allocation2 + $0x1000] sm:$0xff]
        %v816 = vld [vmem:[#allocation2 + $0x1008] sm:$0xff]
        %v817 = vld [vmem:[#allocation2 + $0x1010] sm:$0xff]
        %v818 = vld [vmem:[#allocation2 + $0x1018] sm:$0xff]
        %v819 = vld [vmem:[#allocation2 + $0x1020] sm:$0xff]
        %v820 = vld [vmem:[#allocation2 + $0x1028] sm:$0xff]
        %v821 = vld [vmem:[#allocation2 + $0x1030] sm:$0xff]
        %v822 = vld [vmem:[#allocation2 + $0x1038] sm:$0xff]
        %v823 = vld [vmem:[#allocation2 + $0x1040] sm:$0xff]
        %v824 = vld [vmem:[#allocation2 + $0x1048] sm:$0xff]
        %v825 = vld [vmem:[#allocation2 + $0x1050] sm:$0xff]
        %v826 = vld [vmem:[#allocation2 + $0x1058] sm:$0xff]
        %v827 = vld [vmem:[#allocation2 + $0x1060] sm:$0xff]
        %v828 = vld [vmem:[#allocation2 + $0x1068] sm:$0xff]
        %v829 = vld [vmem:[#allocation2 + $0x1070] sm:$0xff]
        %v830 = vld [vmem:[#allocation2 + $0x1078] sm:$0xff]
        %v831 = vld [vmem:[#allocation2 + $0x1080] sm:$0xff]
        %v832 = vld [vmem:[#allocation2 + $0x1088] sm:$0xff]
        %v833 = vld [vmem:[#allocation2 + $0x1090] sm:$0xff]
        %v834 = vld [vmem:[#allocation2 + $0x1098] sm:$0xff]
        %v835 = vld [vmem:[#allocation2 + $0x10a0] sm:$0xff]
        %v836 = vld [vmem:[#allocation2 + $0x10a8] sm:$0xff]
        %v837 = vld [vmem:[#allocation2 + $0x10b0] sm:$0xff]
        %v838 = vld [vmem:[#allocation2 + $0x10b8] sm:$0xff]
        %v839 = vld [vmem:[#allocation2 + $0x10c0] sm:$0xff]
        %v840 = vld [vmem:[#allocation2 + $0x10c8] sm:$0xff]
        %v841 = vld [vmem:[#allocation2 + $0x10d0] sm:$0xff]
        %v842 = vld [vmem:[#allocation2 + $0x10d8] sm:$0xff]
        %v843 = vld [vmem:[#allocation2 + $0x10e0] sm:$0xff]
        %v844 = vld [vmem:[#allocation2 + $0x10e8] sm:$0xff]
        %v845 = vld [vmem:[#allocation2 + $0x10f0] sm:$0xff]
        %v846 = vld [vmem:[#allocation2 + $0x10f8] sm:$0xff]
        %v847 = vld [vmem:[#allocation2 + $0x1100] sm:$0xff]
        %v848 = vld [vmem:[#allocation2 + $0x1108] sm:$0xff]
        %v849 = vld [vmem:[#allocation2 + $0x1110] sm:$0xff]
        %v850 = vld [vmem:[#allocation2 + $0x1118] sm:$0xff]
        %v851 = vld [vmem:[#allocation2 + $0x1120] sm:$0xff]
        %v852 = vld [vmem:[#allocation2 + $0x1128] sm:$0xff]
        %v853 = vld [vmem:[#allocation2 + $0x1130] sm:$0xff]
        %v854 = vld [vmem:[#allocation2 + $0x1138] sm:$0xff]
        %v855 = vld [vmem:[#allocation2 + $0x1140] sm:$0xff]
        %v856 = vld [vmem:[#allocation2 + $0x1148] sm:$0xff]
        %v857 = vld [vmem:[#allocation2 + $0x1150] sm:$0xff]
        %v858 = vld [vmem:[#allocation2 + $0x1158] sm:$0xff]
        %v859 = vld [vmem:[#allocation2 + $0x1160] sm:$0xff]
        %v860 = vld [vmem:[#allocation2 + $0x1168] sm:$0xff]
        %v861 = vld [vmem:[#allocation2 + $0x1170] sm:$0xff]
        %v862 = vld [vmem:[#allocation2 + $0x1178] sm:$0xff]
        %v863 = vld [vmem:[#allocation2 + $0x1180] sm:$0xff]
        %v864 = vld [vmem:[#allocation2 + $0x1188] sm:$0xff]
        %v865 = vld [vmem:[#allocation2 + $0x1190] sm:$0xff]
        %v866 = vld [vmem:[#allocation2 + $0x1198] sm:$0xff]
        %v867 = vld [vmem:[#allocation2 + $0x11a0] sm:$0xff]
        %v868 = vld [vmem:[#allocation2 + $0x11a8] sm:$0xff]
        %v869 = vld [vmem:[#allocation2 + $0x11b0] sm:$0xff]
        %v870 = vld [vmem:[#allocation2 + $0x11b8] sm:$0xff]
        %v871 = vld [vmem:[#allocation2 + $0x11c0] sm:$0xff]
        %v872 = vld [vmem:[#allocation2 + $0x11c8] sm:$0xff]
        %v873 = vld [vmem:[#allocation2 + $0x11d0] sm:$0xff]
        %v874 = vld [vmem:[#allocation2 + $0x11d8] sm:$0xff]
        %v875 = vld [vmem:[#allocation2 + $0x11e0] sm:$0xff]
        %v876 = vld [vmem:[#allocation2 + $0x11e8] sm:$0xff]
        %v877 = vld [vmem:[#allocation2 + $0x11f0] sm:$0xff]
        %v878 = vld [vmem:[#allocation2 + $0x11f8] sm:$0xff]
        %v879 = vld [vmem:[#allocation2 + $0x1200] sm:$0xff]
        %v880 = vld [vmem:[#allocation2 + $0x1208] sm:$0xff]
        %v881 = vld [vmem:[#allocation2 + $0x1210] sm:$0xff]
        %v882 = vld [vmem:[#allocation2 + $0x1218] sm:$0xff]
        %v883 = vld [vmem:[#allocation2 + $0x1220] sm:$0xff]
        %v884 = vld [vmem:[#allocation2 + $0x1228] sm:$0xff]
        %v885 = vld [vmem:[#allocation2 + $0x1230] sm:$0xff]
        %v886 = vld [vmem:[#allocation2 + $0x1238] sm:$0xff]
        %v887 = vld [vmem:[#allocation2 + $0x1240] sm:$0xff]
        %v888 = vld [vmem:[#allocation2 + $0x1248] sm:$0xff]
        %v889 = vld [vmem:[#allocation2 + $0x1250] sm:$0xff]
        %v890 = vld [vmem:[#allocation2 + $0x1258] sm:$0xff]
        %v891 = vld [vmem:[#allocation2 + $0x1260] sm:$0xff]
        %v892 = vld [vmem:[#allocation2 + $0x1268] sm:$0xff]
        %v893 = vld [vmem:[#allocation2 + $0x1270] sm:$0xff]
        %v894 = vld [vmem:[#allocation2 + $0x1278] sm:$0xff]
        %v895 = vld [vmem:[#allocation2 + $0x1280] sm:$0xff]
        %v896 = vld [vmem:[#allocation2 + $0x1288] sm:$0xff]
        %v897 = vld [vmem:[#allocation2 + $0x1290] sm:$0xff]
        %v898 = vld [vmem:[#allocation2 + $0x1298] sm:$0xff]
        %v899 = vld [vmem:[#allocation2 + $0x12a0] sm:$0xff]
        %v900 = vld [vmem:[#allocation2 + $0x12a8] sm:$0xff]
        %v901 = vld [vmem:[#allocation2 + $0x12b0] sm:$0xff]
        %v902 = vld [vmem:[#allocation2 + $0x12b8] sm:$0xff]
        %v903 = vld [vmem:[#allocation2 + $0x12c0] sm:$0xff]
        %v904 = vld [vmem:[#allocation2 + $0x12c8] sm:$0xff]
        %v905 = vld [vmem:[#allocation2 + $0x12d0] sm:$0xff]
        %v906 = vld [vmem:[#allocation2 + $0x12d8] sm:$0xff]
        %v907 = vld [vmem:[#allocation2 + $0x12e0] sm:$0xff]
        %v908 = vld [vmem:[#allocation2 + $0x12e8] sm:$0xff]
        %v909 = vld [vmem:[#allocation2 + $0x12f0] sm:$0xff]
        %v910 = vld [vmem:[#allocation2 + $0x12f8] sm:$0xff]
        %v911 = vld [vmem:[#allocation2 + $0x1300] sm:$0xff]
        %v912 = vld [vmem:[#allocation2 + $0x1308] sm:$0xff]
        %v913 = vld [vmem:[#allocation2 + $0x1310] sm:$0xff]
        %v914 = vld [vmem:[#allocation2 + $0x1318] sm:$0xff]
        %v915 = vld [vmem:[#allocation2 + $0x1320] sm:$0xff]
        %v916 = vld [vmem:[#allocation2 + $0x1328] sm:$0xff]
        %v917 = vld [vmem:[#allocation2 + $0x1330] sm:$0xff]
        %v918 = vld [vmem:[#allocation2 + $0x1338] sm:$0xff]
        %v919 = vld [vmem:[#allocation2 + $0x1340] sm:$0xff]
        %v920 = vld [vmem:[#allocation2 + $0x1348] sm:$0xff]
        %v921 = vld [vmem:[#allocation2 + $0x1350] sm:$0xff]
        %v922 = vld [vmem:[#allocation2 + $0x1358] sm:$0xff]
        %v923 = vld [vmem:[#allocation2 + $0x1360] sm:$0xff]
        %v924 = vld [vmem:[#allocation2 + $0x1368] sm:$0xff]
        %v925 = vld [vmem:[#allocation2 + $0x1370] sm:$0xff]
        %v926 = vld [vmem:[#allocation2 + $0x1378] sm:$0xff]
        %v927 = vld [vmem:[#allocation2 + $0x1380] sm:$0xff]
        %v928 = vld [vmem:[#allocation2 + $0x1388] sm:$0xff]
        %v929 = vld [vmem:[#allocation2 + $0x1390] sm:$0xff]
        %v930 = vld [vmem:[#allocation2 + $0x1398] sm:$0xff]
        %v931 = vld [vmem:[#allocation2 + $0x13a0] sm:$0xff]
        %v932 = vld [vmem:[#allocation2 + $0x13a8] sm:$0xff]
        %v933 = vld [vmem:[#allocation2 + $0x13b0] sm:$0xff]
        %v934 = vld [vmem:[#allocation2 + $0x13b8] sm:$0xff]
        %v935 = vld [vmem:[#allocation2 + $0x13c0] sm:$0xff]
        %v936 = vld [vmem:[#allocation2 + $0x13c8] sm:$0xff]
        %v937 = vld [vmem:[#allocation2 + $0x13d0] sm:$0xff]
        %v938 = vld [vmem:[#allocation2 + $0x13d8] sm:$0xff]
        %v939 = vld [vmem:[#allocation2 + $0x13e0] sm:$0xff]
        %v940 = vld [vmem:[#allocation2 + $0x13e8] sm:$0xff]
        %v941 = vld [vmem:[#allocation2 + $0x13f0] sm:$0xff]
        %v942 = vld [vmem:[#allocation2 + $0x13f8] sm:$0xff]
        %v943 = vld [vmem:[#allocation4] sm:$0xf]
        %v945 = vlaneseq
        %v946 = vshrl.u32 %v945, 7
        %v947 = vsub.s32 0, %v946
        %v948 = vrot.slane %v943, %v947
        %v949 = vlaneseq
        %v950 = vshrl.u32 %v949, 7
        %v951 = vsub.s32 1, %v950
        %v952 = vrot.slane %v943, %v951
        %v953 = vlaneseq
        %v954 = vshrl.u32 %v953, 7
        %v955 = vsub.s32 2, %v954
        %v956 = vrot.slane %v943, %v955
        %v957 = vlaneseq
        %v958 = vshrl.u32 %v957, 7
        %v959 = vsub.s32 3, %v958
        %v960 = vrot.slane %v943, %v959
        %v1605 = vunpack.c.l.b16 %v303
        %v1606 = vunpack.c.h.b16 %v303
        %v1607 = vunpack.c.l.b16 %v304
        %v1608 = vunpack.c.h.b16 %v304
        %v1609 = vunpack.c.l.b16 %v305
        %v1610 = vunpack.c.h.b16 %v305
        %v1611 = vunpack.c.l.b16 %v306
        %v1612 = vunpack.c.h.b16 %v306
        %v1613 = vunpack.c.l.b16 %v307
        %v1614 = vunpack.c.h.b16 %v307
        %v1615 = vunpack.c.l.b16 %v308
        %v1616 = vunpack.c.h.b16 %v308
        %v1617 = vunpack.c.l.b16 %v309
        %v1618 = vunpack.c.h.b16 %v309
        %v1619 = vunpack.c.l.b16 %v310
        %v1620 = vunpack.c.h.b16 %v310
        %v1621 = vunpack.c.l.b16 %v311
        %v1622 = vunpack.c.h.b16 %v311
        %v1623 = vunpack.c.l.b16 %v312
        %v1624 = vunpack.c.h.b16 %v312
        %v1625 = vunpack.c.l.b16 %v313
        %v1626 = vunpack.c.h.b16 %v313
        %v1627 = vunpack.c.l.b16 %v314
        %v1628 = vunpack.c.h.b16 %v314
        %v1629 = vunpack.c.l.b16 %v315
        %v1630 = vunpack.c.h.b16 %v315
        %v1631 = vunpack.c.l.b16 %v316
        %v1632 = vunpack.c.h.b16 %v316
        %v1633 = vunpack.c.l.b16 %v317
        %v1634 = vunpack.c.h.b16 %v317
        %v1635 = vunpack.c.l.b16 %v318
        %v1636 = vunpack.c.h.b16 %v318
        %v1637 = vunpack.c.l.b16 %v319
        %v1638 = vunpack.c.h.b16 %v319
        %v1639 = vunpack.c.l.b16 %v320
        %v1640 = vunpack.c.h.b16 %v320
        %v1641 = vunpack.c.l.b16 %v321
        %v1642 = vunpack.c.h.b16 %v321
        %v1643 = vunpack.c.l.b16 %v322
        %v1644 = vunpack.c.h.b16 %v322
        %v1645 = vunpack.c.l.b16 %v323
        %v1646 = vunpack.c.h.b16 %v323
        %v1647 = vunpack.c.l.b16 %v324
        %v1648 = vunpack.c.h.b16 %v324
        %v1649 = vunpack.c.l.b16 %v325
        %v1650 = vunpack.c.h.b16 %v325
        %v1651 = vunpack.c.l.b16 %v326
        %v1652 = vunpack.c.h.b16 %v326
        %v1653 = vunpack.c.l.b16 %v327
        %v1654 = vunpack.c.h.b16 %v327
        %v1655 = vunpack.c.l.b16 %v328
        %v1656 = vunpack.c.h.b16 %v328
        %v1657 = vunpack.c.l.b16 %v329
        %v1658 = vunpack.c.h.b16 %v329
        %v1659 = vunpack.c.l.b16 %v330
        %v1660 = vunpack.c.h.b16 %v330
        %v1661 = vunpack.c.l.b16 %v331
        %v1662 = vunpack.c.h.b16 %v331
        %v1663 = vunpack.c.l.b16 %v332
        %v1664 = vunpack.c.h.b16 %v332
        %v1665 = vunpack.c.l.b16 %v333
        %v1666 = vunpack.c.h.b16 %v333
        %v1667 = vunpack.c.l.b16 %v334
        %v1668 = vunpack.c.h.b16 %v334
        %v1669 = vunpack.c.l.b16 %v335
        %v1670 = vunpack.c.h.b16 %v335
        %v1671 = vunpack.c.l.b16 %v336
        %v1672 = vunpack.c.h.b16 %v336
        %v1673 = vunpack.c.l.b16 %v337
        %v1674 = vunpack.c.h.b16 %v337
        %v1675 = vunpack.c.l.b16 %v338
        %v1676 = vunpack.c.h.b16 %v338
        %v1677 = vunpack.c.l.b16 %v339
        %v1678 = vunpack.c.h.b16 %v339
        %v1679 = vunpack.c.l.b16 %v340
        %v1680 = vunpack.c.h.b16 %v340
        %v1681 = vunpack.c.l.b16 %v341
        %v1682 = vunpack.c.h.b16 %v341
        %v1683 = vunpack.c.l.b16 %v342
        %v1684 = vunpack.c.h.b16 %v342
        %v1685 = vunpack.c.l.b16 %v343
        %v1686 = vunpack.c.h.b16 %v343
        %v1687 = vunpack.c.l.b16 %v344
        %v1688 = vunpack.c.h.b16 %v344
        %v1689 = vunpack.c.l.b16 %v345
        %v1690 = vunpack.c.h.b16 %v345
        %v1691 = vunpack.c.l.b16 %v346
        %v1692 = vunpack.c.h.b16 %v346
        %v1693 = vunpack.c.l.b16 %v347
        %v1694 = vunpack.c.h.b16 %v347
        %v1695 = vunpack.c.l.b16 %v348
        %v1696 = vunpack.c.h.b16 %v348
        %v1697 = vunpack.c.l.b16 %v349
        %v1698 = vunpack.c.h.b16 %v349
        %v1699 = vunpack.c.l.b16 %v350
        %v1700 = vunpack.c.h.b16 %v350
        %v1701 = vunpack.c.l.b16 %v351
        %v1702 = vunpack.c.h.b16 %v351
        %v1703 = vunpack.c.l.b16 %v352
        %v1704 = vunpack.c.h.b16 %v352
        %v1705 = vunpack.c.l.b16 %v353
        %v1706 = vunpack.c.h.b16 %v353
        %v1707 = vunpack.c.l.b16 %v354
        %v1708 = vunpack.c.h.b16 %v354
        %v1709 = vunpack.c.l.b16 %v355
        %v1710 = vunpack.c.h.b16 %v355
        %v1711 = vunpack.c.l.b16 %v356
        %v1712 = vunpack.c.h.b16 %v356
        %v1713 = vunpack.c.l.b16 %v357
        %v1714 = vunpack.c.h.b16 %v357
        %v1715 = vunpack.c.l.b16 %v358
        %v1716 = vunpack.c.h.b16 %v358
        %v1717 = vunpack.c.l.b16 %v359
        %v1718 = vunpack.c.h.b16 %v359
        %v1719 = vunpack.c.l.b16 %v360
        %v1720 = vunpack.c.h.b16 %v360
        %v1721 = vunpack.c.l.b16 %v361
        %v1722 = vunpack.c.h.b16 %v361
        %v1723 = vunpack.c.l.b16 %v362
        %v1724 = vunpack.c.h.b16 %v362
        %v1725 = vunpack.c.l.b16 %v363
        %v1726 = vunpack.c.h.b16 %v363
        %v1727 = vunpack.c.l.b16 %v364
        %v1728 = vunpack.c.h.b16 %v364
        %v1729 = vunpack.c.l.b16 %v365
        %v1730 = vunpack.c.h.b16 %v365
        %v1731 = vunpack.c.l.b16 %v366
        %v1732 = vunpack.c.h.b16 %v366
        %v1733 = vunpack.c.l.b16 %v367
        %v1734 = vunpack.c.h.b16 %v367
        %v1735 = vunpack.c.l.b16 %v368
        %v1736 = vunpack.c.h.b16 %v368
        %v1737 = vunpack.c.l.b16 %v369
        %v1738 = vunpack.c.h.b16 %v369
        %v1739 = vunpack.c.l.b16 %v370
        %v1740 = vunpack.c.h.b16 %v370
        %v1741 = vunpack.c.l.b16 %v371
        %v1742 = vunpack.c.h.b16 %v371
        %v1743 = vunpack.c.l.b16 %v372
        %v1744 = vunpack.c.h.b16 %v372
        %v1745 = vunpack.c.l.b16 %v373
        %v1746 = vunpack.c.h.b16 %v373
        %v1747 = vunpack.c.l.b16 %v374
        %v1748 = vunpack.c.h.b16 %v374
        %v1749 = vunpack.c.l.b16 %v375
        %v1750 = vunpack.c.h.b16 %v375
        %v1751 = vunpack.c.l.b16 %v376
        %v1752 = vunpack.c.h.b16 %v376
        %v1753 = vunpack.c.l.b16 %v377
        %v1754 = vunpack.c.h.b16 %v377
        %v1755 = vunpack.c.l.b16 %v378
        %v1756 = vunpack.c.h.b16 %v378
        %v1757 = vunpack.c.l.b16 %v379
        %v1758 = vunpack.c.h.b16 %v379
        %v1759 = vunpack.c.l.b16 %v380
        %v1760 = vunpack.c.h.b16 %v380
        %v1761 = vunpack.c.l.b16 %v381
        %v1762 = vunpack.c.h.b16 %v381
        %v1763 = vunpack.c.l.b16 %v382
        %v1764 = vunpack.c.h.b16 %v382
        %v1765 = vunpack.c.l.b16 %v383
        %v1766 = vunpack.c.h.b16 %v383
        %v1767 = vunpack.c.l.b16 %v384
        %v1768 = vunpack.c.h.b16 %v384
        %v1769 = vunpack.c.l.b16 %v385
        %v1770 = vunpack.c.h.b16 %v385
        %v1771 = vunpack.c.l.b16 %v386
        %v1772 = vunpack.c.h.b16 %v386
        %v1773 = vunpack.c.l.b16 %v387
        %v1774 = vunpack.c.h.b16 %v387
        %v1775 = vunpack.c.l.b16 %v388
        %v1776 = vunpack.c.h.b16 %v388
        %v1777 = vunpack.c.l.b16 %v389
        %v1778 = vunpack.c.h.b16 %v389
        %v1779 = vunpack.c.l.b16 %v390
        %v1780 = vunpack.c.h.b16 %v390
        %v1781 = vunpack.c.l.b16 %v391
        %v1782 = vunpack.c.h.b16 %v391
        %v1783 = vunpack.c.l.b16 %v392
        %v1784 = vunpack.c.h.b16 %v392
        %v1785 = vunpack.c.l.b16 %v393
        %v1786 = vunpack.c.h.b16 %v393
        %v1787 = vunpack.c.l.b16 %v394
        %v1788 = vunpack.c.h.b16 %v394
        %v1789 = vunpack.c.l.b16 %v395
        %v1790 = vunpack.c.h.b16 %v395
        %v1791 = vunpack.c.l.b16 %v396
        %v1792 = vunpack.c.h.b16 %v396
        %v1793 = vunpack.c.l.b16 %v397
        %v1794 = vunpack.c.h.b16 %v397
        %v1795 = vunpack.c.l.b16 %v398
        %v1796 = vunpack.c.h.b16 %v398
        %v1797 = vunpack.c.l.b16 %v399
        %v1798 = vunpack.c.h.b16 %v399
        %v1799 = vunpack.c.l.b16 %v400
        %v1800 = vunpack.c.h.b16 %v400
        %v1801 = vunpack.c.l.b16 %v401
        %v1802 = vunpack.c.h.b16 %v401
        %v1803 = vunpack.c.l.b16 %v402
        %v1804 = vunpack.c.h.b16 %v402
        %v1805 = vunpack.c.l.b16 %v403
        %v1806 = vunpack.c.h.b16 %v403
        %v1807 = vunpack.c.l.b16 %v404
        %v1808 = vunpack.c.h.b16 %v404
        %v1809 = vunpack.c.l.b16 %v405
        %v1810 = vunpack.c.h.b16 %v405
        %v1811 = vunpack.c.l.b16 %v406
        %v1812 = vunpack.c.h.b16 %v406
        %v1813 = vunpack.c.l.b16 %v407
        %v1814 = vunpack.c.h.b16 %v407
        %v1815 = vunpack.c.l.b16 %v408
        %v1816 = vunpack.c.h.b16 %v408
        %v1817 = vunpack.c.l.b16 %v409
        %v1818 = vunpack.c.h.b16 %v409
        %v1819 = vunpack.c.l.b16 %v410
        %v1820 = vunpack.c.h.b16 %v410
        %v1821 = vunpack.c.l.b16 %v411
        %v1822 = vunpack.c.h.b16 %v411
        %v1823 = vunpack.c.l.b16 %v412
        %v1824 = vunpack.c.h.b16 %v412
        %v1825 = vunpack.c.l.b16 %v413
        %v1826 = vunpack.c.h.b16 %v413
        %v1827 = vunpack.c.l.b16 %v414
        %v1828 = vunpack.c.h.b16 %v414
        %v1829 = vunpack.c.l.b16 %v415
        %v1830 = vunpack.c.h.b16 %v415
        %v1831 = vunpack.c.l.b16 %v416
        %v1832 = vunpack.c.h.b16 %v416
        %v1833 = vunpack.c.l.b16 %v417
        %v1834 = vunpack.c.h.b16 %v417
        %v1835 = vunpack.c.l.b16 %v418
        %v1836 = vunpack.c.h.b16 %v418
        %v1837 = vunpack.c.l.b16 %v419
        %v1838 = vunpack.c.h.b16 %v419
        %v1839 = vunpack.c.l.b16 %v420
        %v1840 = vunpack.c.h.b16 %v420
        %v1841 = vunpack.c.l.b16 %v421
        %v1842 = vunpack.c.h.b16 %v421
        %v1843 = vunpack.c.l.b16 %v422
        %v1844 = vunpack.c.h.b16 %v422
        %v1845 = vunpack.c.l.b16 %v423
        %v1846 = vunpack.c.h.b16 %v423
        %v1847 = vunpack.c.l.b16 %v424
        %v1848 = vunpack.c.h.b16 %v424
        %v1849 = vunpack.c.l.b16 %v425
        %v1850 = vunpack.c.h.b16 %v425
        %v1851 = vunpack.c.l.b16 %v426
        %v1852 = vunpack.c.h.b16 %v426
        %v1853 = vunpack.c.l.b16 %v427
        %v1854 = vunpack.c.h.b16 %v427
        %v1855 = vunpack.c.l.b16 %v428
        %v1856 = vunpack.c.h.b16 %v428
        %v1857 = vunpack.c.l.b16 %v429
        %v1858 = vunpack.c.h.b16 %v429
        %v1859 = vunpack.c.l.b16 %v430
        %v1860 = vunpack.c.h.b16 %v430
        %v1861 = vunpack.c.l.b16 %v431
        %v1862 = vunpack.c.h.b16 %v431
        %v1863 = vunpack.c.l.b16 %v432
        %v1864 = vunpack.c.h.b16 %v432
        %v1865 = vunpack.c.l.b16 %v433
        %v1866 = vunpack.c.h.b16 %v433
        %v1867 = vunpack.c.l.b16 %v434
        %v1868 = vunpack.c.h.b16 %v434
        %v1869 = vunpack.c.l.b16 %v435
        %v1870 = vunpack.c.h.b16 %v435
        %v1871 = vunpack.c.l.b16 %v436
        %v1872 = vunpack.c.h.b16 %v436
        %v1873 = vunpack.c.l.b16 %v437
        %v1874 = vunpack.c.h.b16 %v437
        %v1875 = vunpack.c.l.b16 %v438
        %v1876 = vunpack.c.h.b16 %v438
        %v1877 = vunpack.c.l.b16 %v439
        %v1878 = vunpack.c.h.b16 %v439
        %v1879 = vunpack.c.l.b16 %v440
        %v1880 = vunpack.c.h.b16 %v440
        %v1881 = vunpack.c.l.b16 %v441
        %v1882 = vunpack.c.h.b16 %v441
        %v1883 = vunpack.c.l.b16 %v442
        %v1884 = vunpack.c.h.b16 %v442
        %v1885 = vunpack.c.l.b16 %v443
        %v1886 = vunpack.c.h.b16 %v443
        %v1887 = vunpack.c.l.b16 %v444
        %v1888 = vunpack.c.h.b16 %v444
        %v1889 = vunpack.c.l.b16 %v445
        %v1890 = vunpack.c.h.b16 %v445
        %v1891 = vunpack.c.l.b16 %v446
        %v1892 = vunpack.c.h.b16 %v446
        %v1893 = vunpack.c.l.b16 %v447
        %v1894 = vunpack.c.h.b16 %v447
        %v1895 = vunpack.c.l.b16 %v448
        %v1896 = vunpack.c.h.b16 %v448
        %v1897 = vunpack.c.l.b16 %v449
        %v1898 = vunpack.c.h.b16 %v449
        %v1899 = vunpack.c.l.b16 %v450
        %v1900 = vunpack.c.h.b16 %v450
        %v1901 = vunpack.c.l.b16 %v451
        %v1902 = vunpack.c.h.b16 %v451
        %v1903 = vunpack.c.l.b16 %v452
        %v1904 = vunpack.c.h.b16 %v452
        %v1905 = vunpack.c.l.b16 %v453
        %v1906 = vunpack.c.h.b16 %v453
        %v1907 = vunpack.c.l.b16 %v454
        %v1908 = vunpack.c.h.b16 %v454
        %v1909 = vunpack.c.l.b16 %v455
        %v1910 = vunpack.c.h.b16 %v455
        %v1911 = vunpack.c.l.b16 %v456
        %v1912 = vunpack.c.h.b16 %v456
        %v1913 = vunpack.c.l.b16 %v457
        %v1914 = vunpack.c.h.b16 %v457
        %v1915 = vunpack.c.l.b16 %v458
        %v1916 = vunpack.c.h.b16 %v458
        %v1917 = vunpack.c.l.b16 %v459
        %v1918 = vunpack.c.h.b16 %v459
        %v1919 = vunpack.c.l.b16 %v460
        %v1920 = vunpack.c.h.b16 %v460
        %v1921 = vunpack.c.l.b16 %v461
        %v1922 = vunpack.c.h.b16 %v461
        %v1923 = vunpack.c.l.b16 %v462
        %v1924 = vunpack.c.h.b16 %v462
        %v1925 = vunpack.c.l.b16 %v463
        %v1926 = vunpack.c.h.b16 %v463
        %v1927 = vunpack.c.l.b16 %v464
        %v1928 = vunpack.c.h.b16 %v464
        %v1929 = vunpack.c.l.b16 %v465
        %v1930 = vunpack.c.h.b16 %v465
        %v1931 = vunpack.c.l.b16 %v466
        %v1932 = vunpack.c.h.b16 %v466
        %v1933 = vunpack.c.l.b16 %v467
        %v1934 = vunpack.c.h.b16 %v467
        %v1935 = vunpack.c.l.b16 %v468
        %v1936 = vunpack.c.h.b16 %v468
        %v1937 = vunpack.c.l.b16 %v469
        %v1938 = vunpack.c.h.b16 %v469
        %v1939 = vunpack.c.l.b16 %v470
        %v1940 = vunpack.c.h.b16 %v470
        %v1941 = vunpack.c.l.b16 %v471
        %v1942 = vunpack.c.h.b16 %v471
        %v1943 = vunpack.c.l.b16 %v472
        %v1944 = vunpack.c.h.b16 %v472
        %v1945 = vunpack.c.l.b16 %v473
        %v1946 = vunpack.c.h.b16 %v473
        %v1947 = vunpack.c.l.b16 %v474
        %v1948 = vunpack.c.h.b16 %v474
        %v1949 = vunpack.c.l.b16 %v475
        %v1950 = vunpack.c.h.b16 %v475
        %v1951 = vunpack.c.l.b16 %v476
        %v1952 = vunpack.c.h.b16 %v476
        %v1953 = vunpack.c.l.b16 %v477
        %v1954 = vunpack.c.h.b16 %v477
        %v1955 = vunpack.c.l.b16 %v478
        %v1956 = vunpack.c.h.b16 %v478
        %v1957 = vunpack.c.l.b16 %v479
        %v1958 = vunpack.c.h.b16 %v479
        %v1959 = vunpack.c.l.b16 %v480
        %v1960 = vunpack.c.h.b16 %v480
        %v1961 = vunpack.c.l.b16 %v481
        %v1962 = vunpack.c.h.b16 %v481
        %v1963 = vunpack.c.l.b16 %v482
        %v1964 = vunpack.c.h.b16 %v482
        %v1965 = vunpack.c.l.b16 %v483
        %v1966 = vunpack.c.h.b16 %v483
        %v1967 = vunpack.c.l.b16 %v484
        %v1968 = vunpack.c.h.b16 %v484
        %v1969 = vunpack.c.l.b16 %v485
        %v1970 = vunpack.c.h.b16 %v485
        %v1971 = vunpack.c.l.b16 %v486
        %v1972 = vunpack.c.h.b16 %v486
        %v1973 = vunpack.c.l.b16 %v487
        %v1974 = vunpack.c.h.b16 %v487
        %v1975 = vunpack.c.l.b16 %v488
        %v1976 = vunpack.c.h.b16 %v488
        %v1977 = vunpack.c.l.b16 %v489
        %v1978 = vunpack.c.h.b16 %v489
        %v1979 = vunpack.c.l.b16 %v490
        %v1980 = vunpack.c.h.b16 %v490
        %v1981 = vunpack.c.l.b16 %v491
        %v1982 = vunpack.c.h.b16 %v491
        %v1983 = vunpack.c.l.b16 %v492
        %v1984 = vunpack.c.h.b16 %v492
        %v1985 = vunpack.c.l.b16 %v493
        %v1986 = vunpack.c.h.b16 %v493
        %v1987 = vunpack.c.l.b16 %v494
        %v1988 = vunpack.c.h.b16 %v494
        %v1989 = vunpack.c.l.b16 %v495
        %v1990 = vunpack.c.h.b16 %v495
        %v1991 = vunpack.c.l.b16 %v496
        %v1992 = vunpack.c.h.b16 %v496
        %v1993 = vunpack.c.l.b16 %v497
        %v1994 = vunpack.c.h.b16 %v497
        %v1995 = vunpack.c.l.b16 %v498
        %v1996 = vunpack.c.h.b16 %v498
        %v1997 = vunpack.c.l.b16 %v499
        %v1998 = vunpack.c.h.b16 %v499
        %v1999 = vunpack.c.l.b16 %v500
        %v2000 = vunpack.c.h.b16 %v500
        %v2001 = vunpack.c.l.b16 %v501
        %v2002 = vunpack.c.h.b16 %v501
        %v2003 = vunpack.c.l.b16 %v502
        %v2004 = vunpack.c.h.b16 %v502
        %v2005 = vunpack.c.l.b16 %v503
        %v2006 = vunpack.c.h.b16 %v503
        %v2007 = vunpack.c.l.b16 %v504
        %v2008 = vunpack.c.h.b16 %v504
        %v2009 = vunpack.c.l.b16 %v505
        %v2010 = vunpack.c.h.b16 %v505
        %v2011 = vunpack.c.l.b16 %v506
        %v2012 = vunpack.c.h.b16 %v506
        %v2013 = vunpack.c.l.b16 %v507
        %v2014 = vunpack.c.h.b16 %v507
        %v2015 = vunpack.c.l.b16 %v508
        %v2016 = vunpack.c.h.b16 %v508
        %v2017 = vunpack.c.l.b16 %v509
        %v2018 = vunpack.c.h.b16 %v509
        %v2019 = vunpack.c.l.b16 %v510
        %v2020 = vunpack.c.h.b16 %v510
        %v2021 = vunpack.c.l.b16 %v511
        %v2022 = vunpack.c.h.b16 %v511
        %v2023 = vunpack.c.l.b16 %v512
        %v2024 = vunpack.c.h.b16 %v512
        %v2025 = vunpack.c.l.b16 %v513
        %v2026 = vunpack.c.h.b16 %v513
        %v2027 = vunpack.c.l.b16 %v514
        %v2028 = vunpack.c.h.b16 %v514
        %v2029 = vunpack.c.l.b16 %v515
        %v2030 = vunpack.c.h.b16 %v515
        %v2031 = vunpack.c.l.b16 %v516
        %v2032 = vunpack.c.h.b16 %v516
        %v2033 = vunpack.c.l.b16 %v517
        %v2034 = vunpack.c.h.b16 %v517
        %v2035 = vunpack.c.l.b16 %v518
        %v2036 = vunpack.c.h.b16 %v518
        %v2037 = vunpack.c.l.b16 %v519
        %v2038 = vunpack.c.h.b16 %v519
        %v2039 = vunpack.c.l.b16 %v520
        %v2040 = vunpack.c.h.b16 %v520
        %v2041 = vunpack.c.l.b16 %v521
        %v2042 = vunpack.c.h.b16 %v521
        %v2043 = vunpack.c.l.b16 %v522
        %v2044 = vunpack.c.h.b16 %v522
        %v2045 = vunpack.c.l.b16 %v523
        %v2046 = vunpack.c.h.b16 %v523
        %v2047 = vunpack.c.l.b16 %v524
        %v2048 = vunpack.c.h.b16 %v524
        %v2049 = vunpack.c.l.b16 %v525
        %v2050 = vunpack.c.h.b16 %v525
        %v2051 = vunpack.c.l.b16 %v526
        %v2052 = vunpack.c.h.b16 %v526
        %v2053 = vunpack.c.l.b16 %v527
        %v2054 = vunpack.c.h.b16 %v527
        %v2055 = vunpack.c.l.b16 %v528
        %v2056 = vunpack.c.h.b16 %v528
        %v2057 = vunpack.c.l.b16 %v529
        %v2058 = vunpack.c.h.b16 %v529
        %v2059 = vunpack.c.l.b16 %v530
        %v2060 = vunpack.c.h.b16 %v530
        %v2061 = vunpack.c.l.b16 %v531
        %v2062 = vunpack.c.h.b16 %v531
        %v2063 = vunpack.c.l.b16 %v532
        %v2064 = vunpack.c.h.b16 %v532
        %v2065 = vunpack.c.l.b16 %v533
        %v2066 = vunpack.c.h.b16 %v533
        %v2067 = vunpack.c.l.b16 %v534
        %v2068 = vunpack.c.h.b16 %v534
        %v2069 = vunpack.c.l.b16 %v535
        %v2070 = vunpack.c.h.b16 %v535
        %v2071 = vunpack.c.l.b16 %v536
        %v2072 = vunpack.c.h.b16 %v536
        %v2073 = vunpack.c.l.b16 %v537
        %v2074 = vunpack.c.h.b16 %v537
        %v2075 = vunpack.c.l.b16 %v538
        %v2076 = vunpack.c.h.b16 %v538
        %v2077 = vunpack.c.l.b16 %v539
        %v2078 = vunpack.c.h.b16 %v539
        %v2079 = vunpack.c.l.b16 %v540
        %v2080 = vunpack.c.h.b16 %v540
        %v2081 = vunpack.c.l.b16 %v541
        %v2082 = vunpack.c.h.b16 %v541
        %v2083 = vunpack.c.l.b16 %v542
        %v2084 = vunpack.c.h.b16 %v542
        %v2085 = vunpack.c.l.b16 %v543
        %v2086 = vunpack.c.h.b16 %v543
        %v2087 = vunpack.c.l.b16 %v544
        %v2088 = vunpack.c.h.b16 %v544
        %v2089 = vunpack.c.l.b16 %v545
        %v2090 = vunpack.c.h.b16 %v545
        %v2091 = vunpack.c.l.b16 %v546
        %v2092 = vunpack.c.h.b16 %v546
        %v2093 = vunpack.c.l.b16 %v547
        %v2094 = vunpack.c.h.b16 %v547
        %v2095 = vunpack.c.l.b16 %v548
        %v2096 = vunpack.c.h.b16 %v548
        %v2097 = vunpack.c.l.b16 %v549
        %v2098 = vunpack.c.h.b16 %v549
        %v2099 = vunpack.c.l.b16 %v550
        %v2100 = vunpack.c.h.b16 %v550
        %v2101 = vunpack.c.l.b16 %v551
        %v2102 = vunpack.c.h.b16 %v551
        %v2103 = vunpack.c.l.b16 %v552
        %v2104 = vunpack.c.h.b16 %v552
        %v2105 = vunpack.c.l.b16 %v553
        %v2106 = vunpack.c.h.b16 %v553
        %v2107 = vunpack.c.l.b16 %v554
        %v2108 = vunpack.c.h.b16 %v554
        %v2109 = vunpack.c.l.b16 %v555
        %v2110 = vunpack.c.h.b16 %v555
        %v2111 = vunpack.c.l.b16 %v556
        %v2112 = vunpack.c.h.b16 %v556
        %v2113 = vunpack.c.l.b16 %v557
        %v2114 = vunpack.c.h.b16 %v557
        %v2115 = vunpack.c.l.b16 %v558
        %v2116 = vunpack.c.h.b16 %v558
        %v2117 = vunpack.c.l.b16 %v559
        %v2118 = vunpack.c.h.b16 %v559
        %v2119 = vunpack.c.l.b16 %v560
        %v2120 = vunpack.c.h.b16 %v560
        %v2121 = vunpack.c.l.b16 %v561
        %v2122 = vunpack.c.h.b16 %v561
        %v2123 = vunpack.c.l.b16 %v562
        %v2124 = vunpack.c.h.b16 %v562
        %v2125 = vunpack.c.l.b16 %v563
        %v2126 = vunpack.c.h.b16 %v563
        %v2127 = vunpack.c.l.b16 %v564
        %v2128 = vunpack.c.h.b16 %v564
        %v2129 = vunpack.c.l.b16 %v565
        %v2130 = vunpack.c.h.b16 %v565
        %v2131 = vunpack.c.l.b16 %v566
        %v2132 = vunpack.c.h.b16 %v566
        %v2133 = vunpack.c.l.b16 %v567
        %v2134 = vunpack.c.h.b16 %v567
        %v2135 = vunpack.c.l.b16 %v568
        %v2136 = vunpack.c.h.b16 %v568
        %v2137 = vunpack.c.l.b16 %v569
        %v2138 = vunpack.c.h.b16 %v569
        %v2139 = vunpack.c.l.b16 %v570
        %v2140 = vunpack.c.h.b16 %v570
        %v2141 = vunpack.c.l.b16 %v571
        %v2142 = vunpack.c.h.b16 %v571
        %v2143 = vunpack.c.l.b16 %v572
        %v2144 = vunpack.c.h.b16 %v572
        %v2145 = vunpack.c.l.b16 %v573
        %v2146 = vunpack.c.h.b16 %v573
        %v2147 = vunpack.c.l.b16 %v574
        %v2148 = vunpack.c.h.b16 %v574
        %v2149 = vunpack.c.l.b16 %v575
        %v2150 = vunpack.c.h.b16 %v575
        %v2151 = vunpack.c.l.b16 %v576
        %v2152 = vunpack.c.h.b16 %v576
        %v2153 = vunpack.c.l.b16 %v577
        %v2154 = vunpack.c.h.b16 %v577
        %v2155 = vunpack.c.l.b16 %v578
        %v2156 = vunpack.c.h.b16 %v578
        %v2157 = vunpack.c.l.b16 %v579
        %v2158 = vunpack.c.h.b16 %v579
        %v2159 = vunpack.c.l.b16 %v580
        %v2160 = vunpack.c.h.b16 %v580
        %v2161 = vunpack.c.l.b16 %v581
        %v2162 = vunpack.c.h.b16 %v581
        %v2163 = vunpack.c.l.b16 %v582
        %v2164 = vunpack.c.h.b16 %v582
        %v2165 = vunpack.c.l.b16 %v583
        %v2166 = vunpack.c.h.b16 %v583
        %v2167 = vunpack.c.l.b16 %v584
        %v2168 = vunpack.c.h.b16 %v584
        %v2169 = vunpack.c.l.b16 %v585
        %v2170 = vunpack.c.h.b16 %v585
        %v2171 = vunpack.c.l.b16 %v586
        %v2172 = vunpack.c.h.b16 %v586
        %v2173 = vunpack.c.l.b16 %v587
        %v2174 = vunpack.c.h.b16 %v587
        %v2175 = vunpack.c.l.b16 %v588
        %v2176 = vunpack.c.h.b16 %v588
        %v2177 = vunpack.c.l.b16 %v589
        %v2178 = vunpack.c.h.b16 %v589
        %v2179 = vunpack.c.l.b16 %v590
        %v2180 = vunpack.c.h.b16 %v590
        %v2181 = vunpack.c.l.b16 %v591
        %v2182 = vunpack.c.h.b16 %v591
        %v2183 = vunpack.c.l.b16 %v592
        %v2184 = vunpack.c.h.b16 %v592
        %v2185 = vunpack.c.l.b16 %v593
        %v2186 = vunpack.c.h.b16 %v593
        %v2187 = vunpack.c.l.b16 %v594
        %v2188 = vunpack.c.h.b16 %v594
        %v2189 = vunpack.c.l.b16 %v595
        %v2190 = vunpack.c.h.b16 %v595
        %v2191 = vunpack.c.l.b16 %v596
        %v2192 = vunpack.c.h.b16 %v596
        %v2193 = vunpack.c.l.b16 %v597
        %v2194 = vunpack.c.h.b16 %v597
        %v2195 = vunpack.c.l.b16 %v598
        %v2196 = vunpack.c.h.b16 %v598
        %v2197 = vunpack.c.l.b16 %v599
        %v2198 = vunpack.c.h.b16 %v599
        %v2199 = vunpack.c.l.b16 %v600
        %v2200 = vunpack.c.h.b16 %v600
        %v2201 = vunpack.c.l.b16 %v601
        %v2202 = vunpack.c.h.b16 %v601
        %v2203 = vunpack.c.l.b16 %v602
        %v2204 = vunpack.c.h.b16 %v602
        %v2205 = vunpack.c.l.b16 %v603
        %v2206 = vunpack.c.h.b16 %v603
        %v2207 = vunpack.c.l.b16 %v604
        %v2208 = vunpack.c.h.b16 %v604
        %v2209 = vunpack.c.l.b16 %v605
        %v2210 = vunpack.c.h.b16 %v605
        %v2211 = vunpack.c.l.b16 %v606
        %v2212 = vunpack.c.h.b16 %v606
        %v2213 = vunpack.c.l.b16 %v607
        %v2214 = vunpack.c.h.b16 %v607
        %v2215 = vunpack.c.l.b16 %v608
        %v2216 = vunpack.c.h.b16 %v608
        %v2217 = vunpack.c.l.b16 %v609
        %v2218 = vunpack.c.h.b16 %v609
        %v2219 = vunpack.c.l.b16 %v610
        %v2220 = vunpack.c.h.b16 %v610
        %v2221 = vunpack.c.l.b16 %v611
        %v2222 = vunpack.c.h.b16 %v611
        %v2223 = vunpack.c.l.b16 %v612
        %v2224 = vunpack.c.h.b16 %v612
        %v2225 = vunpack.c.l.b16 %v613
        %v2226 = vunpack.c.h.b16 %v613
        %v2227 = vunpack.c.l.b16 %v614
        %v2228 = vunpack.c.h.b16 %v614
        %v2229 = vunpack.c.l.b16 %v615
        %v2230 = vunpack.c.h.b16 %v615
        %v2231 = vunpack.c.l.b16 %v616
        %v2232 = vunpack.c.h.b16 %v616
        %v2233 = vunpack.c.l.b16 %v617
        %v2234 = vunpack.c.h.b16 %v617
        %v2235 = vunpack.c.l.b16 %v618
        %v2236 = vunpack.c.h.b16 %v618
        %v2237 = vunpack.c.l.b16 %v619
        %v2238 = vunpack.c.h.b16 %v619
        %v2239 = vunpack.c.l.b16 %v620
        %v2240 = vunpack.c.h.b16 %v620
        %v2241 = vunpack.c.l.b16 %v621
        %v2242 = vunpack.c.h.b16 %v621
        %v2243 = vunpack.c.l.b16 %v622
        %v2244 = vunpack.c.h.b16 %v622
        %v2245 = vunpack.c.l.b16 %v623
        %v2246 = vunpack.c.h.b16 %v623
        %v2247 = vunpack.c.l.b16 %v624
        %v2248 = vunpack.c.h.b16 %v624
        %v2249 = vunpack.c.l.b16 %v625
        %v2250 = vunpack.c.h.b16 %v625
        %v2251 = vunpack.c.l.b16 %v626
        %v2252 = vunpack.c.h.b16 %v626
        %v2253 = vunpack.c.l.b16 %v627
        %v2254 = vunpack.c.h.b16 %v627
        %v2255 = vunpack.c.l.b16 %v628
        %v2256 = vunpack.c.h.b16 %v628
        %v2257 = vunpack.c.l.b16 %v629
        %v2258 = vunpack.c.h.b16 %v629
        %v2259 = vunpack.c.l.b16 %v630
        %v2260 = vunpack.c.h.b16 %v630
        %v2261 = vunpack.c.l.b16 %v631
        %v2262 = vunpack.c.h.b16 %v631
        %v2263 = vunpack.c.l.b16 %v632
        %v2264 = vunpack.c.h.b16 %v632
        %v2265 = vunpack.c.l.b16 %v633
        %v2266 = vunpack.c.h.b16 %v633
        %v2267 = vunpack.c.l.b16 %v634
        %v2268 = vunpack.c.h.b16 %v634
        %v2269 = vunpack.c.l.b16 %v635
        %v2270 = vunpack.c.h.b16 %v635
        %v2271 = vunpack.c.l.b16 %v636
        %v2272 = vunpack.c.h.b16 %v636
        %v2273 = vunpack.c.l.b16 %v637
        %v2274 = vunpack.c.h.b16 %v637
        %v2275 = vunpack.c.l.b16 %v638
        %v2276 = vunpack.c.h.b16 %v638
        %v2277 = vunpack.c.l.b16 %v639
        %v2278 = vunpack.c.h.b16 %v639
        %v2279 = vunpack.c.l.b16 %v640
        %v2280 = vunpack.c.h.b16 %v640
        %v2281 = vunpack.c.l.b16 %v641
        %v2282 = vunpack.c.h.b16 %v641
        %v2283 = vunpack.c.l.b16 %v642
        %v2284 = vunpack.c.h.b16 %v642
        %v2285 = vunpack.c.l.b16 %v643
        %v2286 = vunpack.c.h.b16 %v643
        %v2287 = vunpack.c.l.b16 %v644
        %v2288 = vunpack.c.h.b16 %v644
        %v2289 = vunpack.c.l.b16 %v645
        %v2290 = vunpack.c.h.b16 %v645
        %v2291 = vunpack.c.l.b16 %v646
        %v2292 = vunpack.c.h.b16 %v646
        %v2293 = vunpack.c.l.b16 %v647
        %v2294 = vunpack.c.h.b16 %v647
        %v2295 = vunpack.c.l.b16 %v648
        %v2296 = vunpack.c.h.b16 %v648
        %v2297 = vunpack.c.l.b16 %v649
        %v2298 = vunpack.c.h.b16 %v649
        %v2299 = vunpack.c.l.b16 %v650
        %v2300 = vunpack.c.h.b16 %v650
        %v2301 = vunpack.c.l.b16 %v651
        %v2302 = vunpack.c.h.b16 %v651
        %v2303 = vunpack.c.l.b16 %v652
        %v2304 = vunpack.c.h.b16 %v652
        %v2305 = vunpack.c.l.b16 %v653
        %v2306 = vunpack.c.h.b16 %v653
        %v2307 = vunpack.c.l.b16 %v654
        %v2308 = vunpack.c.h.b16 %v654
        %v2309 = vunpack.c.l.b16 %v655
        %v2310 = vunpack.c.h.b16 %v655
        %v2311 = vunpack.c.l.b16 %v656
        %v2312 = vunpack.c.h.b16 %v656
        %v2313 = vunpack.c.l.b16 %v657
        %v2314 = vunpack.c.h.b16 %v657
        %v2315 = vunpack.c.l.b16 %v658
        %v2316 = vunpack.c.h.b16 %v658
        %v2317 = vunpack.c.l.b16 %v659
        %v2318 = vunpack.c.h.b16 %v659
        %v2319 = vunpack.c.l.b16 %v660
        %v2320 = vunpack.c.h.b16 %v660
        %v2321 = vunpack.c.l.b16 %v661
        %v2322 = vunpack.c.h.b16 %v661
        %v2323 = vunpack.c.l.b16 %v662
        %v2324 = vunpack.c.h.b16 %v662
        %v2325 = vunpack.c.l.b16 %v663
        %v2326 = vunpack.c.h.b16 %v663
        %v2327 = vunpack.c.l.b16 %v664
        %v2328 = vunpack.c.h.b16 %v664
        %v2329 = vunpack.c.l.b16 %v665
        %v2330 = vunpack.c.h.b16 %v665
        %v2331 = vunpack.c.l.b16 %v666
        %v2332 = vunpack.c.h.b16 %v666
        %v2333 = vunpack.c.l.b16 %v667
        %v2334 = vunpack.c.h.b16 %v667
        %v2335 = vunpack.c.l.b16 %v668
        %v2336 = vunpack.c.h.b16 %v668
        %v2337 = vunpack.c.l.b16 %v669
        %v2338 = vunpack.c.h.b16 %v669
        %v2339 = vunpack.c.l.b16 %v670
        %v2340 = vunpack.c.h.b16 %v670
        %v2341 = vunpack.c.l.b16 %v671
        %v2342 = vunpack.c.h.b16 %v671
        %v2343 = vunpack.c.l.b16 %v672
        %v2344 = vunpack.c.h.b16 %v672
        %v2345 = vunpack.c.l.b16 %v673
        %v2346 = vunpack.c.h.b16 %v673
        %v2347 = vunpack.c.l.b16 %v674
        %v2348 = vunpack.c.h.b16 %v674
        %v2349 = vunpack.c.l.b16 %v675
        %v2350 = vunpack.c.h.b16 %v675
        %v2351 = vunpack.c.l.b16 %v676
        %v2352 = vunpack.c.h.b16 %v676
        %v2353 = vunpack.c.l.b16 %v677
        %v2354 = vunpack.c.h.b16 %v677
        %v2355 = vunpack.c.l.b16 %v678
        %v2356 = vunpack.c.h.b16 %v678
        %v2357 = vunpack.c.l.b16 %v679
        %v2358 = vunpack.c.h.b16 %v679
        %v2359 = vunpack.c.l.b16 %v680
        %v2360 = vunpack.c.h.b16 %v680
        %v2361 = vunpack.c.l.b16 %v681
        %v2362 = vunpack.c.h.b16 %v681
        %v2363 = vunpack.c.l.b16 %v682
        %v2364 = vunpack.c.h.b16 %v682
        %v2365 = vunpack.c.l.b16 %v683
        %v2366 = vunpack.c.h.b16 %v683
        %v2367 = vunpack.c.l.b16 %v684
        %v2368 = vunpack.c.h.b16 %v684
        %v2369 = vunpack.c.l.b16 %v685
        %v2370 = vunpack.c.h.b16 %v685
        %v2371 = vunpack.c.l.b16 %v686
        %v2372 = vunpack.c.h.b16 %v686
        %v2373 = vunpack.c.l.b16 %v687
        %v2374 = vunpack.c.h.b16 %v687
        %v2375 = vunpack.c.l.b16 %v688
        %v2376 = vunpack.c.h.b16 %v688
        %v2377 = vunpack.c.l.b16 %v689
        %v2378 = vunpack.c.h.b16 %v689
        %v2379 = vunpack.c.l.b16 %v690
        %v2380 = vunpack.c.h.b16 %v690
        %v2381 = vunpack.c.l.b16 %v691
        %v2382 = vunpack.c.h.b16 %v691
        %v2383 = vunpack.c.l.b16 %v692
        %v2384 = vunpack.c.h.b16 %v692
        %v2385 = vunpack.c.l.b16 %v693
        %v2386 = vunpack.c.h.b16 %v693
        %v2387 = vunpack.c.l.b16 %v694
        %v2388 = vunpack.c.h.b16 %v694
        %v2389 = vunpack.c.l.b16 %v695
        %v2390 = vunpack.c.h.b16 %v695
        %v2391 = vunpack.c.l.b16 %v696
        %v2392 = vunpack.c.h.b16 %v696
        %v2393 = vunpack.c.l.b16 %v697
        %v2394 = vunpack.c.h.b16 %v697
        %v2395 = vunpack.c.l.b16 %v698
        %v2396 = vunpack.c.h.b16 %v698
        %v2397 = vunpack.c.l.b16 %v699
        %v2398 = vunpack.c.h.b16 %v699
        %v2399 = vunpack.c.l.b16 %v700
        %v2400 = vunpack.c.h.b16 %v700
        %v2401 = vunpack.c.l.b16 %v701
        %v2402 = vunpack.c.h.b16 %v701
        %v2403 = vunpack.c.l.b16 %v702
        %v2404 = vunpack.c.h.b16 %v702
        %v2405 = vunpack.c.l.b16 %v703
        %v2406 = vunpack.c.h.b16 %v703
        %v2407 = vunpack.c.l.b16 %v704
        %v2408 = vunpack.c.h.b16 %v704
        %v2409 = vunpack.c.l.b16 %v705
        %v2410 = vunpack.c.h.b16 %v705
        %v2411 = vunpack.c.l.b16 %v706
        %v2412 = vunpack.c.h.b16 %v706
        %v2413 = vunpack.c.l.b16 %v707
        %v2414 = vunpack.c.h.b16 %v707
        %v2415 = vunpack.c.l.b16 %v708
        %v2416 = vunpack.c.h.b16 %v708
        %v2417 = vunpack.c.l.b16 %v709
        %v2418 = vunpack.c.h.b16 %v709
        %v2419 = vunpack.c.l.b16 %v710
        %v2420 = vunpack.c.h.b16 %v710
        %v2421 = vunpack.c.l.b16 %v711
        %v2422 = vunpack.c.h.b16 %v711
        %v2423 = vunpack.c.l.b16 %v712
        %v2424 = vunpack.c.h.b16 %v712
        %v2425 = vunpack.c.l.b16 %v713
        %v2426 = vunpack.c.h.b16 %v713
        %v2427 = vunpack.c.l.b16 %v714
        %v2428 = vunpack.c.h.b16 %v714
        %v2429 = vunpack.c.l.b16 %v715
        %v2430 = vunpack.c.h.b16 %v715
        %v2431 = vunpack.c.l.b16 %v716
        %v2432 = vunpack.c.h.b16 %v716
        %v2433 = vunpack.c.l.b16 %v717
        %v2434 = vunpack.c.h.b16 %v717
        %v2435 = vunpack.c.l.b16 %v718
        %v2436 = vunpack.c.h.b16 %v718
        %v2437 = vunpack.c.l.b16 %v719
        %v2438 = vunpack.c.h.b16 %v719
        %v2439 = vunpack.c.l.b16 %v720
        %v2440 = vunpack.c.h.b16 %v720
        %v2441 = vunpack.c.l.b16 %v721
        %v2442 = vunpack.c.h.b16 %v721
        %v2443 = vunpack.c.l.b16 %v722
        %v2444 = vunpack.c.h.b16 %v722
        %v2445 = vunpack.c.l.b16 %v723
        %v2446 = vunpack.c.h.b16 %v723
        %v2447 = vunpack.c.l.b16 %v724
        %v2448 = vunpack.c.h.b16 %v724
        %v2449 = vunpack.c.l.b16 %v725
        %v2450 = vunpack.c.h.b16 %v725
        %v2451 = vunpack.c.l.b16 %v726
        %v2452 = vunpack.c.h.b16 %v726
        %v2453 = vunpack.c.l.b16 %v727
        %v2454 = vunpack.c.h.b16 %v727
        %v2455 = vunpack.c.l.b16 %v728
        %v2456 = vunpack.c.h.b16 %v728
        %v2457 = vunpack.c.l.b16 %v729
        %v2458 = vunpack.c.h.b16 %v729
        %v2459 = vunpack.c.l.b16 %v730
        %v2460 = vunpack.c.h.b16 %v730
        %v2461 = vunpack.c.l.b16 %v731
        %v2462 = vunpack.c.h.b16 %v731
        %v2463 = vunpack.c.l.b16 %v732
        %v2464 = vunpack.c.h.b16 %v732
        %v2465 = vunpack.c.l.b16 %v733
        %v2466 = vunpack.c.h.b16 %v733
        %v2467 = vunpack.c.l.b16 %v734
        %v2468 = vunpack.c.h.b16 %v734
        %v2469 = vunpack.c.l.b16 %v735
        %v2470 = vunpack.c.h.b16 %v735
        %v2471 = vunpack.c.l.b16 %v736
        %v2472 = vunpack.c.h.b16 %v736
        %v2473 = vunpack.c.l.b16 %v737
        %v2474 = vunpack.c.h.b16 %v737
        %v2475 = vunpack.c.l.b16 %v738
        %v2476 = vunpack.c.h.b16 %v738
        %v2477 = vunpack.c.l.b16 %v739
        %v2478 = vunpack.c.h.b16 %v739
        %v2479 = vunpack.c.l.b16 %v740
        %v2480 = vunpack.c.h.b16 %v740
        %v2481 = vunpack.c.l.b16 %v741
        %v2482 = vunpack.c.h.b16 %v741
        %v2483 = vunpack.c.l.b16 %v742
        %v2484 = vunpack.c.h.b16 %v742
        %v2485 = vunpack.c.l.b16 %v743
        %v2486 = vunpack.c.h.b16 %v743
        %v2487 = vunpack.c.l.b16 %v744
        %v2488 = vunpack.c.h.b16 %v744
        %v2489 = vunpack.c.l.b16 %v745
        %v2490 = vunpack.c.h.b16 %v745
        %v2491 = vunpack.c.l.b16 %v746
        %v2492 = vunpack.c.h.b16 %v746
        %v2493 = vunpack.c.l.b16 %v747
        %v2494 = vunpack.c.h.b16 %v747
        %v2495 = vunpack.c.l.b16 %v748
        %v2496 = vunpack.c.h.b16 %v748
        %v2497 = vunpack.c.l.b16 %v749
        %v2498 = vunpack.c.h.b16 %v749
        %v2499 = vunpack.c.l.b16 %v750
        %v2500 = vunpack.c.h.b16 %v750
        %v2501 = vunpack.c.l.b16 %v751
        %v2502 = vunpack.c.h.b16 %v751
        %v2503 = vunpack.c.l.b16 %v752
        %v2504 = vunpack.c.h.b16 %v752
        %v2505 = vunpack.c.l.b16 %v753
        %v2506 = vunpack.c.h.b16 %v753
        %v2507 = vunpack.c.l.b16 %v754
        %v2508 = vunpack.c.h.b16 %v754
        %v2509 = vunpack.c.l.b16 %v755
        %v2510 = vunpack.c.h.b16 %v755
        %v2511 = vunpack.c.l.b16 %v756
        %v2512 = vunpack.c.h.b16 %v756
        %v2513 = vunpack.c.l.b16 %v757
        %v2514 = vunpack.c.h.b16 %v757
        %v2515 = vunpack.c.l.b16 %v758
        %v2516 = vunpack.c.h.b16 %v758
        %v2517 = vunpack.c.l.b16 %v759
        %v2518 = vunpack.c.h.b16 %v759
        %v2519 = vunpack.c.l.b16 %v760
        %v2520 = vunpack.c.h.b16 %v760
        %v2521 = vunpack.c.l.b16 %v761
        %v2522 = vunpack.c.h.b16 %v761
        %v2523 = vunpack.c.l.b16 %v762
        %v2524 = vunpack.c.h.b16 %v762
        %v2525 = vunpack.c.l.b16 %v763
        %v2526 = vunpack.c.h.b16 %v763
        %v2527 = vunpack.c.l.b16 %v764
        %v2528 = vunpack.c.h.b16 %v764
        %v2529 = vunpack.c.l.b16 %v765
        %v2530 = vunpack.c.h.b16 %v765
        %v2531 = vunpack.c.l.b16 %v766
        %v2532 = vunpack.c.h.b16 %v766
        %v2533 = vunpack.c.l.b16 %v767
        %v2534 = vunpack.c.h.b16 %v767
        %v2535 = vunpack.c.l.b16 %v768
        %v2536 = vunpack.c.h.b16 %v768
        %v2537 = vunpack.c.l.b16 %v769
        %v2538 = vunpack.c.h.b16 %v769
        %v2539 = vunpack.c.l.b16 %v770
        %v2540 = vunpack.c.h.b16 %v770
        %v2541 = vunpack.c.l.b16 %v771
        %v2542 = vunpack.c.h.b16 %v771
        %v2543 = vunpack.c.l.b16 %v772
        %v2544 = vunpack.c.h.b16 %v772
        %v2545 = vunpack.c.l.b16 %v773
        %v2546 = vunpack.c.h.b16 %v773
        %v2547 = vunpack.c.l.b16 %v774
        %v2548 = vunpack.c.h.b16 %v774
        %v2549 = vunpack.c.l.b16 %v775
        %v2550 = vunpack.c.h.b16 %v775
        %v2551 = vunpack.c.l.b16 %v776
        %v2552 = vunpack.c.h.b16 %v776
        %v2553 = vunpack.c.l.b16 %v777
        %v2554 = vunpack.c.h.b16 %v777
        %v2555 = vunpack.c.l.b16 %v778
        %v2556 = vunpack.c.h.b16 %v778
        %v2557 = vunpack.c.l.b16 %v779
        %v2558 = vunpack.c.h.b16 %v779
        %v2559 = vunpack.c.l.b16 %v780
        %v2560 = vunpack.c.h.b16 %v780
        %v2561 = vunpack.c.l.b16 %v781
        %v2562 = vunpack.c.h.b16 %v781
        %v2563 = vunpack.c.l.b16 %v782
        %v2564 = vunpack.c.h.b16 %v782
        %v2565 = vunpack.c.l.b16 %v783
        %v2566 = vunpack.c.h.b16 %v783
        %v2567 = vunpack.c.l.b16 %v784
        %v2568 = vunpack.c.h.b16 %v784
        %v2569 = vunpack.c.l.b16 %v785
        %v2570 = vunpack.c.h.b16 %v785
        %v2571 = vunpack.c.l.b16 %v786
        %v2572 = vunpack.c.h.b16 %v786
        %v2573 = vunpack.c.l.b16 %v787
        %v2574 = vunpack.c.h.b16 %v787
        %v2575 = vunpack.c.l.b16 %v788
        %v2576 = vunpack.c.h.b16 %v788
        %v2577 = vunpack.c.l.b16 %v789
        %v2578 = vunpack.c.h.b16 %v789
        %v2579 = vunpack.c.l.b16 %v790
        %v2580 = vunpack.c.h.b16 %v790
        %v2581 = vunpack.c.l.b16 %v791
        %v2582 = vunpack.c.h.b16 %v791
        %v2583 = vunpack.c.l.b16 %v792
        %v2584 = vunpack.c.h.b16 %v792
        %v2585 = vunpack.c.l.b16 %v793
        %v2586 = vunpack.c.h.b16 %v793
        %v2587 = vunpack.c.l.b16 %v794
        %v2588 = vunpack.c.h.b16 %v794
        %v2589 = vunpack.c.l.b16 %v795
        %v2590 = vunpack.c.h.b16 %v795
        %v2591 = vunpack.c.l.b16 %v796
        %v2592 = vunpack.c.h.b16 %v796
        %v2593 = vunpack.c.l.b16 %v797
        %v2594 = vunpack.c.h.b16 %v797
        %v2595 = vunpack.c.l.b16 %v798
        %v2596 = vunpack.c.h.b16 %v798
        %v2597 = vunpack.c.l.b16 %v799
        %v2598 = vunpack.c.h.b16 %v799
        %v2599 = vunpack.c.l.b16 %v800
        %v2600 = vunpack.c.h.b16 %v800
        %v2601 = vunpack.c.l.b16 %v801
        %v2602 = vunpack.c.h.b16 %v801
        %v2603 = vunpack.c.l.b16 %v802
        %v2604 = vunpack.c.h.b16 %v802
        %v2605 = vunpack.c.l.b16 %v803
        %v2606 = vunpack.c.h.b16 %v803
        %v2607 = vunpack.c.l.b16 %v804
        %v2608 = vunpack.c.h.b16 %v804
        %v2609 = vunpack.c.l.b16 %v805
        %v2610 = vunpack.c.h.b16 %v805
        %v2611 = vunpack.c.l.b16 %v806
        %v2612 = vunpack.c.h.b16 %v806
        %v2613 = vunpack.c.l.b16 %v807
        %v2614 = vunpack.c.h.b16 %v807
        %v2615 = vunpack.c.l.b16 %v808
        %v2616 = vunpack.c.h.b16 %v808
        %v2617 = vunpack.c.l.b16 %v809
        %v2618 = vunpack.c.h.b16 %v809
        %v2619 = vunpack.c.l.b16 %v810
        %v2620 = vunpack.c.h.b16 %v810
        %v2621 = vunpack.c.l.b16 %v811
        %v2622 = vunpack.c.h.b16 %v811
        %v2623 = vunpack.c.l.b16 %v812
        %v2624 = vunpack.c.h.b16 %v812
        %v2625 = vunpack.c.l.b16 %v813
        %v2626 = vunpack.c.h.b16 %v813
        %v2627 = vunpack.c.l.b16 %v814
        %v2628 = vunpack.c.h.b16 %v814
        %v2629 = vunpack.c.l.b16 %v815
        %v2630 = vunpack.c.h.b16 %v815
        %v2631 = vunpack.c.l.b16 %v816
        %v2632 = vunpack.c.h.b16 %v816
        %v2633 = vunpack.c.l.b16 %v817
        %v2634 = vunpack.c.h.b16 %v817
        %v2635 = vunpack.c.l.b16 %v818
        %v2636 = vunpack.c.h.b16 %v818
        %v2637 = vunpack.c.l.b16 %v819
        %v2638 = vunpack.c.h.b16 %v819
        %v2639 = vunpack.c.l.b16 %v820
        %v2640 = vunpack.c.h.b16 %v820
        %v2641 = vunpack.c.l.b16 %v821
        %v2642 = vunpack.c.h.b16 %v821
        %v2643 = vunpack.c.l.b16 %v822
        %v2644 = vunpack.c.h.b16 %v822
        %v2645 = vunpack.c.l.b16 %v823
        %v2646 = vunpack.c.h.b16 %v823
        %v2647 = vunpack.c.l.b16 %v824
        %v2648 = vunpack.c.h.b16 %v824
        %v2649 = vunpack.c.l.b16 %v825
        %v2650 = vunpack.c.h.b16 %v825
        %v2651 = vunpack.c.l.b16 %v826
        %v2652 = vunpack.c.h.b16 %v826
        %v2653 = vunpack.c.l.b16 %v827
        %v2654 = vunpack.c.h.b16 %v827
        %v2655 = vunpack.c.l.b16 %v828
        %v2656 = vunpack.c.h.b16 %v828
        %v2657 = vunpack.c.l.b16 %v829
        %v2658 = vunpack.c.h.b16 %v829
        %v2659 = vunpack.c.l.b16 %v830
        %v2660 = vunpack.c.h.b16 %v830
        %v2661 = vunpack.c.l.b16 %v831
        %v2662 = vunpack.c.h.b16 %v831
        %v2663 = vunpack.c.l.b16 %v832
        %v2664 = vunpack.c.h.b16 %v832
        %v2665 = vunpack.c.l.b16 %v833
        %v2666 = vunpack.c.h.b16 %v833
        %v2667 = vunpack.c.l.b16 %v834
        %v2668 = vunpack.c.h.b16 %v834
        %v2669 = vunpack.c.l.b16 %v835
        %v2670 = vunpack.c.h.b16 %v835
        %v2671 = vunpack.c.l.b16 %v836
        %v2672 = vunpack.c.h.b16 %v836
        %v2673 = vunpack.c.l.b16 %v837
        %v2674 = vunpack.c.h.b16 %v837
        %v2675 = vunpack.c.l.b16 %v838
        %v2676 = vunpack.c.h.b16 %v838
        %v2677 = vunpack.c.l.b16 %v839
        %v2678 = vunpack.c.h.b16 %v839
        %v2679 = vunpack.c.l.b16 %v840
        %v2680 = vunpack.c.h.b16 %v840
        %v2681 = vunpack.c.l.b16 %v841
        %v2682 = vunpack.c.h.b16 %v841
        %v2683 = vunpack.c.l.b16 %v842
        %v2684 = vunpack.c.h.b16 %v842
        %v2685 = vunpack.c.l.b16 %v843
        %v2686 = vunpack.c.h.b16 %v843
        %v2687 = vunpack.c.l.b16 %v844
        %v2688 = vunpack.c.h.b16 %v844
        %v2689 = vunpack.c.l.b16 %v845
        %v2690 = vunpack.c.h.b16 %v845
        %v2691 = vunpack.c.l.b16 %v846
        %v2692 = vunpack.c.h.b16 %v846
        %v2693 = vunpack.c.l.b16 %v847
        %v2694 = vunpack.c.h.b16 %v847
        %v2695 = vunpack.c.l.b16 %v848
        %v2696 = vunpack.c.h.b16 %v848
        %v2697 = vunpack.c.l.b16 %v849
        %v2698 = vunpack.c.h.b16 %v849
        %v2699 = vunpack.c.l.b16 %v850
        %v2700 = vunpack.c.h.b16 %v850
        %v2701 = vunpack.c.l.b16 %v851
        %v2702 = vunpack.c.h.b16 %v851
        %v2703 = vunpack.c.l.b16 %v852
        %v2704 = vunpack.c.h.b16 %v852
        %v2705 = vunpack.c.l.b16 %v853
        %v2706 = vunpack.c.h.b16 %v853
        %v2707 = vunpack.c.l.b16 %v854
        %v2708 = vunpack.c.h.b16 %v854
        %v2709 = vunpack.c.l.b16 %v855
        %v2710 = vunpack.c.h.b16 %v855
        %v2711 = vunpack.c.l.b16 %v856
        %v2712 = vunpack.c.h.b16 %v856
        %v2713 = vunpack.c.l.b16 %v857
        %v2714 = vunpack.c.h.b16 %v857
        %v2715 = vunpack.c.l.b16 %v858
        %v2716 = vunpack.c.h.b16 %v858
        %v2717 = vunpack.c.l.b16 %v859
        %v2718 = vunpack.c.h.b16 %v859
        %v2719 = vunpack.c.l.b16 %v860
        %v2720 = vunpack.c.h.b16 %v860
        %v2721 = vunpack.c.l.b16 %v861
        %v2722 = vunpack.c.h.b16 %v861
        %v2723 = vunpack.c.l.b16 %v862
        %v2724 = vunpack.c.h.b16 %v862
        %v2725 = vunpack.c.l.b16 %v863
        %v2726 = vunpack.c.h.b16 %v863
        %v2727 = vunpack.c.l.b16 %v864
        %v2728 = vunpack.c.h.b16 %v864
        %v2729 = vunpack.c.l.b16 %v865
        %v2730 = vunpack.c.h.b16 %v865
        %v2731 = vunpack.c.l.b16 %v866
        %v2732 = vunpack.c.h.b16 %v866
        %v2733 = vunpack.c.l.b16 %v867
        %v2734 = vunpack.c.h.b16 %v867
        %v2735 = vunpack.c.l.b16 %v868
        %v2736 = vunpack.c.h.b16 %v868
        %v2737 = vunpack.c.l.b16 %v869
        %v2738 = vunpack.c.h.b16 %v869
        %v2739 = vunpack.c.l.b16 %v870
        %v2740 = vunpack.c.h.b16 %v870
        %v2741 = vunpack.c.l.b16 %v871
        %v2742 = vunpack.c.h.b16 %v871
        %v2743 = vunpack.c.l.b16 %v872
        %v2744 = vunpack.c.h.b16 %v872
        %v2745 = vunpack.c.l.b16 %v873
        %v2746 = vunpack.c.h.b16 %v873
        %v2747 = vunpack.c.l.b16 %v874
        %v2748 = vunpack.c.h.b16 %v874
        %v2749 = vunpack.c.l.b16 %v875
        %v2750 = vunpack.c.h.b16 %v875
        %v2751 = vunpack.c.l.b16 %v876
        %v2752 = vunpack.c.h.b16 %v876
        %v2753 = vunpack.c.l.b16 %v877
        %v2754 = vunpack.c.h.b16 %v877
        %v2755 = vunpack.c.l.b16 %v878
        %v2756 = vunpack.c.h.b16 %v878
        %v2757 = vunpack.c.l.b16 %v879
        %v2758 = vunpack.c.h.b16 %v879
        %v2759 = vunpack.c.l.b16 %v880
        %v2760 = vunpack.c.h.b16 %v880
        %v2761 = vunpack.c.l.b16 %v881
        %v2762 = vunpack.c.h.b16 %v881
        %v2763 = vunpack.c.l.b16 %v882
        %v2764 = vunpack.c.h.b16 %v882
        %v2765 = vunpack.c.l.b16 %v883
        %v2766 = vunpack.c.h.b16 %v883
        %v2767 = vunpack.c.l.b16 %v884
        %v2768 = vunpack.c.h.b16 %v884
        %v2769 = vunpack.c.l.b16 %v885
        %v2770 = vunpack.c.h.b16 %v885
        %v2771 = vunpack.c.l.b16 %v886
        %v2772 = vunpack.c.h.b16 %v886
        %v2773 = vunpack.c.l.b16 %v887
        %v2774 = vunpack.c.h.b16 %v887
        %v2775 = vunpack.c.l.b16 %v888
        %v2776 = vunpack.c.h.b16 %v888
        %v2777 = vunpack.c.l.b16 %v889
        %v2778 = vunpack.c.h.b16 %v889
        %v2779 = vunpack.c.l.b16 %v890
        %v2780 = vunpack.c.h.b16 %v890
        %v2781 = vunpack.c.l.b16 %v891
        %v2782 = vunpack.c.h.b16 %v891
        %v2783 = vunpack.c.l.b16 %v892
        %v2784 = vunpack.c.h.b16 %v892
        %v2785 = vunpack.c.l.b16 %v893
        %v2786 = vunpack.c.h.b16 %v893
        %v2787 = vunpack.c.l.b16 %v894
        %v2788 = vunpack.c.h.b16 %v894
        %v2789 = vunpack.c.l.b16 %v895
        %v2790 = vunpack.c.h.b16 %v895
        %v2791 = vunpack.c.l.b16 %v896
        %v2792 = vunpack.c.h.b16 %v896
        %v2793 = vunpack.c.l.b16 %v897
        %v2794 = vunpack.c.h.b16 %v897
        %v2795 = vunpack.c.l.b16 %v898
        %v2796 = vunpack.c.h.b16 %v898
        %v2797 = vunpack.c.l.b16 %v899
        %v2798 = vunpack.c.h.b16 %v899
        %v2799 = vunpack.c.l.b16 %v900
        %v2800 = vunpack.c.h.b16 %v900
        %v2801 = vunpack.c.l.b16 %v901
        %v2802 = vunpack.c.h.b16 %v901
        %v2803 = vunpack.c.l.b16 %v902
        %v2804 = vunpack.c.h.b16 %v902
        %v2805 = vunpack.c.l.b16 %v903
        %v2806 = vunpack.c.h.b16 %v903
        %v2807 = vunpack.c.l.b16 %v904
        %v2808 = vunpack.c.h.b16 %v904
        %v2809 = vunpack.c.l.b16 %v905
        %v2810 = vunpack.c.h.b16 %v905
        %v2811 = vunpack.c.l.b16 %v906
        %v2812 = vunpack.c.h.b16 %v906
        %v2813 = vunpack.c.l.b16 %v907
        %v2814 = vunpack.c.h.b16 %v907
        %v2815 = vunpack.c.l.b16 %v908
        %v2816 = vunpack.c.h.b16 %v908
        %v2817 = vunpack.c.l.b16 %v909
        %v2818 = vunpack.c.h.b16 %v909
        %v2819 = vunpack.c.l.b16 %v910
        %v2820 = vunpack.c.h.b16 %v910
        %v2821 = vunpack.c.l.b16 %v911
        %v2822 = vunpack.c.h.b16 %v911
        %v2823 = vunpack.c.l.b16 %v912
        %v2824 = vunpack.c.h.b16 %v912
        %v2825 = vunpack.c.l.b16 %v913
        %v2826 = vunpack.c.h.b16 %v913
        %v2827 = vunpack.c.l.b16 %v914
        %v2828 = vunpack.c.h.b16 %v914
        %v2829 = vunpack.c.l.b16 %v915
        %v2830 = vunpack.c.h.b16 %v915
        %v2831 = vunpack.c.l.b16 %v916
        %v2832 = vunpack.c.h.b16 %v916
        %v2833 = vunpack.c.l.b16 %v917
        %v2834 = vunpack.c.h.b16 %v917
        %v2835 = vunpack.c.l.b16 %v918
        %v2836 = vunpack.c.h.b16 %v918
        %v2837 = vunpack.c.l.b16 %v919
        %v2838 = vunpack.c.h.b16 %v919
        %v2839 = vunpack.c.l.b16 %v920
        %v2840 = vunpack.c.h.b16 %v920
        %v2841 = vunpack.c.l.b16 %v921
        %v2842 = vunpack.c.h.b16 %v921
        %v2843 = vunpack.c.l.b16 %v922
        %v2844 = vunpack.c.h.b16 %v922
        %v2845 = vunpack.c.l.b16 %v923
        %v2846 = vunpack.c.h.b16 %v923
        %v2847 = vunpack.c.l.b16 %v924
        %v2848 = vunpack.c.h.b16 %v924
        %v2849 = vunpack.c.l.b16 %v925
        %v2850 = vunpack.c.h.b16 %v925
        %v2851 = vunpack.c.l.b16 %v926
        %v2852 = vunpack.c.h.b16 %v926
        %v2853 = vunpack.c.l.b16 %v927
        %v2854 = vunpack.c.h.b16 %v927
        %v2855 = vunpack.c.l.b16 %v928
        %v2856 = vunpack.c.h.b16 %v928
        %v2857 = vunpack.c.l.b16 %v929
        %v2858 = vunpack.c.h.b16 %v929
        %v2859 = vunpack.c.l.b16 %v930
        %v2860 = vunpack.c.h.b16 %v930
        %v2861 = vunpack.c.l.b16 %v931
        %v2862 = vunpack.c.h.b16 %v931
        %v2863 = vunpack.c.l.b16 %v932
        %v2864 = vunpack.c.h.b16 %v932
        %v2865 = vunpack.c.l.b16 %v933
        %v2866 = vunpack.c.h.b16 %v933
        %v2867 = vunpack.c.l.b16 %v934
        %v2868 = vunpack.c.h.b16 %v934
        %v2869 = vunpack.c.l.b16 %v935
        %v2870 = vunpack.c.h.b16 %v935
        %v2871 = vunpack.c.l.b16 %v936
        %v2872 = vunpack.c.h.b16 %v936
        %v2873 = vunpack.c.l.b16 %v937
        %v2874 = vunpack.c.h.b16 %v937
        %v2875 = vunpack.c.l.b16 %v938
        %v2876 = vunpack.c.h.b16 %v938
        %v2877 = vunpack.c.l.b16 %v939
        %v2878 = vunpack.c.h.b16 %v939
        %v2879 = vunpack.c.l.b16 %v940
        %v2880 = vunpack.c.h.b16 %v940
        %v2881 = vunpack.c.l.b16 %v941
        %v2882 = vunpack.c.h.b16 %v941
        %v2883 = vunpack.c.l.b16 %v942
        %v2884 = vunpack.c.h.b16 %v942
        %v2885 = vpack.c.b16 %v1609, %v1605
        %v2886 = vpack.c.b16 %v1610, %v1606
        %v2887 = vpack.c.b16 %v1611, %v1607
        %v2888 = vpack.c.b16 %v1612, %v1608
        %v2889 = vpack.c.b16 %v1617, %v1613
        %v2890 = vpack.c.b16 %v1618, %v1614
        %v2891 = vpack.c.b16 %v1619, %v1615
        %v2892 = vpack.c.b16 %v1620, %v1616
        %v2893 = vpack.c.b16 %v1625, %v1621
        %v2894 = vpack.c.b16 %v1626, %v1622
        %v2895 = vpack.c.b16 %v1627, %v1623
        %v2896 = vpack.c.b16 %v1628, %v1624
        %v2897 = vpack.c.b16 %v1633, %v1629
        %v2898 = vpack.c.b16 %v1634, %v1630
        %v2899 = vpack.c.b16 %v1635, %v1631
        %v2900 = vpack.c.b16 %v1636, %v1632
        %v2901 = vpack.c.b16 %v1641, %v1637
        %v2902 = vpack.c.b16 %v1642, %v1638
        %v2903 = vpack.c.b16 %v1643, %v1639
        %v2904 = vpack.c.b16 %v1644, %v1640
        %v2905 = vpack.c.b16 %v1649, %v1645
        %v2906 = vpack.c.b16 %v1650, %v1646
        %v2907 = vpack.c.b16 %v1651, %v1647
        %v2908 = vpack.c.b16 %v1652, %v1648
        %v2909 = vpack.c.b16 %v1657, %v1653
        %v2910 = vpack.c.b16 %v1658, %v1654
        %v2911 = vpack.c.b16 %v1659, %v1655
        %v2912 = vpack.c.b16 %v1660, %v1656
        %v2913 = vpack.c.b16 %v1665, %v1661
        %v2914 = vpack.c.b16 %v1666, %v1662
        %v2915 = vpack.c.b16 %v1667, %v1663
        %v2916 = vpack.c.b16 %v1668, %v1664
        %v2917 = vpack.c.b16 %v1673, %v1669
        %v2918 = vpack.c.b16 %v1674, %v1670
        %v2919 = vpack.c.b16 %v1675, %v1671
        %v2920 = vpack.c.b16 %v1676, %v1672
        %v2921 = vpack.c.b16 %v1681, %v1677
        %v2922 = vpack.c.b16 %v1682, %v1678
        %v2923 = vpack.c.b16 %v1683, %v1679
        %v2924 = vpack.c.b16 %v1684, %v1680
        %v2925 = vpack.c.b16 %v1689, %v1685
        %v2926 = vpack.c.b16 %v1690, %v1686
        %v2927 = vpack.c.b16 %v1691, %v1687
        %v2928 = vpack.c.b16 %v1692, %v1688
        %v2929 = vpack.c.b16 %v1697, %v1693
        %v2930 = vpack.c.b16 %v1698, %v1694
        %v2931 = vpack.c.b16 %v1699, %v1695
        %v2932 = vpack.c.b16 %v1700, %v1696
        %v2933 = vpack.c.b16 %v1705, %v1701
        %v2934 = vpack.c.b16 %v1706, %v1702
        %v2935 = vpack.c.b16 %v1707, %v1703
        %v2936 = vpack.c.b16 %v1708, %v1704
        %v2937 = vpack.c.b16 %v1713, %v1709
        %v2938 = vpack.c.b16 %v1714, %v1710
        %v2939 = vpack.c.b16 %v1715, %v1711
        %v2940 = vpack.c.b16 %v1716, %v1712
        %v2941 = vpack.c.b16 %v1721, %v1717
        %v2942 = vpack.c.b16 %v1722, %v1718
        %v2943 = vpack.c.b16 %v1723, %v1719
        %v2944 = vpack.c.b16 %v1724, %v1720
        %v2945 = vpack.c.b16 %v1729, %v1725
        %v2946 = vpack.c.b16 %v1730, %v1726
        %v2947 = vpack.c.b16 %v1731, %v1727
        %v2948 = vpack.c.b16 %v1732, %v1728
        %v2949 = vpack.c.b16 %v1737, %v1733
        %v2950 = vpack.c.b16 %v1738, %v1734
        %v2951 = vpack.c.b16 %v1739, %v1735
        %v2952 = vpack.c.b16 %v1740, %v1736
        %v2953 = vpack.c.b16 %v1745, %v1741
        %v2954 = vpack.c.b16 %v1746, %v1742
        %v2955 = vpack.c.b16 %v1747, %v1743
        %v2956 = vpack.c.b16 %v1748, %v1744
        %v2957 = vpack.c.b16 %v1753, %v1749
        %v2958 = vpack.c.b16 %v1754, %v1750
        %v2959 = vpack.c.b16 %v1755, %v1751
        %v2960 = vpack.c.b16 %v1756, %v1752
        %v2961 = vpack.c.b16 %v1761, %v1757
        %v2962 = vpack.c.b16 %v1762, %v1758
        %v2963 = vpack.c.b16 %v1763, %v1759
        %v2964 = vpack.c.b16 %v1764, %v1760
        %v2965 = vpack.c.b16 %v1769, %v1765
        %v2966 = vpack.c.b16 %v1770, %v1766
        %v2967 = vpack.c.b16 %v1771, %v1767
        %v2968 = vpack.c.b16 %v1772, %v1768
        %v2969 = vpack.c.b16 %v1777, %v1773
        %v2970 = vpack.c.b16 %v1778, %v1774
        %v2971 = vpack.c.b16 %v1779, %v1775
        %v2972 = vpack.c.b16 %v1780, %v1776
        %v2973 = vpack.c.b16 %v1785, %v1781
        %v2974 = vpack.c.b16 %v1786, %v1782
        %v2975 = vpack.c.b16 %v1787, %v1783
        %v2976 = vpack.c.b16 %v1788, %v1784
        %v2977 = vpack.c.b16 %v1793, %v1789
        %v2978 = vpack.c.b16 %v1794, %v1790
        %v2979 = vpack.c.b16 %v1795, %v1791
        %v2980 = vpack.c.b16 %v1796, %v1792
        %v2981 = vpack.c.b16 %v1801, %v1797
        %v2982 = vpack.c.b16 %v1802, %v1798
        %v2983 = vpack.c.b16 %v1803, %v1799
        %v2984 = vpack.c.b16 %v1804, %v1800
        %v2985 = vpack.c.b16 %v1809, %v1805
        %v2986 = vpack.c.b16 %v1810, %v1806
        %v2987 = vpack.c.b16 %v1811, %v1807
        %v2988 = vpack.c.b16 %v1812, %v1808
        %v2989 = vpack.c.b16 %v1817, %v1813
        %v2990 = vpack.c.b16 %v1818, %v1814
        %v2991 = vpack.c.b16 %v1819, %v1815
        %v2992 = vpack.c.b16 %v1820, %v1816
        %v2993 = vpack.c.b16 %v1825, %v1821
        %v2994 = vpack.c.b16 %v1826, %v1822
        %v2995 = vpack.c.b16 %v1827, %v1823
        %v2996 = vpack.c.b16 %v1828, %v1824
        %v2997 = vpack.c.b16 %v1833, %v1829
        %v2998 = vpack.c.b16 %v1834, %v1830
        %v2999 = vpack.c.b16 %v1835, %v1831
        %v3000 = vpack.c.b16 %v1836, %v1832
        %v3001 = vpack.c.b16 %v1841, %v1837
        %v3002 = vpack.c.b16 %v1842, %v1838
        %v3003 = vpack.c.b16 %v1843, %v1839
        %v3004 = vpack.c.b16 %v1844, %v1840
        %v3005 = vpack.c.b16 %v1849, %v1845
        %v3006 = vpack.c.b16 %v1850, %v1846
        %v3007 = vpack.c.b16 %v1851, %v1847
        %v3008 = vpack.c.b16 %v1852, %v1848
        %v3009 = vpack.c.b16 %v1857, %v1853
        %v3010 = vpack.c.b16 %v1858, %v1854
        %v3011 = vpack.c.b16 %v1859, %v1855
        %v3012 = vpack.c.b16 %v1860, %v1856
        %v3013 = vpack.c.b16 %v1865, %v1861
        %v3014 = vpack.c.b16 %v1866, %v1862
        %v3015 = vpack.c.b16 %v1867, %v1863
        %v3016 = vpack.c.b16 %v1868, %v1864
        %v3017 = vpack.c.b16 %v1873, %v1869
        %v3018 = vpack.c.b16 %v1874, %v1870
        %v3019 = vpack.c.b16 %v1875, %v1871
        %v3020 = vpack.c.b16 %v1876, %v1872
        %v3021 = vpack.c.b16 %v1881, %v1877
        %v3022 = vpack.c.b16 %v1882, %v1878
        %v3023 = vpack.c.b16 %v1883, %v1879
        %v3024 = vpack.c.b16 %v1884, %v1880
        %v3025 = vpack.c.b16 %v1889, %v1885
        %v3026 = vpack.c.b16 %v1890, %v1886
        %v3027 = vpack.c.b16 %v1891, %v1887
        %v3028 = vpack.c.b16 %v1892, %v1888
        %v3029 = vpack.c.b16 %v1897, %v1893
        %v3030 = vpack.c.b16 %v1898, %v1894
        %v3031 = vpack.c.b16 %v1899, %v1895
        %v3032 = vpack.c.b16 %v1900, %v1896
        %v3033 = vpack.c.b16 %v1905, %v1901
        %v3034 = vpack.c.b16 %v1906, %v1902
        %v3035 = vpack.c.b16 %v1907, %v1903
        %v3036 = vpack.c.b16 %v1908, %v1904
        %v3037 = vpack.c.b16 %v1913, %v1909
        %v3038 = vpack.c.b16 %v1914, %v1910
        %v3039 = vpack.c.b16 %v1915, %v1911
        %v3040 = vpack.c.b16 %v1916, %v1912
        %v3041 = vpack.c.b16 %v1921, %v1917
        %v3042 = vpack.c.b16 %v1922, %v1918
        %v3043 = vpack.c.b16 %v1923, %v1919
        %v3044 = vpack.c.b16 %v1924, %v1920
        %v3045 = vpack.c.b16 %v1929, %v1925
        %v3046 = vpack.c.b16 %v1930, %v1926
        %v3047 = vpack.c.b16 %v1931, %v1927
        %v3048 = vpack.c.b16 %v1932, %v1928
        %v3049 = vpack.c.b16 %v1937, %v1933
        %v3050 = vpack.c.b16 %v1938, %v1934
        %v3051 = vpack.c.b16 %v1939, %v1935
        %v3052 = vpack.c.b16 %v1940, %v1936
        %v3053 = vpack.c.b16 %v1945, %v1941
        %v3054 = vpack.c.b16 %v1946, %v1942
        %v3055 = vpack.c.b16 %v1947, %v1943
        %v3056 = vpack.c.b16 %v1948, %v1944
        %v3057 = vpack.c.b16 %v1953, %v1949
        %v3058 = vpack.c.b16 %v1954, %v1950
        %v3059 = vpack.c.b16 %v1955, %v1951
        %v3060 = vpack.c.b16 %v1956, %v1952
        %v3061 = vpack.c.b16 %v1961, %v1957
        %v3062 = vpack.c.b16 %v1962, %v1958
        %v3063 = vpack.c.b16 %v1963, %v1959
        %v3064 = vpack.c.b16 %v1964, %v1960
        %v3065 = vpack.c.b16 %v1969, %v1965
        %v3066 = vpack.c.b16 %v1970, %v1966
        %v3067 = vpack.c.b16 %v1971, %v1967
        %v3068 = vpack.c.b16 %v1972, %v1968
        %v3069 = vpack.c.b16 %v1977, %v1973
        %v3070 = vpack.c.b16 %v1978, %v1974
        %v3071 = vpack.c.b16 %v1979, %v1975
        %v3072 = vpack.c.b16 %v1980, %v1976
        %v3073 = vpack.c.b16 %v1985, %v1981
        %v3074 = vpack.c.b16 %v1986, %v1982
        %v3075 = vpack.c.b16 %v1987, %v1983
        %v3076 = vpack.c.b16 %v1988, %v1984
        %v3077 = vpack.c.b16 %v1993, %v1989
        %v3078 = vpack.c.b16 %v1994, %v1990
        %v3079 = vpack.c.b16 %v1995, %v1991
        %v3080 = vpack.c.b16 %v1996, %v1992
        %v3081 = vpack.c.b16 %v2001, %v1997
        %v3082 = vpack.c.b16 %v2002, %v1998
        %v3083 = vpack.c.b16 %v2003, %v1999
        %v3084 = vpack.c.b16 %v2004, %v2000
        %v3085 = vpack.c.b16 %v2009, %v2005
        %v3086 = vpack.c.b16 %v2010, %v2006
        %v3087 = vpack.c.b16 %v2011, %v2007
        %v3088 = vpack.c.b16 %v2012, %v2008
        %v3089 = vpack.c.b16 %v2017, %v2013
        %v3090 = vpack.c.b16 %v2018, %v2014
        %v3091 = vpack.c.b16 %v2019, %v2015
        %v3092 = vpack.c.b16 %v2020, %v2016
        %v3093 = vpack.c.b16 %v2025, %v2021
        %v3094 = vpack.c.b16 %v2026, %v2022
        %v3095 = vpack.c.b16 %v2027, %v2023
        %v3096 = vpack.c.b16 %v2028, %v2024
        %v3097 = vpack.c.b16 %v2033, %v2029
        %v3098 = vpack.c.b16 %v2034, %v2030
        %v3099 = vpack.c.b16 %v2035, %v2031
        %v3100 = vpack.c.b16 %v2036, %v2032
        %v3101 = vpack.c.b16 %v2041, %v2037
        %v3102 = vpack.c.b16 %v2042, %v2038
        %v3103 = vpack.c.b16 %v2043, %v2039
        %v3104 = vpack.c.b16 %v2044, %v2040
        %v3105 = vpack.c.b16 %v2049, %v2045
        %v3106 = vpack.c.b16 %v2050, %v2046
        %v3107 = vpack.c.b16 %v2051, %v2047
        %v3108 = vpack.c.b16 %v2052, %v2048
        %v3109 = vpack.c.b16 %v2057, %v2053
        %v3110 = vpack.c.b16 %v2058, %v2054
        %v3111 = vpack.c.b16 %v2059, %v2055
        %v3112 = vpack.c.b16 %v2060, %v2056
        %v3113 = vpack.c.b16 %v2065, %v2061
        %v3114 = vpack.c.b16 %v2066, %v2062
        %v3115 = vpack.c.b16 %v2067, %v2063
        %v3116 = vpack.c.b16 %v2068, %v2064
        %v3117 = vpack.c.b16 %v2073, %v2069
        %v3118 = vpack.c.b16 %v2074, %v2070
        %v3119 = vpack.c.b16 %v2075, %v2071
        %v3120 = vpack.c.b16 %v2076, %v2072
        %v3121 = vpack.c.b16 %v2081, %v2077
        %v3122 = vpack.c.b16 %v2082, %v2078
        %v3123 = vpack.c.b16 %v2083, %v2079
        %v3124 = vpack.c.b16 %v2084, %v2080
        %v3125 = vpack.c.b16 %v2089, %v2085
        %v3126 = vpack.c.b16 %v2090, %v2086
        %v3127 = vpack.c.b16 %v2091, %v2087
        %v3128 = vpack.c.b16 %v2092, %v2088
        %v3129 = vpack.c.b16 %v2097, %v2093
        %v3130 = vpack.c.b16 %v2098, %v2094
        %v3131 = vpack.c.b16 %v2099, %v2095
        %v3132 = vpack.c.b16 %v2100, %v2096
        %v3133 = vpack.c.b16 %v2105, %v2101
        %v3134 = vpack.c.b16 %v2106, %v2102
        %v3135 = vpack.c.b16 %v2107, %v2103
        %v3136 = vpack.c.b16 %v2108, %v2104
        %v3137 = vpack.c.b16 %v2113, %v2109
        %v3138 = vpack.c.b16 %v2114, %v2110
        %v3139 = vpack.c.b16 %v2115, %v2111
        %v3140 = vpack.c.b16 %v2116, %v2112
        %v3141 = vpack.c.b16 %v2121, %v2117
        %v3142 = vpack.c.b16 %v2122, %v2118
        %v3143 = vpack.c.b16 %v2123, %v2119
        %v3144 = vpack.c.b16 %v2124, %v2120
        %v3145 = vpack.c.b16 %v2129, %v2125
        %v3146 = vpack.c.b16 %v2130, %v2126
        %v3147 = vpack.c.b16 %v2131, %v2127
        %v3148 = vpack.c.b16 %v2132, %v2128
        %v3149 = vpack.c.b16 %v2137, %v2133
        %v3150 = vpack.c.b16 %v2138, %v2134
        %v3151 = vpack.c.b16 %v2139, %v2135
        %v3152 = vpack.c.b16 %v2140, %v2136
        %v3153 = vpack.c.b16 %v2145, %v2141
        %v3154 = vpack.c.b16 %v2146, %v2142
        %v3155 = vpack.c.b16 %v2147, %v2143
        %v3156 = vpack.c.b16 %v2148, %v2144
        %v3157 = vpack.c.b16 %v2153, %v2149
        %v3158 = vpack.c.b16 %v2154, %v2150
        %v3159 = vpack.c.b16 %v2155, %v2151
        %v3160 = vpack.c.b16 %v2156, %v2152
        %v3161 = vpack.c.b16 %v2161, %v2157
        %v3162 = vpack.c.b16 %v2162, %v2158
        %v3163 = vpack.c.b16 %v2163, %v2159
        %v3164 = vpack.c.b16 %v2164, %v2160
        %v3165 = vpack.c.b16 %v2169, %v2165
        %v3166 = vpack.c.b16 %v2170, %v2166
        %v3167 = vpack.c.b16 %v2171, %v2167
        %v3168 = vpack.c.b16 %v2172, %v2168
        %v3169 = vpack.c.b16 %v2177, %v2173
        %v3170 = vpack.c.b16 %v2178, %v2174
        %v3171 = vpack.c.b16 %v2179, %v2175
        %v3172 = vpack.c.b16 %v2180, %v2176
        %v3173 = vpack.c.b16 %v2185, %v2181
        %v3174 = vpack.c.b16 %v2186, %v2182
        %v3175 = vpack.c.b16 %v2187, %v2183
        %v3176 = vpack.c.b16 %v2188, %v2184
        %v3177 = vpack.c.b16 %v2193, %v2189
        %v3178 = vpack.c.b16 %v2194, %v2190
        %v3179 = vpack.c.b16 %v2195, %v2191
        %v3180 = vpack.c.b16 %v2196, %v2192
        %v3181 = vpack.c.b16 %v2201, %v2197
        %v3182 = vpack.c.b16 %v2202, %v2198
        %v3183 = vpack.c.b16 %v2203, %v2199
        %v3184 = vpack.c.b16 %v2204, %v2200
        %v3185 = vpack.c.b16 %v2209, %v2205
        %v3186 = vpack.c.b16 %v2210, %v2206
        %v3187 = vpack.c.b16 %v2211, %v2207
        %v3188 = vpack.c.b16 %v2212, %v2208
        %v3189 = vpack.c.b16 %v2217, %v2213
        %v3190 = vpack.c.b16 %v2218, %v2214
        %v3191 = vpack.c.b16 %v2219, %v2215
        %v3192 = vpack.c.b16 %v2220, %v2216
        %v3193 = vpack.c.b16 %v2225, %v2221
        %v3194 = vpack.c.b16 %v2226, %v2222
        %v3195 = vpack.c.b16 %v2227, %v2223
        %v3196 = vpack.c.b16 %v2228, %v2224
        %v3197 = vpack.c.b16 %v2233, %v2229
        %v3198 = vpack.c.b16 %v2234, %v2230
        %v3199 = vpack.c.b16 %v2235, %v2231
        %v3200 = vpack.c.b16 %v2236, %v2232
        %v3201 = vpack.c.b16 %v2241, %v2237
        %v3202 = vpack.c.b16 %v2242, %v2238
        %v3203 = vpack.c.b16 %v2243, %v2239
        %v3204 = vpack.c.b16 %v2244, %v2240
        %v3205 = vpack.c.b16 %v2249, %v2245
        %v3206 = vpack.c.b16 %v2250, %v2246
        %v3207 = vpack.c.b16 %v2251, %v2247
        %v3208 = vpack.c.b16 %v2252, %v2248
        %v3209 = vpack.c.b16 %v2257, %v2253
        %v3210 = vpack.c.b16 %v2258, %v2254
        %v3211 = vpack.c.b16 %v2259, %v2255
        %v3212 = vpack.c.b16 %v2260, %v2256
        %v3213 = vpack.c.b16 %v2265, %v2261
        %v3214 = vpack.c.b16 %v2266, %v2262
        %v3215 = vpack.c.b16 %v2267, %v2263
        %v3216 = vpack.c.b16 %v2268, %v2264
        %v3217 = vpack.c.b16 %v2273, %v2269
        %v3218 = vpack.c.b16 %v2274, %v2270
        %v3219 = vpack.c.b16 %v2275, %v2271
        %v3220 = vpack.c.b16 %v2276, %v2272
        %v3221 = vpack.c.b16 %v2281, %v2277
        %v3222 = vpack.c.b16 %v2282, %v2278
        %v3223 = vpack.c.b16 %v2283, %v2279
        %v3224 = vpack.c.b16 %v2284, %v2280
        %v3225 = vpack.c.b16 %v2289, %v2285
        %v3226 = vpack.c.b16 %v2290, %v2286
        %v3227 = vpack.c.b16 %v2291, %v2287
        %v3228 = vpack.c.b16 %v2292, %v2288
        %v3229 = vpack.c.b16 %v2297, %v2293
        %v3230 = vpack.c.b16 %v2298, %v2294
        %v3231 = vpack.c.b16 %v2299, %v2295
        %v3232 = vpack.c.b16 %v2300, %v2296
        %v3233 = vpack.c.b16 %v2305, %v2301
        %v3234 = vpack.c.b16 %v2306, %v2302
        %v3235 = vpack.c.b16 %v2307, %v2303
        %v3236 = vpack.c.b16 %v2308, %v2304
        %v3237 = vpack.c.b16 %v2313, %v2309
        %v3238 = vpack.c.b16 %v2314, %v2310
        %v3239 = vpack.c.b16 %v2315, %v2311
        %v3240 = vpack.c.b16 %v2316, %v2312
        %v3241 = vpack.c.b16 %v2321, %v2317
        %v3242 = vpack.c.b16 %v2322, %v2318
        %v3243 = vpack.c.b16 %v2323, %v2319
        %v3244 = vpack.c.b16 %v2324, %v2320
        %v3245 = vpack.c.b16 %v2329, %v2325
        %v3246 = vpack.c.b16 %v2330, %v2326
        %v3247 = vpack.c.b16 %v2331, %v2327
        %v3248 = vpack.c.b16 %v2332, %v2328
        %v3249 = vpack.c.b16 %v2337, %v2333
        %v3250 = vpack.c.b16 %v2338, %v2334
        %v3251 = vpack.c.b16 %v2339, %v2335
        %v3252 = vpack.c.b16 %v2340, %v2336
        %v3253 = vpack.c.b16 %v2345, %v2341
        %v3254 = vpack.c.b16 %v2346, %v2342
        %v3255 = vpack.c.b16 %v2347, %v2343
        %v3256 = vpack.c.b16 %v2348, %v2344
        %v3257 = vpack.c.b16 %v2353, %v2349
        %v3258 = vpack.c.b16 %v2354, %v2350
        %v3259 = vpack.c.b16 %v2355, %v2351
        %v3260 = vpack.c.b16 %v2356, %v2352
        %v3261 = vpack.c.b16 %v2361, %v2357
        %v3262 = vpack.c.b16 %v2362, %v2358
        %v3263 = vpack.c.b16 %v2363, %v2359
        %v3264 = vpack.c.b16 %v2364, %v2360
        %v3265 = vpack.c.b16 %v2369, %v2365
        %v3266 = vpack.c.b16 %v2370, %v2366
        %v3267 = vpack.c.b16 %v2371, %v2367
        %v3268 = vpack.c.b16 %v2372, %v2368
        %v3269 = vpack.c.b16 %v2377, %v2373
        %v3270 = vpack.c.b16 %v2378, %v2374
        %v3271 = vpack.c.b16 %v2379, %v2375
        %v3272 = vpack.c.b16 %v2380, %v2376
        %v3273 = vpack.c.b16 %v2385, %v2381
        %v3274 = vpack.c.b16 %v2386, %v2382
        %v3275 = vpack.c.b16 %v2387, %v2383
        %v3276 = vpack.c.b16 %v2388, %v2384
        %v3277 = vpack.c.b16 %v2393, %v2389
        %v3278 = vpack.c.b16 %v2394, %v2390
        %v3279 = vpack.c.b16 %v2395, %v2391
        %v3280 = vpack.c.b16 %v2396, %v2392
        %v3281 = vpack.c.b16 %v2401, %v2397
        %v3282 = vpack.c.b16 %v2402, %v2398
        %v3283 = vpack.c.b16 %v2403, %v2399
        %v3284 = vpack.c.b16 %v2404, %v2400
        %v3285 = vpack.c.b16 %v2409, %v2405
        %v3286 = vpack.c.b16 %v2410, %v2406
        %v3287 = vpack.c.b16 %v2411, %v2407
        %v3288 = vpack.c.b16 %v2412, %v2408
        %v3289 = vpack.c.b16 %v2417, %v2413
        %v3290 = vpack.c.b16 %v2418, %v2414
        %v3291 = vpack.c.b16 %v2419, %v2415
        %v3292 = vpack.c.b16 %v2420, %v2416
        %v3293 = vpack.c.b16 %v2425, %v2421
        %v3294 = vpack.c.b16 %v2426, %v2422
        %v3295 = vpack.c.b16 %v2427, %v2423
        %v3296 = vpack.c.b16 %v2428, %v2424
        %v3297 = vpack.c.b16 %v2433, %v2429
        %v3298 = vpack.c.b16 %v2434, %v2430
        %v3299 = vpack.c.b16 %v2435, %v2431
        %v3300 = vpack.c.b16 %v2436, %v2432
        %v3301 = vpack.c.b16 %v2441, %v2437
        %v3302 = vpack.c.b16 %v2442, %v2438
        %v3303 = vpack.c.b16 %v2443, %v2439
        %v3304 = vpack.c.b16 %v2444, %v2440
        %v3305 = vpack.c.b16 %v2449, %v2445
        %v3306 = vpack.c.b16 %v2450, %v2446
        %v3307 = vpack.c.b16 %v2451, %v2447
        %v3308 = vpack.c.b16 %v2452, %v2448
        %v3309 = vpack.c.b16 %v2457, %v2453
        %v3310 = vpack.c.b16 %v2458, %v2454
        %v3311 = vpack.c.b16 %v2459, %v2455
        %v3312 = vpack.c.b16 %v2460, %v2456
        %v3313 = vpack.c.b16 %v2465, %v2461
        %v3314 = vpack.c.b16 %v2466, %v2462
        %v3315 = vpack.c.b16 %v2467, %v2463
        %v3316 = vpack.c.b16 %v2468, %v2464
        %v3317 = vpack.c.b16 %v2473, %v2469
        %v3318 = vpack.c.b16 %v2474, %v2470
        %v3319 = vpack.c.b16 %v2475, %v2471
        %v3320 = vpack.c.b16 %v2476, %v2472
        %v3321 = vpack.c.b16 %v2481, %v2477
        %v3322 = vpack.c.b16 %v2482, %v2478
        %v3323 = vpack.c.b16 %v2483, %v2479
        %v3324 = vpack.c.b16 %v2484, %v2480
        %v3325 = vpack.c.b16 %v2489, %v2485
        %v3326 = vpack.c.b16 %v2490, %v2486
        %v3327 = vpack.c.b16 %v2491, %v2487
        %v3328 = vpack.c.b16 %v2492, %v2488
        %v3329 = vpack.c.b16 %v2497, %v2493
        %v3330 = vpack.c.b16 %v2498, %v2494
        %v3331 = vpack.c.b16 %v2499, %v2495
        %v3332 = vpack.c.b16 %v2500, %v2496
        %v3333 = vpack.c.b16 %v2505, %v2501
        %v3334 = vpack.c.b16 %v2506, %v2502
        %v3335 = vpack.c.b16 %v2507, %v2503
        %v3336 = vpack.c.b16 %v2508, %v2504
        %v3337 = vpack.c.b16 %v2513, %v2509
        %v3338 = vpack.c.b16 %v2514, %v2510
        %v3339 = vpack.c.b16 %v2515, %v2511
        %v3340 = vpack.c.b16 %v2516, %v2512
        %v3341 = vpack.c.b16 %v2521, %v2517
        %v3342 = vpack.c.b16 %v2522, %v2518
        %v3343 = vpack.c.b16 %v2523, %v2519
        %v3344 = vpack.c.b16 %v2524, %v2520
        %v3345 = vpack.c.b16 %v2529, %v2525
        %v3346 = vpack.c.b16 %v2530, %v2526
        %v3347 = vpack.c.b16 %v2531, %v2527
        %v3348 = vpack.c.b16 %v2532, %v2528
        %v3349 = vpack.c.b16 %v2537, %v2533
        %v3350 = vpack.c.b16 %v2538, %v2534
        %v3351 = vpack.c.b16 %v2539, %v2535
        %v3352 = vpack.c.b16 %v2540, %v2536
        %v3353 = vpack.c.b16 %v2545, %v2541
        %v3354 = vpack.c.b16 %v2546, %v2542
        %v3355 = vpack.c.b16 %v2547, %v2543
        %v3356 = vpack.c.b16 %v2548, %v2544
        %v3357 = vpack.c.b16 %v2553, %v2549
        %v3358 = vpack.c.b16 %v2554, %v2550
        %v3359 = vpack.c.b16 %v2555, %v2551
        %v3360 = vpack.c.b16 %v2556, %v2552
        %v3361 = vpack.c.b16 %v2561, %v2557
        %v3362 = vpack.c.b16 %v2562, %v2558
        %v3363 = vpack.c.b16 %v2563, %v2559
        %v3364 = vpack.c.b16 %v2564, %v2560
        %v3365 = vpack.c.b16 %v2569, %v2565
        %v3366 = vpack.c.b16 %v2570, %v2566
        %v3367 = vpack.c.b16 %v2571, %v2567
        %v3368 = vpack.c.b16 %v2572, %v2568
        %v3369 = vpack.c.b16 %v2577, %v2573
        %v3370 = vpack.c.b16 %v2578, %v2574
        %v3371 = vpack.c.b16 %v2579, %v2575
        %v3372 = vpack.c.b16 %v2580, %v2576
        %v3373 = vpack.c.b16 %v2585, %v2581
        %v3374 = vpack.c.b16 %v2586, %v2582
        %v3375 = vpack.c.b16 %v2587, %v2583
        %v3376 = vpack.c.b16 %v2588, %v2584
        %v3377 = vpack.c.b16 %v2593, %v2589
        %v3378 = vpack.c.b16 %v2594, %v2590
        %v3379 = vpack.c.b16 %v2595, %v2591
        %v3380 = vpack.c.b16 %v2596, %v2592
        %v3381 = vpack.c.b16 %v2601, %v2597
        %v3382 = vpack.c.b16 %v2602, %v2598
        %v3383 = vpack.c.b16 %v2603, %v2599
        %v3384 = vpack.c.b16 %v2604, %v2600
        %v3385 = vpack.c.b16 %v2609, %v2605
        %v3386 = vpack.c.b16 %v2610, %v2606
        %v3387 = vpack.c.b16 %v2611, %v2607
        %v3388 = vpack.c.b16 %v2612, %v2608
        %v3389 = vpack.c.b16 %v2617, %v2613
        %v3390 = vpack.c.b16 %v2618, %v2614
        %v3391 = vpack.c.b16 %v2619, %v2615
        %v3392 = vpack.c.b16 %v2620, %v2616
        %v3393 = vpack.c.b16 %v2625, %v2621
        %v3394 = vpack.c.b16 %v2626, %v2622
        %v3395 = vpack.c.b16 %v2627, %v2623
        %v3396 = vpack.c.b16 %v2628, %v2624
        %v3397 = vpack.c.b16 %v2633, %v2629
        %v3398 = vpack.c.b16 %v2634, %v2630
        %v3399 = vpack.c.b16 %v2635, %v2631
        %v3400 = vpack.c.b16 %v2636, %v2632
        %v3401 = vpack.c.b16 %v2641, %v2637
        %v3402 = vpack.c.b16 %v2642, %v2638
        %v3403 = vpack.c.b16 %v2643, %v2639
        %v3404 = vpack.c.b16 %v2644, %v2640
        %v3405 = vpack.c.b16 %v2649, %v2645
        %v3406 = vpack.c.b16 %v2650, %v2646
        %v3407 = vpack.c.b16 %v2651, %v2647
        %v3408 = vpack.c.b16 %v2652, %v2648
        %v3409 = vpack.c.b16 %v2657, %v2653
        %v3410 = vpack.c.b16 %v2658, %v2654
        %v3411 = vpack.c.b16 %v2659, %v2655
        %v3412 = vpack.c.b16 %v2660, %v2656
        %v3413 = vpack.c.b16 %v2665, %v2661
        %v3414 = vpack.c.b16 %v2666, %v2662
        %v3415 = vpack.c.b16 %v2667, %v2663
        %v3416 = vpack.c.b16 %v2668, %v2664
        %v3417 = vpack.c.b16 %v2673, %v2669
        %v3418 = vpack.c.b16 %v2674, %v2670
        %v3419 = vpack.c.b16 %v2675, %v2671
        %v3420 = vpack.c.b16 %v2676, %v2672
        %v3421 = vpack.c.b16 %v2681, %v2677
        %v3422 = vpack.c.b16 %v2682, %v2678
        %v3423 = vpack.c.b16 %v2683, %v2679
        %v3424 = vpack.c.b16 %v2684, %v2680
        %v3425 = vpack.c.b16 %v2689, %v2685
        %v3426 = vpack.c.b16 %v2690, %v2686
        %v3427 = vpack.c.b16 %v2691, %v2687
        %v3428 = vpack.c.b16 %v2692, %v2688
        %v3429 = vpack.c.b16 %v2697, %v2693
        %v3430 = vpack.c.b16 %v2698, %v2694
        %v3431 = vpack.c.b16 %v2699, %v2695
        %v3432 = vpack.c.b16 %v2700, %v2696
        %v3433 = vpack.c.b16 %v2705, %v2701
        %v3434 = vpack.c.b16 %v2706, %v2702
        %v3435 = vpack.c.b16 %v2707, %v2703
        %v3436 = vpack.c.b16 %v2708, %v2704
        %v3437 = vpack.c.b16 %v2713, %v2709
        %v3438 = vpack.c.b16 %v2714, %v2710
        %v3439 = vpack.c.b16 %v2715, %v2711
        %v3440 = vpack.c.b16 %v2716, %v2712
        %v3441 = vpack.c.b16 %v2721, %v2717
        %v3442 = vpack.c.b16 %v2722, %v2718
        %v3443 = vpack.c.b16 %v2723, %v2719
        %v3444 = vpack.c.b16 %v2724, %v2720
        %v3445 = vpack.c.b16 %v2729, %v2725
        %v3446 = vpack.c.b16 %v2730, %v2726
        %v3447 = vpack.c.b16 %v2731, %v2727
        %v3448 = vpack.c.b16 %v2732, %v2728
        %v3449 = vpack.c.b16 %v2737, %v2733
        %v3450 = vpack.c.b16 %v2738, %v2734
        %v3451 = vpack.c.b16 %v2739, %v2735
        %v3452 = vpack.c.b16 %v2740, %v2736
        %v3453 = vpack.c.b16 %v2745, %v2741
        %v3454 = vpack.c.b16 %v2746, %v2742
        %v3455 = vpack.c.b16 %v2747, %v2743
        %v3456 = vpack.c.b16 %v2748, %v2744
        %v3457 = vpack.c.b16 %v2753, %v2749
        %v3458 = vpack.c.b16 %v2754, %v2750
        %v3459 = vpack.c.b16 %v2755, %v2751
        %v3460 = vpack.c.b16 %v2756, %v2752
        %v3461 = vpack.c.b16 %v2761, %v2757
        %v3462 = vpack.c.b16 %v2762, %v2758
        %v3463 = vpack.c.b16 %v2763, %v2759
        %v3464 = vpack.c.b16 %v2764, %v2760
        %v3465 = vpack.c.b16 %v2769, %v2765
        %v3466 = vpack.c.b16 %v2770, %v2766
        %v3467 = vpack.c.b16 %v2771, %v2767
        %v3468 = vpack.c.b16 %v2772, %v2768
        %v3469 = vpack.c.b16 %v2777, %v2773
        %v3470 = vpack.c.b16 %v2778, %v2774
        %v3471 = vpack.c.b16 %v2779, %v2775
        %v3472 = vpack.c.b16 %v2780, %v2776
        %v3473 = vpack.c.b16 %v2785, %v2781
        %v3474 = vpack.c.b16 %v2786, %v2782
        %v3475 = vpack.c.b16 %v2787, %v2783
        %v3476 = vpack.c.b16 %v2788, %v2784
        %v3477 = vpack.c.b16 %v2793, %v2789
        %v3478 = vpack.c.b16 %v2794, %v2790
        %v3479 = vpack.c.b16 %v2795, %v2791
        %v3480 = vpack.c.b16 %v2796, %v2792
        %v3481 = vpack.c.b16 %v2801, %v2797
        %v3482 = vpack.c.b16 %v2802, %v2798
        %v3483 = vpack.c.b16 %v2803, %v2799
        %v3484 = vpack.c.b16 %v2804, %v2800
        %v3485 = vpack.c.b16 %v2809, %v2805
        %v3486 = vpack.c.b16 %v2810, %v2806
        %v3487 = vpack.c.b16 %v2811, %v2807
        %v3488 = vpack.c.b16 %v2812, %v2808
        %v3489 = vpack.c.b16 %v2817, %v2813
        %v3490 = vpack.c.b16 %v2818, %v2814
        %v3491 = vpack.c.b16 %v2819, %v2815
        %v3492 = vpack.c.b16 %v2820, %v2816
        %v3493 = vpack.c.b16 %v2825, %v2821
        %v3494 = vpack.c.b16 %v2826, %v2822
        %v3495 = vpack.c.b16 %v2827, %v2823
        %v3496 = vpack.c.b16 %v2828, %v2824
        %v3497 = vpack.c.b16 %v2833, %v2829
        %v3498 = vpack.c.b16 %v2834, %v2830
        %v3499 = vpack.c.b16 %v2835, %v2831
        %v3500 = vpack.c.b16 %v2836, %v2832
        %v3501 = vpack.c.b16 %v2841, %v2837
        %v3502 = vpack.c.b16 %v2842, %v2838
        %v3503 = vpack.c.b16 %v2843, %v2839
        %v3504 = vpack.c.b16 %v2844, %v2840
        %v3505 = vpack.c.b16 %v2849, %v2845
        %v3506 = vpack.c.b16 %v2850, %v2846
        %v3507 = vpack.c.b16 %v2851, %v2847
        %v3508 = vpack.c.b16 %v2852, %v2848
        %v3509 = vpack.c.b16 %v2857, %v2853
        %v3510 = vpack.c.b16 %v2858, %v2854
        %v3511 = vpack.c.b16 %v2859, %v2855
        %v3512 = vpack.c.b16 %v2860, %v2856
        %v3513 = vpack.c.b16 %v2865, %v2861
        %v3514 = vpack.c.b16 %v2866, %v2862
        %v3515 = vpack.c.b16 %v2867, %v2863
        %v3516 = vpack.c.b16 %v2868, %v2864
        %v3517 = vpack.c.b16 %v2873, %v2869
        %v3518 = vpack.c.b16 %v2874, %v2870
        %v3519 = vpack.c.b16 %v2875, %v2871
        %v3520 = vpack.c.b16 %v2876, %v2872
        %v3521 = vpack.c.b16 %v2881, %v2877
        %v3522 = vpack.c.b16 %v2882, %v2878
        %v3523 = vpack.c.b16 %v2883, %v2879
        %v3524 = vpack.c.b16 %v2884, %v2880
        %4165 = vmatprep.subr.bf16.mxu0 %v2886
        %4166 = vmatpush1.bf16.msra.mxu0 %v2885
        %4167 = vmatprep.subr.bf16.mxu0 %v2890
        %4168 = vmatpush1.bf16.msra.mxu0 %v2889
        %4169 = vmatprep.subr.bf16.mxu0 %v2894
        %4170 = vmatpush1.bf16.msra.mxu0 %v2893
        %4171 = vmatprep.subr.bf16.mxu0 %v2898
        %4172 = vmatpush1.bf16.msra.mxu0 %v2897
        %4173 = vmatprep.subr.bf16.mxu0 %v2902
        %4174 = vmatpush1.bf16.msra.mxu0 %v2901
        %4175 = vmatprep.subr.bf16.mxu0 %v2906
        %4176 = vmatpush1.bf16.msra.mxu0 %v2905
        %4177 = vmatprep.subr.bf16.mxu0 %v2910
        %4178 = vmatpush1.bf16.msra.mxu0 %v2909
        %4179 = vmatprep.subr.bf16.mxu0 %v2914
        %4180 = vmatpush1.bf16.msra.mxu0 %v2913
        %4181 = vmatprep.subr.bf16.mxu0 %v2918
        %4182 = vmatpush1.bf16.msra.mxu0 %v2917
        %4183 = vmatprep.subr.bf16.mxu0 %v2922
        %4184 = vmatpush1.bf16.msra.mxu0 %v2921
        %4185 = vmatprep.subr.bf16.mxu0 %v2926
        %4186 = vmatpush1.bf16.msra.mxu0 %v2925
        %4187 = vmatprep.subr.bf16.mxu0 %v2930
        %4188 = vmatpush1.bf16.msra.mxu0 %v2929
        %4189 = vmatprep.subr.bf16.mxu0 %v2934
        %4190 = vmatpush1.bf16.msra.mxu0 %v2933
        %4191 = vmatprep.subr.bf16.mxu0 %v2938
        %4192 = vmatpush1.bf16.msra.mxu0 %v2937
        %4193 = vmatprep.subr.bf16.mxu0 %v2942
        %4194 = vmatpush1.bf16.msra.mxu0 %v2941
        %4195 = vmatprep.subr.bf16.mxu0 %v2946
        %4196 = vmatpush1.bf16.msra.mxu0 %v2945
        %4197 = vmatprep.mubr.bf16.mxu0 %v284
        %4198 = vmatmul.mubr.bf16.gmra.mrb[0].mxu0 %v283
        %v4199 = vpop.f32.mrb[0].mxu0
        %v4200 = vadd.f32 %v948, %v4199
        %v4201 = vpop.f32.mrb[0].mxu0
        %v4202 = vadd.f32 %v952, %v4201
        %v4203 = vpop.f32.mrb[0].mxu0
        %v4204 = vpop.f32.mrb[0].mxu0
        %4205 = vdwg.mxu0
        %4206 = vmatprep.subr.bf16.mxu0 %v2950
        %4207 = vmatpush1.bf16.msra.mxu0 %v2949
        %4208 = vmatprep.subr.bf16.mxu0 %v2954
        %4209 = vmatpush1.bf16.msra.mxu0 %v2953
        %4210 = vmatprep.subr.bf16.mxu0 %v2958
        %4211 = vmatpush1.bf16.msra.mxu0 %v2957
        %4212 = vmatprep.subr.bf16.mxu0 %v2962
        %4213 = vmatpush1.bf16.msra.mxu0 %v2961
        %4214 = vmatprep.subr.bf16.mxu0 %v2966
        %4215 = vmatpush1.bf16.msra.mxu0 %v2965
        %4216 = vmatprep.subr.bf16.mxu0 %v2970
        %4217 = vmatpush1.bf16.msra.mxu0 %v2969
        %4218 = vmatprep.subr.bf16.mxu0 %v2974
        %4219 = vmatpush1.bf16.msra.mxu0 %v2973
        %4220 = vmatprep.subr.bf16.mxu0 %v2978
        %4221 = vmatpush1.bf16.msra.mxu0 %v2977
        %4222 = vmatprep.subr.bf16.mxu0 %v2982
        %4223 = vmatpush1.bf16.msra.mxu0 %v2981
        %4224 = vmatprep.subr.bf16.mxu0 %v2986
        %4225 = vmatpush1.bf16.msra.mxu0 %v2985
        %4226 = vmatprep.subr.bf16.mxu0 %v2990
        %4227 = vmatpush1.bf16.msra.mxu0 %v2989
        %4228 = vmatprep.subr.bf16.mxu0 %v2994
        %4229 = vmatpush1.bf16.msra.mxu0 %v2993
        %4230 = vmatprep.subr.bf16.mxu0 %v2998
        %4231 = vmatpush1.bf16.msra.mxu0 %v2997
        %4232 = vmatprep.subr.bf16.mxu0 %v3002
        %4233 = vmatpush1.bf16.msra.mxu0 %v3001
        %4234 = vmatprep.subr.bf16.mxu0 %v3006
        %4235 = vmatpush1.bf16.msra.mxu0 %v3005
        %4236 = vmatprep.subr.bf16.mxu0 %v3010
        %4237 = vmatpush1.bf16.msra.mxu0 %v3009
        %4238 = vmatprep.mubr.bf16.mxu0 %v286
        %4239 = vmatmul.mubr.bf16.gmra.mrb[0].mxu0 %v285
        %v4240 = vpop.f32.mrb[0].mxu0
        %v4241 = vadd.f32 %v4200, %v4240
        %v4242 = vpop.f32.mrb[0].mxu0
        %v4243 = vadd.f32 %v4202, %v4242
        %v4244 = vpop.f32.mrb[0].mxu0
        %v4245 = vpop.f32.mrb[0].mxu0
        %4246 = vdwg.mxu0
        %4247 = vmatprep.subr.bf16.mxu0 %v3014
        %4248 = vmatpush1.bf16.msra.mxu0 %v3013
        %4249 = vmatprep.subr.bf16.mxu0 %v3018
        %4250 = vmatpush1.bf16.msra.mxu0 %v3017
        %4251 = vmatprep.subr.bf16.mxu0 %v3022
        %4252 = vmatpush1.bf16.msra.mxu0 %v3021
        %4253 = vmatprep.subr.bf16.mxu0 %v3026
        %4254 = vmatpush1.bf16.msra.mxu0 %v3025
        %4255 = vmatprep.subr.bf16.mxu0 %v3030
        %4256 = vmatpush1.bf16.msra.mxu0 %v3029
        %4257 = vmatprep.subr.bf16.mxu0 %v3034
        %4258 = vmatpush1.bf16.msra.mxu0 %v3033
        %4259 = vmatprep.subr.bf16.mxu0 %v3038
        %4260 = vmatpush1.bf16.msra.mxu0 %v3037
        %4261 = vmatprep.subr.bf16.mxu0 %v3042
        %4262 = vmatpush1.bf16.msra.mxu0 %v3041
        %4263 = vmatprep.subr.bf16.mxu0 %v3046
        %4264 = vmatpush1.bf16.msra.mxu0 %v3045
        %4265 = vmatprep.subr.bf16.mxu0 %v3050
        %4266 = vmatpush1.bf16.msra.mxu0 %v3049
        %4267 = vmatprep.subr.bf16.mxu0 %v3054
        %4268 = vmatpush1.bf16.msra.mxu0 %v3053
        %4269 = vmatprep.subr.bf16.mxu0 %v3058
        %4270 = vmatpush1.bf16.msra.mxu0 %v3057
        %4271 = vmatprep.subr.bf16.mxu0 %v3062
        %4272 = vmatpush1.bf16.msra.mxu0 %v3061
        %4273 = vmatprep.subr.bf16.mxu0 %v3066
        %4274 = vmatpush1.bf16.msra.mxu0 %v3065
        %4275 = vmatprep.subr.bf16.mxu0 %v3070
        %4276 = vmatpush1.bf16.msra.mxu0 %v3069
        %4277 = vmatprep.subr.bf16.mxu0 %v3074
        %4278 = vmatpush1.bf16.msra.mxu0 %v3073
        %4279 = vmatprep.mubr.bf16.mxu0 %v288
        %4280 = vmatmul.mubr.bf16.gmra.mrb[0].mxu0 %v287
        %v4281 = vpop.f32.mrb[0].mxu0
        %v4282 = vadd.f32 %v4241, %v4281
        %v4283 = vpop.f32.mrb[0].mxu0
        %v4284 = vadd.f32 %v4243, %v4283
        %v4285 = vpop.f32.mrb[0].mxu0
        %v4286 = vpop.f32.mrb[0].mxu0
        %4287 = vdwg.mxu0
        %4288 = vmatprep.subr.bf16.mxu0 %v3078
        %4289 = vmatpush1.bf16.msra.mxu0 %v3077
        %4290 = vmatprep.subr.bf16.mxu0 %v3082
        %4291 = vmatpush1.bf16.msra.mxu0 %v3081
        %4292 = vmatprep.subr.bf16.mxu0 %v3086
        %4293 = vmatpush1.bf16.msra.mxu0 %v3085
        %4294 = vmatprep.subr.bf16.mxu0 %v3090
        %4295 = vmatpush1.bf16.msra.mxu0 %v3089
        %4296 = vmatprep.subr.bf16.mxu0 %v3094
        %4297 = vmatpush1.bf16.msra.mxu0 %v3093
        %4298 = vmatprep.subr.bf16.mxu0 %v3098
        %4299 = vmatpush1.bf16.msra.mxu0 %v3097
        %4300 = vmatprep.subr.bf16.mxu0 %v3102
        %4301 = vmatpush1.bf16.msra.mxu0 %v3101
        %4302 = vmatprep.subr.bf16.mxu0 %v3106
        %4303 = vmatpush1.bf16.msra.mxu0 %v3105
        %4304 = vmatprep.subr.bf16.mxu0 %v3110
        %4305 = vmatpush1.bf16.msra.mxu0 %v3109
        %4306 = vmatprep.subr.bf16.mxu0 %v3114
        %4307 = vmatpush1.bf16.msra.mxu0 %v3113
        %4308 = vmatprep.subr.bf16.mxu0 %v3118
        %4309 = vmatpush1.bf16.msra.mxu0 %v3117
        %4310 = vmatprep.subr.bf16.mxu0 %v3122
        %4311 = vmatpush1.bf16.msra.mxu0 %v3121
        %4312 = vmatprep.subr.bf16.mxu0 %v3126
        %4313 = vmatpush1.bf16.msra.mxu0 %v3125
        %4314 = vmatprep.subr.bf16.mxu0 %v3130
        %4315 = vmatpush1.bf16.msra.mxu0 %v3129
        %4316 = vmatprep.subr.bf16.mxu0 %v3134
        %4317 = vmatpush1.bf16.msra.mxu0 %v3133
        %4318 = vmatprep.subr.bf16.mxu0 %v3138
        %4319 = vmatpush1.bf16.msra.mxu0 %v3137
        %4320 = vmatprep.mubr.bf16.mxu0 %v290
        %4321 = vmatmul.mubr.bf16.gmra.mrb[0].mxu0 %v289
        %v4322 = vpop.f32.mrb[0].mxu0
        %v4323 = vadd.f32 %v4282, %v4322
        %v4324 = vpop.f32.mrb[0].mxu0
        %v4325 = vadd.f32 %v4284, %v4324
        %v4326 = vpop.f32.mrb[0].mxu0
        %v4327 = vpop.f32.mrb[0].mxu0
        %4328 = vdwg.mxu0
        %4329 = vmatprep.subr.bf16.mxu0 %v3142
        %4330 = vmatpush1.bf16.msra.mxu0 %v3141
        %4331 = vmatprep.subr.bf16.mxu0 %v3146
        %4332 = vmatpush1.bf16.msra.mxu0 %v3145
        %4333 = vmatprep.subr.bf16.mxu0 %v3150
        %4334 = vmatpush1.bf16.msra.mxu0 %v3149
        %4335 = vmatprep.subr.bf16.mxu0 %v3154
        %4336 = vmatpush1.bf16.msra.mxu0 %v3153
        %4337 = vmatprep.subr.bf16.mxu0 %v3158
        %4338 = vmatpush1.bf16.msra.mxu0 %v3157
        %4339 = vmatprep.subr.bf16.mxu0 %v3162
        %4340 = vmatpush1.bf16.msra.mxu0 %v3161
        %4341 = vmatprep.subr.bf16.mxu0 %v3166
        %4342 = vmatpush1.bf16.msra.mxu0 %v3165
        %4343 = vmatprep.subr.bf16.mxu0 %v3170
        %4344 = vmatpush1.bf16.msra.mxu0 %v3169
        %4345 = vmatprep.subr.bf16.mxu0 %v3174
        %4346 = vmatpush1.bf16.msra.mxu0 %v3173
        %4347 = vmatprep.subr.bf16.mxu0 %v3178
        %4348 = vmatpush1.bf16.msra.mxu0 %v3177
        %4349 = vmatprep.subr.bf16.mxu0 %v3182
        %4350 = vmatpush1.bf16.msra.mxu0 %v3181
        %4351 = vmatprep.subr.bf16.mxu0 %v3186
        %4352 = vmatpush1.bf16.msra.mxu0 %v3185
        %4353 = vmatprep.subr.bf16.mxu0 %v3190
        %4354 = vmatpush1.bf16.msra.mxu0 %v3189
        %4355 = vmatprep.subr.bf16.mxu0 %v3194
        %4356 = vmatpush1.bf16.msra.mxu0 %v3193
        %4357 = vmatprep.subr.bf16.mxu0 %v3198
        %4358 = vmatpush1.bf16.msra.mxu0 %v3197
        %4359 = vmatprep.subr.bf16.mxu0 %v3202
        %4360 = vmatpush1.bf16.msra.mxu0 %v3201
        %4361 = vmatprep.mubr.bf16.mxu0 %v292
        %4362 = vmatmul.mubr.bf16.gmra.mrb[0].mxu0 %v291
        %v4363 = vpop.f32.mrb[0].mxu0
        %v4364 = vadd.f32 %v4323, %v4363
        %v4365 = vpop.f32.mrb[0].mxu0
        %v4366 = vadd.f32 %v4325, %v4365
        %v4367 = vpop.f32.mrb[0].mxu0
        %v4368 = vpop.f32.mrb[0].mxu0
        %4369 = vdwg.mxu0
        %4370 = vmatprep.subr.bf16.mxu0 %v3206
        %4371 = vmatpush1.bf16.msra.mxu0 %v3205
        %4372 = vmatprep.subr.bf16.mxu0 %v3210
        %4373 = vmatpush1.bf16.msra.mxu0 %v3209
        %4374 = vmatprep.subr.bf16.mxu0 %v3214
        %4375 = vmatpush1.bf16.msra.mxu0 %v3213
        %4376 = vmatprep.subr.bf16.mxu0 %v3218
        %4377 = vmatpush1.bf16.msra.mxu0 %v3217
        %4378 = vmatprep.subr.bf16.mxu0 %v3222
        %4379 = vmatpush1.bf16.msra.mxu0 %v3221
        %4380 = vmatprep.subr.bf16.mxu0 %v3226
        %4381 = vmatpush1.bf16.msra.mxu0 %v3225
        %4382 = vmatprep.subr.bf16.mxu0 %v3230
        %4383 = vmatpush1.bf16.msra.mxu0 %v3229
        %4384 = vmatprep.subr.bf16.mxu0 %v3234
        %4385 = vmatpush1.bf16.msra.mxu0 %v3233
        %4386 = vmatprep.subr.bf16.mxu0 %v3238
        %4387 = vmatpush1.bf16.msra.mxu0 %v3237
        %4388 = vmatprep.subr.bf16.mxu0 %v3242
        %4389 = vmatpush1.bf16.msra.mxu0 %v3241
        %4390 = vmatprep.subr.bf16.mxu0 %v3246
        %4391 = vmatpush1.bf16.msra.mxu0 %v3245
        %4392 = vmatprep.subr.bf16.mxu0 %v3250
        %4393 = vmatpush1.bf16.msra.mxu0 %v3249
        %4394 = vmatprep.subr.bf16.mxu0 %v3254
        %4395 = vmatpush1.bf16.msra.mxu0 %v3253
        %4396 = vmatprep.subr.bf16.mxu0 %v3258
        %4397 = vmatpush1.bf16.msra.mxu0 %v3257
        %4398 = vmatprep.subr.bf16.mxu0 %v3262
        %4399 = vmatpush1.bf16.msra.mxu0 %v3261
        %4400 = vmatprep.subr.bf16.mxu0 %v3266
        %4401 = vmatpush1.bf16.msra.mxu0 %v3265
        %4402 = vmatprep.mubr.bf16.mxu0 %v294
        %4403 = vmatmul.mubr.bf16.gmra.mrb[0].mxu0 %v293
        %v4404 = vpop.f32.mrb[0].mxu0
        %v4405 = vadd.f32 %v4364, %v4404
        %v4406 = vpop.f32.mrb[0].mxu0
        %v4407 = vadd.f32 %v4366, %v4406
        %v4408 = vpop.f32.mrb[0].mxu0
        %v4409 = vpop.f32.mrb[0].mxu0
        %4410 = vdwg.mxu0
        %4411 = vmatprep.subr.bf16.mxu0 %v3270
        %4412 = vmatpush1.bf16.msra.mxu0 %v3269
        %4413 = vmatprep.subr.bf16.mxu0 %v3274
        %4414 = vmatpush1.bf16.msra.mxu0 %v3273
        %4415 = vmatprep.subr.bf16.mxu0 %v3278
        %4416 = vmatpush1.bf16.msra.mxu0 %v3277
        %4417 = vmatprep.subr.bf16.mxu0 %v3282
        %4418 = vmatpush1.bf16.msra.mxu0 %v3281
        %4419 = vmatprep.subr.bf16.mxu0 %v3286
        %4420 = vmatpush1.bf16.msra.mxu0 %v3285
        %4421 = vmatprep.subr.bf16.mxu0 %v3290
        %4422 = vmatpush1.bf16.msra.mxu0 %v3289
        %4423 = vmatprep.subr.bf16.mxu0 %v3294
        %4424 = vmatpush1.bf16.msra.mxu0 %v3293
        %4425 = vmatprep.subr.bf16.mxu0 %v3298
        %4426 = vmatpush1.bf16.msra.mxu0 %v3297
        %4427 = vmatprep.subr.bf16.mxu0 %v3302
        %4428 = vmatpush1.bf16.msra.mxu0 %v3301
        %4429 = vmatprep.subr.bf16.mxu0 %v3306
        %4430 = vmatpush1.bf16.msra.mxu0 %v3305
        %4431 = vmatprep.subr.bf16.mxu0 %v3310
        %4432 = vmatpush1.bf16.msra.mxu0 %v3309
        %4433 = vmatprep.subr.bf16.mxu0 %v3314
        %4434 = vmatpush1.bf16.msra.mxu0 %v3313
        %4435 = vmatprep.subr.bf16.mxu0 %v3318
        %4436 = vmatpush1.bf16.msra.mxu0 %v3317
        %4437 = vmatprep.subr.bf16.mxu0 %v3322
        %4438 = vmatpush1.bf16.msra.mxu0 %v3321
        %4439 = vmatprep.subr.bf16.mxu0 %v3326
        %4440 = vmatpush1.bf16.msra.mxu0 %v3325
        %4441 = vmatprep.subr.bf16.mxu0 %v3330
        %4442 = vmatpush1.bf16.msra.mxu0 %v3329
        %4443 = vmatprep.mubr.bf16.mxu0 %v296
        %4444 = vmatmul.mubr.bf16.gmra.mrb[0].mxu0 %v295
        %v4445 = vpop.f32.mrb[0].mxu0
        %v4446 = vadd.f32 %v4405, %v4445
        %v4447 = vpop.f32.mrb[0].mxu0
        %v4448 = vadd.f32 %v4407, %v4447
        %v4449 = vpop.f32.mrb[0].mxu0
        %v4450 = vpop.f32.mrb[0].mxu0
        %4451 = vdwg.mxu0
        %4452 = vmatprep.subr.bf16.mxu0 %v3334
        %4453 = vmatpush1.bf16.msra.mxu0 %v3333
        %4454 = vmatprep.subr.bf16.mxu0 %v3338
        %4455 = vmatpush1.bf16.msra.mxu0 %v3337
        %4456 = vmatprep.subr.bf16.mxu0 %v3342
        %4457 = vmatpush1.bf16.msra.mxu0 %v3341
        %4458 = vmatprep.subr.bf16.mxu0 %v3346
        %4459 = vmatpush1.bf16.msra.mxu0 %v3345
        %4460 = vmatprep.subr.bf16.mxu0 %v3350
        %4461 = vmatpush1.bf16.msra.mxu0 %v3349
        %4462 = vmatprep.subr.bf16.mxu0 %v3354
        %4463 = vmatpush1.bf16.msra.mxu0 %v3353
        %4464 = vmatprep.subr.bf16.mxu0 %v3358
        %4465 = vmatpush1.bf16.msra.mxu0 %v3357
        %4466 = vmatprep.subr.bf16.mxu0 %v3362
        %4467 = vmatpush1.bf16.msra.mxu0 %v3361
        %4468 = vmatprep.subr.bf16.mxu0 %v3366
        %4469 = vmatpush1.bf16.msra.mxu0 %v3365
        %4470 = vmatprep.subr.bf16.mxu0 %v3370
        %4471 = vmatpush1.bf16.msra.mxu0 %v3369
        %4472 = vmatprep.subr.bf16.mxu0 %v3374
        %4473 = vmatpush1.bf16.msra.mxu0 %v3373
        %4474 = vmatprep.subr.bf16.mxu0 %v3378
        %4475 = vmatpush1.bf16.msra.mxu0 %v3377
        %4476 = vmatprep.subr.bf16.mxu0 %v3382
        %4477 = vmatpush1.bf16.msra.mxu0 %v3381
        %4478 = vmatprep.subr.bf16.mxu0 %v3386
        %4479 = vmatpush1.bf16.msra.mxu0 %v3385
        %4480 = vmatprep.subr.bf16.mxu0 %v3390
        %4481 = vmatpush1.bf16.msra.mxu0 %v3389
        %4482 = vmatprep.subr.bf16.mxu0 %v3394
        %4483 = vmatpush1.bf16.msra.mxu0 %v3393
        %4484 = vmatprep.mubr.bf16.mxu0 %v298
        %4485 = vmatmul.mubr.bf16.gmra.mrb[0].mxu0 %v297
        %v4486 = vpop.f32.mrb[0].mxu0
        %v4487 = vadd.f32 %v4446, %v4486
        %v4488 = vpop.f32.mrb[0].mxu0
        %v4489 = vadd.f32 %v4448, %v4488
        %v4490 = vpop.f32.mrb[0].mxu0
        %v4491 = vpop.f32.mrb[0].mxu0
        %4492 = vdwg.mxu0
        %4493 = vmatprep.subr.bf16.mxu0 %v3398
        %4494 = vmatpush1.bf16.msra.mxu0 %v3397
        %4495 = vmatprep.subr.bf16.mxu0 %v3402
        %4496 = vmatpush1.bf16.msra.mxu0 %v3401
        %4497 = vmatprep.subr.bf16.mxu0 %v3406
        %4498 = vmatpush1.bf16.msra.mxu0 %v3405
        %4499 = vmatprep.subr.bf16.mxu0 %v3410
        %4500 = vmatpush1.bf16.msra.mxu0 %v3409
        %4501 = vmatprep.subr.bf16.mxu0 %v3414
        %4502 = vmatpush1.bf16.msra.mxu0 %v3413
        %4503 = vmatprep.subr.bf16.mxu0 %v3418
        %4504 = vmatpush1.bf16.msra.mxu0 %v3417
        %4505 = vmatprep.subr.bf16.mxu0 %v3422
        %4506 = vmatpush1.bf16.msra.mxu0 %v3421
        %4507 = vmatprep.subr.bf16.mxu0 %v3426
        %4508 = vmatpush1.bf16.msra.mxu0 %v3425
        %4509 = vmatprep.subr.bf16.mxu0 %v3430
        %4510 = vmatpush1.bf16.msra.mxu0 %v3429
        %4511 = vmatprep.subr.bf16.mxu0 %v3434
        %4512 = vmatpush1.bf16.msra.mxu0 %v3433
        %4513 = vmatprep.subr.bf16.mxu0 %v3438
        %4514 = vmatpush1.bf16.msra.mxu0 %v3437
        %4515 = vmatprep.subr.bf16.mxu0 %v3442
        %4516 = vmatpush1.bf16.msra.mxu0 %v3441
        %4517 = vmatprep.subr.bf16.mxu0 %v3446
        %4518 = vmatpush1.bf16.msra.mxu0 %v3445
        %4519 = vmatprep.subr.bf16.mxu0 %v3450
        %4520 = vmatpush1.bf16.msra.mxu0 %v3449
        %4521 = vmatprep.subr.bf16.mxu0 %v3454
        %4522 = vmatpush1.bf16.msra.mxu0 %v3453
        %4523 = vmatprep.subr.bf16.mxu0 %v3458
        %4524 = vmatpush1.bf16.msra.mxu0 %v3457
        %4525 = vmatprep.mubr.bf16.mxu0 %v300
        %4526 = vmatmul.mubr.bf16.gmra.mrb[0].mxu0 %v299
        %v4527 = vpop.f32.mrb[0].mxu0
        %v4528 = vadd.f32 %v4487, %v4527
        %v4529 = vpop.f32.mrb[0].mxu0
        %v4530 = vadd.f32 %v4489, %v4529
        %v4531 = vpop.f32.mrb[0].mxu0
        %v4532 = vpop.f32.mrb[0].mxu0
        %4533 = vdwg.mxu0
        %4534 = vmatprep.subr.bf16.mxu0 %v3462
        %4535 = vmatpush1.bf16.msra.mxu0 %v3461
        %4536 = vmatprep.subr.bf16.mxu0 %v3466
        %4537 = vmatpush1.bf16.msra.mxu0 %v3465
        %4538 = vmatprep.subr.bf16.mxu0 %v3470
        %4539 = vmatpush1.bf16.msra.mxu0 %v3469
        %4540 = vmatprep.subr.bf16.mxu0 %v3474
        %4541 = vmatpush1.bf16.msra.mxu0 %v3473
        %4542 = vmatprep.subr.bf16.mxu0 %v3478
        %4543 = vmatpush1.bf16.msra.mxu0 %v3477
        %4544 = vmatprep.subr.bf16.mxu0 %v3482
        %4545 = vmatpush1.bf16.msra.mxu0 %v3481
        %4546 = vmatprep.subr.bf16.mxu0 %v3486
        %4547 = vmatpush1.bf16.msra.mxu0 %v3485
        %4548 = vmatprep.subr.bf16.mxu0 %v3490
        %4549 = vmatpush1.bf16.msra.mxu0 %v3489
        %4550 = vmatprep.subr.bf16.mxu0 %v3494
        %4551 = vmatpush1.bf16.msra.mxu0 %v3493
        %4552 = vmatprep.subr.bf16.mxu0 %v3498
        %4553 = vmatpush1.bf16.msra.mxu0 %v3497
        %4554 = vmatprep.subr.bf16.mxu0 %v3502
        %4555 = vmatpush1.bf16.msra.mxu0 %v3501
        %4556 = vmatprep.subr.bf16.mxu0 %v3506
        %4557 = vmatpush1.bf16.msra.mxu0 %v3505
        %4558 = vmatprep.subr.bf16.mxu0 %v3510
        %4559 = vmatpush1.bf16.msra.mxu0 %v3509
        %4560 = vmatprep.subr.bf16.mxu0 %v3514
        %4561 = vmatpush1.bf16.msra.mxu0 %v3513
        %4562 = vmatprep.subr.bf16.mxu0 %v3518
        %4563 = vmatpush1.bf16.msra.mxu0 %v3517
        %4564 = vmatprep.subr.bf16.mxu0 %v3522
        %4565 = vmatpush1.bf16.msra.mxu0 %v3521
        %4566 = vmatprep.mubr.bf16.mxu0 %v302
        %4567 = vmatmul.mubr.bf16.gmra.mrb[0].mxu0 %v301
        %v4568 = vpop.f32.mrb[0].mxu0
        %v4569 = vadd.f32 %v4528, %v4568
        %v4570 = vpop.f32.mrb[0].mxu0
        %v4571 = vadd.f32 %v4530, %v4570
        %v4572 = vpop.f32.mrb[0].mxu0
        %v4573 = vpop.f32.mrb[0].mxu0
        %4574 = vdwg.mxu0
        %4575 = vmatprep.subr.bf16.mxu0 %v2888
        %4576 = vmatpush1.bf16.msra.mxu0 %v2887
        %4577 = vmatprep.subr.bf16.mxu0 %v2892
        %4578 = vmatpush1.bf16.msra.mxu0 %v2891
        %4579 = vmatprep.subr.bf16.mxu0 %v2896
        %4580 = vmatpush1.bf16.msra.mxu0 %v2895
        %4581 = vmatprep.subr.bf16.mxu0 %v2900
        %4582 = vmatpush1.bf16.msra.mxu0 %v2899
        %4583 = vmatprep.subr.bf16.mxu0 %v2904
        %4584 = vmatpush1.bf16.msra.mxu0 %v2903
        %4585 = vmatprep.subr.bf16.mxu0 %v2908
        %4586 = vmatpush1.bf16.msra.mxu0 %v2907
        %4587 = vmatprep.subr.bf16.mxu0 %v2912
        %4588 = vmatpush1.bf16.msra.mxu0 %v2911
        %4589 = vmatprep.subr.bf16.mxu0 %v2916
        %4590 = vmatpush1.bf16.msra.mxu0 %v2915
        %4591 = vmatprep.subr.bf16.mxu0 %v2920
        %4592 = vmatpush1.bf16.msra.mxu0 %v2919
        %4593 = vmatprep.subr.bf16.mxu0 %v2924
        %4594 = vmatpush1.bf16.msra.mxu0 %v2923
        %4595 = vmatprep.subr.bf16.mxu0 %v2928
        %4596 = vmatpush1.bf16.msra.mxu0 %v2927
        %4597 = vmatprep.subr.bf16.mxu0 %v2932
        %4598 = vmatpush1.bf16.msra.mxu0 %v2931
        %4599 = vmatprep.subr.bf16.mxu0 %v2936
        %4600 = vmatpush1.bf16.msra.mxu0 %v2935
        %4601 = vmatprep.subr.bf16.mxu0 %v2940
        %4602 = vmatpush1.bf16.msra.mxu0 %v2939
        %4603 = vmatprep.subr.bf16.mxu0 %v2944
        %4604 = vmatpush1.bf16.msra.mxu0 %v2943
        %4605 = vmatprep.subr.bf16.mxu0 %v2948
        %4606 = vmatpush1.bf16.msra.mxu0 %v2947
        %4607 = vmatprep.mubr.bf16.mxu0 %v284
        %4608 = vmatmul.mubr.bf16.gmra.mrb[0].mxu0 %v283
        %v4609 = vpop.f32.mrb[0].mxu0
        %v4610 = vadd.f32 %v956, %v4609
        %v4611 = vpop.f32.mrb[0].mxu0
        %v4612 = vadd.f32 %v960, %v4611
        %v4613 = vpop.f32.mrb[0].mxu0
        %v4614 = vpop.f32.mrb[0].mxu0
        %4615 = vdwg.mxu0
        %4616 = vmatprep.subr.bf16.mxu0 %v2952
        %4617 = vmatpush1.bf16.msra.mxu0 %v2951
        %4618 = vmatprep.subr.bf16.mxu0 %v2956
        %4619 = vmatpush1.bf16.msra.mxu0 %v2955
        %4620 = vmatprep.subr.bf16.mxu0 %v2960
        %4621 = vmatpush1.bf16.msra.mxu0 %v2959
        %4622 = vmatprep.subr.bf16.mxu0 %v2964
        %4623 = vmatpush1.bf16.msra.mxu0 %v2963
        %4624 = vmatprep.subr.bf16.mxu0 %v2968
        %4625 = vmatpush1.bf16.msra.mxu0 %v2967
        %4626 = vmatprep.subr.bf16.mxu0 %v2972
        %4627 = vmatpush1.bf16.msra.mxu0 %v2971
        %4628 = vmatprep.subr.bf16.mxu0 %v2976
        %4629 = vmatpush1.bf16.msra.mxu0 %v2975
        %4630 = vmatprep.subr.bf16.mxu0 %v2980
        %4631 = vmatpush1.bf16.msra.mxu0 %v2979
        %4632 = vmatprep.subr.bf16.mxu0 %v2984
        %4633 = vmatpush1.bf16.msra.mxu0 %v2983
        %4634 = vmatprep.subr.bf16.mxu0 %v2988
        %4635 = vmatpush1.bf16.msra.mxu0 %v2987
        %4636 = vmatprep.subr.bf16.mxu0 %v2992
        %4637 = vmatpush1.bf16.msra.mxu0 %v2991
        %4638 = vmatprep.subr.bf16.mxu0 %v2996
        %4639 = vmatpush1.bf16.msra.mxu0 %v2995
        %4640 = vmatprep.subr.bf16.mxu0 %v3000
        %4641 = vmatpush1.bf16.msra.mxu0 %v2999
        %4642 = vmatprep.subr.bf16.mxu0 %v3004
        %4643 = vmatpush1.bf16.msra.mxu0 %v3003
        %4644 = vmatprep.subr.bf16.mxu0 %v3008
        %4645 = vmatpush1.bf16.msra.mxu0 %v3007
        %4646 = vmatprep.subr.bf16.mxu0 %v3012
        %4647 = vmatpush1.bf16.msra.mxu0 %v3011
        %4648 = vmatprep.mubr.bf16.mxu0 %v286
        %4649 = vmatmul.mubr.bf16.gmra.mrb[0].mxu0 %v285
        %v4650 = vpop.f32.mrb[0].mxu0
        %v4651 = vadd.f32 %v4610, %v4650
        %v4652 = vpop.f32.mrb[0].mxu0
        %v4653 = vadd.f32 %v4612, %v4652
        %v4654 = vpop.f32.mrb[0].mxu0
        %v4655 = vpop.f32.mrb[0].mxu0
        %4656 = vdwg.mxu0
        %4657 = vmatprep.subr.bf16.mxu0 %v3016
        %4658 = vmatpush1.bf16.msra.mxu0 %v3015
        %4659 = vmatprep.subr.bf16.mxu0 %v3020
        %4660 = vmatpush1.bf16.msra.mxu0 %v3019
        %4661 = vmatprep.subr.bf16.mxu0 %v3024
        %4662 = vmatpush1.bf16.msra.mxu0 %v3023
        %4663 = vmatprep.subr.bf16.mxu0 %v3028
        %4664 = vmatpush1.bf16.msra.mxu0 %v3027
        %4665 = vmatprep.subr.bf16.mxu0 %v3032
        %4666 = vmatpush1.bf16.msra.mxu0 %v3031
        %4667 = vmatprep.subr.bf16.mxu0 %v3036
        %4668 = vmatpush1.bf16.msra.mxu0 %v3035
        %4669 = vmatprep.subr.bf16.mxu0 %v3040
        %4670 = vmatpush1.bf16.msra.mxu0 %v3039
        %4671 = vmatprep.subr.bf16.mxu0 %v3044
        %4672 = vmatpush1.bf16.msra.mxu0 %v3043
        %4673 = vmatprep.subr.bf16.mxu0 %v3048
        %4674 = vmatpush1.bf16.msra.mxu0 %v3047
        %4675 = vmatprep.subr.bf16.mxu0 %v3052
        %4676 = vmatpush1.bf16.msra.mxu0 %v3051
        %4677 = vmatprep.subr.bf16.mxu0 %v3056
        %4678 = vmatpush1.bf16.msra.mxu0 %v3055
        %4679 = vmatprep.subr.bf16.mxu0 %v3060
        %4680 = vmatpush1.bf16.msra.mxu0 %v3059
        %4681 = vmatprep.subr.bf16.mxu0 %v3064
        %4682 = vmatpush1.bf16.msra.mxu0 %v3063
        %4683 = vmatprep.subr.bf16.mxu0 %v3068
        %4684 = vmatpush1.bf16.msra.mxu0 %v3067
        %4685 = vmatprep.subr.bf16.mxu0 %v3072
        %4686 = vmatpush1.bf16.msra.mxu0 %v3071
        %4687 = vmatprep.subr.bf16.mxu0 %v3076
        %4688 = vmatpush1.bf16.msra.mxu0 %v3075
        %4689 = vmatprep.mubr.bf16.mxu0 %v288
        %4690 = vmatmul.mubr.bf16.gmra.mrb[0].mxu0 %v287
        %v4691 = vpop.f32.mrb[0].mxu0
        %v4692 = vadd.f32 %v4651, %v4691
        %v4693 = vpop.f32.mrb[0].mxu0
        %v4694 = vadd.f32 %v4653, %v4693
        %v4695 = vpop.f32.mrb[0].mxu0
        %v4696 = vpop.f32.mrb[0].mxu0
        %4697 = vdwg.mxu0
        %4698 = vmatprep.subr.bf16.mxu0 %v3080
        %4699 = vmatpush1.bf16.msra.mxu0 %v3079
        %4700 = vmatprep.subr.bf16.mxu0 %v3084
        %4701 = vmatpush1.bf16.msra.mxu0 %v3083
        %4702 = vmatprep.subr.bf16.mxu0 %v3088
        %4703 = vmatpush1.bf16.msra.mxu0 %v3087
        %4704 = vmatprep.subr.bf16.mxu0 %v3092
        %4705 = vmatpush1.bf16.msra.mxu0 %v3091
        %4706 = vmatprep.subr.bf16.mxu0 %v3096
        %4707 = vmatpush1.bf16.msra.mxu0 %v3095
        %4708 = vmatprep.subr.bf16.mxu0 %v3100
        %4709 = vmatpush1.bf16.msra.mxu0 %v3099
        %4710 = vmatprep.subr.bf16.mxu0 %v3104
        %4711 = vmatpush1.bf16.msra.mxu0 %v3103
        %4712 = vmatprep.subr.bf16.mxu0 %v3108
        %4713 = vmatpush1.bf16.msra.mxu0 %v3107
        %4714 = vmatprep.subr.bf16.mxu0 %v3112
        %4715 = vmatpush1.bf16.msra.mxu0 %v3111
        %4716 = vmatprep.subr.bf16.mxu0 %v3116
        %4717 = vmatpush1.bf16.msra.mxu0 %v3115
        %4718 = vmatprep.subr.bf16.mxu0 %v3120
        %4719 = vmatpush1.bf16.msra.mxu0 %v3119
        %4720 = vmatprep.subr.bf16.mxu0 %v3124
        %4721 = vmatpush1.bf16.msra.mxu0 %v3123
        %4722 = vmatprep.subr.bf16.mxu0 %v3128
        %4723 = vmatpush1.bf16.msra.mxu0 %v3127
        %4724 = vmatprep.subr.bf16.mxu0 %v3132
        %4725 = vmatpush1.bf16.msra.mxu0 %v3131
        %4726 = vmatprep.subr.bf16.mxu0 %v3136
        %4727 = vmatpush1.bf16.msra.mxu0 %v3135
        %4728 = vmatprep.subr.bf16.mxu0 %v3140
        %4729 = vmatpush1.bf16.msra.mxu0 %v3139
        %4730 = vmatprep.mubr.bf16.mxu0 %v290
        %4731 = vmatmul.mubr.bf16.gmra.mrb[0].mxu0 %v289
        %v4732 = vpop.f32.mrb[0].mxu0
        %v4733 = vadd.f32 %v4692, %v4732
        %v4734 = vpop.f32.mrb[0].mxu0
        %v4735 = vadd.f32 %v4694, %v4734
        %v4736 = vpop.f32.mrb[0].mxu0
        %v4737 = vpop.f32.mrb[0].mxu0
        %4738 = vdwg.mxu0
        %4739 = vmatprep.subr.bf16.mxu0 %v3144
        %4740 = vmatpush1.bf16.msra.mxu0 %v3143
        %4741 = vmatprep.subr.bf16.mxu0 %v3148
        %4742 = vmatpush1.bf16.msra.mxu0 %v3147
        %4743 = vmatprep.subr.bf16.mxu0 %v3152
        %4744 = vmatpush1.bf16.msra.mxu0 %v3151
        %4745 = vmatprep.subr.bf16.mxu0 %v3156
        %4746 = vmatpush1.bf16.msra.mxu0 %v3155
        %4747 = vmatprep.subr.bf16.mxu0 %v3160
        %4748 = vmatpush1.bf16.msra.mxu0 %v3159
        %4749 = vmatprep.subr.bf16.mxu0 %v3164
        %4750 = vmatpush1.bf16.msra.mxu0 %v3163
        %4751 = vmatprep.subr.bf16.mxu0 %v3168
        %4752 = vmatpush1.bf16.msra.mxu0 %v3167
        %4753 = vmatprep.subr.bf16.mxu0 %v3172
        %4754 = vmatpush1.bf16.msra.mxu0 %v3171
        %4755 = vmatprep.subr.bf16.mxu0 %v3176
        %4756 = vmatpush1.bf16.msra.mxu0 %v3175
        %4757 = vmatprep.subr.bf16.mxu0 %v3180
        %4758 = vmatpush1.bf16.msra.mxu0 %v3179
        %4759 = vmatprep.subr.bf16.mxu0 %v3184
        %4760 = vmatpush1.bf16.msra.mxu0 %v3183
        %4761 = vmatprep.subr.bf16.mxu0 %v3188
        %4762 = vmatpush1.bf16.msra.mxu0 %v3187
        %4763 = vmatprep.subr.bf16.mxu0 %v3192
        %4764 = vmatpush1.bf16.msra.mxu0 %v3191
        %4765 = vmatprep.subr.bf16.mxu0 %v3196
        %4766 = vmatpush1.bf16.msra.mxu0 %v3195
        %4767 = vmatprep.subr.bf16.mxu0 %v3200
        %4768 = vmatpush1.bf16.msra.mxu0 %v3199
        %4769 = vmatprep.subr.bf16.mxu0 %v3204
        %4770 = vmatpush1.bf16.msra.mxu0 %v3203
        %4771 = vmatprep.mubr.bf16.mxu0 %v292
        %4772 = vmatmul.mubr.bf16.gmra.mrb[0].mxu0 %v291
        %v4773 = vpop.f32.mrb[0].mxu0
        %v4774 = vadd.f32 %v4733, %v4773
        %v4775 = vpop.f32.mrb[0].mxu0
        %v4776 = vadd.f32 %v4735, %v4775
        %v4777 = vpop.f32.mrb[0].mxu0
        %v4778 = vpop.f32.mrb[0].mxu0
        %4779 = vdwg.mxu0
        %4780 = vmatprep.subr.bf16.mxu0 %v3208
        %4781 = vmatpush1.bf16.msra.mxu0 %v3207
        %4782 = vmatprep.subr.bf16.mxu0 %v3212
        %4783 = vmatpush1.bf16.msra.mxu0 %v3211
        %4784 = vmatprep.subr.bf16.mxu0 %v3216
        %4785 = vmatpush1.bf16.msra.mxu0 %v3215
        %4786 = vmatprep.subr.bf16.mxu0 %v3220
        %4787 = vmatpush1.bf16.msra.mxu0 %v3219
        %4788 = vmatprep.subr.bf16.mxu0 %v3224
        %4789 = vmatpush1.bf16.msra.mxu0 %v3223
        %4790 = vmatprep.subr.bf16.mxu0 %v3228
        %4791 = vmatpush1.bf16.msra.mxu0 %v3227
        %4792 = vmatprep.subr.bf16.mxu0 %v3232
        %4793 = vmatpush1.bf16.msra.mxu0 %v3231
        %4794 = vmatprep.subr.bf16.mxu0 %v3236
        %4795 = vmatpush1.bf16.msra.mxu0 %v3235
        %4796 = vmatprep.subr.bf16.mxu0 %v3240
        %4797 = vmatpush1.bf16.msra.mxu0 %v3239
        %4798 = vmatprep.subr.bf16.mxu0 %v3244
        %4799 = vmatpush1.bf16.msra.mxu0 %v3243
        %4800 = vmatprep.subr.bf16.mxu0 %v3248
        %4801 = vmatpush1.bf16.msra.mxu0 %v3247
        %4802 = vmatprep.subr.bf16.mxu0 %v3252
        %4803 = vmatpush1.bf16.msra.mxu0 %v3251
        %4804 = vmatprep.subr.bf16.mxu0 %v3256
        %4805 = vmatpush1.bf16.msra.mxu0 %v3255
        %4806 = vmatprep.subr.bf16.mxu0 %v3260
        %4807 = vmatpush1.bf16.msra.mxu0 %v3259
        %4808 = vmatprep.subr.bf16.mxu0 %v3264
        %4809 = vmatpush1.bf16.msra.mxu0 %v3263
        %4810 = vmatprep.subr.bf16.mxu0 %v3268
        %4811 = vmatpush1.bf16.msra.mxu0 %v3267
        %4812 = vmatprep.mubr.bf16.mxu0 %v294
        %4813 = vmatmul.mubr.bf16.gmra.mrb[0].mxu0 %v293
        %v4814 = vpop.f32.mrb[0].mxu0
        %v4815 = vadd.f32 %v4774, %v4814
        %v4816 = vpop.f32.mrb[0].mxu0
        %v4817 = vadd.f32 %v4776, %v4816
        %v4818 = vpop.f32.mrb[0].mxu0
        %v4819 = vpop.f32.mrb[0].mxu0
        %4820 = vdwg.mxu0
        %4821 = vmatprep.subr.bf16.mxu0 %v3272
        %4822 = vmatpush1.bf16.msra.mxu0 %v3271
        %4823 = vmatprep.subr.bf16.mxu0 %v3276
        %4824 = vmatpush1.bf16.msra.mxu0 %v3275
        %4825 = vmatprep.subr.bf16.mxu0 %v3280
        %4826 = vmatpush1.bf16.msra.mxu0 %v3279
        %4827 = vmatprep.subr.bf16.mxu0 %v3284
        %4828 = vmatpush1.bf16.msra.mxu0 %v3283
        %4829 = vmatprep.subr.bf16.mxu0 %v3288
        %4830 = vmatpush1.bf16.msra.mxu0 %v3287
        %4831 = vmatprep.subr.bf16.mxu0 %v3292
        %4832 = vmatpush1.bf16.msra.mxu0 %v3291
        %4833 = vmatprep.subr.bf16.mxu0 %v3296
        %4834 = vmatpush1.bf16.msra.mxu0 %v3295
        %4835 = vmatprep.subr.bf16.mxu0 %v3300
        %4836 = vmatpush1.bf16.msra.mxu0 %v3299
        %4837 = vmatprep.subr.bf16.mxu0 %v3304
        %4838 = vmatpush1.bf16.msra.mxu0 %v3303
        %4839 = vmatprep.subr.bf16.mxu0 %v3308
        %4840 = vmatpush1.bf16.msra.mxu0 %v3307
        %4841 = vmatprep.subr.bf16.mxu0 %v3312
        %4842 = vmatpush1.bf16.msra.mxu0 %v3311
        %4843 = vmatprep.subr.bf16.mxu0 %v3316
        %4844 = vmatpush1.bf16.msra.mxu0 %v3315
        %4845 = vmatprep.subr.bf16.mxu0 %v3320
        %4846 = vmatpush1.bf16.msra.mxu0 %v3319
        %4847 = vmatprep.subr.bf16.mxu0 %v3324
        %4848 = vmatpush1.bf16.msra.mxu0 %v3323
        %4849 = vmatprep.subr.bf16.mxu0 %v3328
        %4850 = vmatpush1.bf16.msra.mxu0 %v3327
        %4851 = vmatprep.subr.bf16.mxu0 %v3332
        %4852 = vmatpush1.bf16.msra.mxu0 %v3331
        %4853 = vmatprep.mubr.bf16.mxu0 %v296
        %4854 = vmatmul.mubr.bf16.gmra.mrb[0].mxu0 %v295
        %v4855 = vpop.f32.mrb[0].mxu0
        %v4856 = vadd.f32 %v4815, %v4855
        %v4857 = vpop.f32.mrb[0].mxu0
        %v4858 = vadd.f32 %v4817, %v4857
        %v4859 = vpop.f32.mrb[0].mxu0
        %v4860 = vpop.f32.mrb[0].mxu0
        %4861 = vdwg.mxu0
        %4862 = vmatprep.subr.bf16.mxu0 %v3336
        %4863 = vmatpush1.bf16.msra.mxu0 %v3335
        %4864 = vmatprep.subr.bf16.mxu0 %v3340
        %4865 = vmatpush1.bf16.msra.mxu0 %v3339
        %4866 = vmatprep.subr.bf16.mxu0 %v3344
        %4867 = vmatpush1.bf16.msra.mxu0 %v3343
        %4868 = vmatprep.subr.bf16.mxu0 %v3348
        %4869 = vmatpush1.bf16.msra.mxu0 %v3347
        %4870 = vmatprep.subr.bf16.mxu0 %v3352
        %4871 = vmatpush1.bf16.msra.mxu0 %v3351
        %4872 = vmatprep.subr.bf16.mxu0 %v3356
        %4873 = vmatpush1.bf16.msra.mxu0 %v3355
        %4874 = vmatprep.subr.bf16.mxu0 %v3360
        %4875 = vmatpush1.bf16.msra.mxu0 %v3359
        %4876 = vmatprep.subr.bf16.mxu0 %v3364
        %4877 = vmatpush1.bf16.msra.mxu0 %v3363
        %4878 = vmatprep.subr.bf16.mxu0 %v3368
        %4879 = vmatpush1.bf16.msra.mxu0 %v3367
        %4880 = vmatprep.subr.bf16.mxu0 %v3372
        %4881 = vmatpush1.bf16.msra.mxu0 %v3371
        %4882 = vmatprep.subr.bf16.mxu0 %v3376
        %4883 = vmatpush1.bf16.msra.mxu0 %v3375
        %4884 = vmatprep.subr.bf16.mxu0 %v3380
        %4885 = vmatpush1.bf16.msra.mxu0 %v3379
        %4886 = vmatprep.subr.bf16.mxu0 %v3384
        %4887 = vmatpush1.bf16.msra.mxu0 %v3383
        %4888 = vmatprep.subr.bf16.mxu0 %v3388
        %4889 = vmatpush1.bf16.msra.mxu0 %v3387
        %4890 = vmatprep.subr.bf16.mxu0 %v3392
        %4891 = vmatpush1.bf16.msra.mxu0 %v3391
        %4892 = vmatprep.subr.bf16.mxu0 %v3396
        %4893 = vmatpush1.bf16.msra.mxu0 %v3395
        %4894 = vmatprep.mubr.bf16.mxu0 %v298
        %4895 = vmatmul.mubr.bf16.gmra.mrb[0].mxu0 %v297
        %v4896 = vpop.f32.mrb[0].mxu0
        %v4897 = vadd.f32 %v4856, %v4896
        %v4898 = vpop.f32.mrb[0].mxu0
        %v4899 = vadd.f32 %v4858, %v4898
        %v4900 = vpop.f32.mrb[0].mxu0
        %v4901 = vpop.f32.mrb[0].mxu0
        %4902 = vdwg.mxu0
        %4903 = vmatprep.subr.bf16.mxu0 %v3400
        %4904 = vmatpush1.bf16.msra.mxu0 %v3399
        %4905 = vmatprep.subr.bf16.mxu0 %v3404
        %4906 = vmatpush1.bf16.msra.mxu0 %v3403
        %4907 = vmatprep.subr.bf16.mxu0 %v3408
        %4908 = vmatpush1.bf16.msra.mxu0 %v3407
        %4909 = vmatprep.subr.bf16.mxu0 %v3412
        %4910 = vmatpush1.bf16.msra.mxu0 %v3411
        %4911 = vmatprep.subr.bf16.mxu0 %v3416
        %4912 = vmatpush1.bf16.msra.mxu0 %v3415
        %4913 = vmatprep.subr.bf16.mxu0 %v3420
        %4914 = vmatpush1.bf16.msra.mxu0 %v3419
        %4915 = vmatprep.subr.bf16.mxu0 %v3424
        %4916 = vmatpush1.bf16.msra.mxu0 %v3423
        %4917 = vmatprep.subr.bf16.mxu0 %v3428
        %4918 = vmatpush1.bf16.msra.mxu0 %v3427
        %4919 = vmatprep.subr.bf16.mxu0 %v3432
        %4920 = vmatpush1.bf16.msra.mxu0 %v3431
        %4921 = vmatprep.subr.bf16.mxu0 %v3436
        %4922 = vmatpush1.bf16.msra.mxu0 %v3435
        %4923 = vmatprep.subr.bf16.mxu0 %v3440
        %4924 = vmatpush1.bf16.msra.mxu0 %v3439
        %4925 = vmatprep.subr.bf16.mxu0 %v3444
        %4926 = vmatpush1.bf16.msra.mxu0 %v3443
        %4927 = vmatprep.subr.bf16.mxu0 %v3448
        %4928 = vmatpush1.bf16.msra.mxu0 %v3447
        %4929 = vmatprep.subr.bf16.mxu0 %v3452
        %4930 = vmatpush1.bf16.msra.mxu0 %v3451
        %4931 = vmatprep.subr.bf16.mxu0 %v3456
        %4932 = vmatpush1.bf16.msra.mxu0 %v3455
        %4933 = vmatprep.subr.bf16.mxu0 %v3460
        %4934 = vmatpush1.bf16.msra.mxu0 %v3459
        %4935 = vmatprep.mubr.bf16.mxu0 %v300
        %4936 = vmatmul.mubr.bf16.gmra.mrb[0].mxu0 %v299
        %v4937 = vpop.f32.mrb[0].mxu0
        %v4938 = vadd.f32 %v4897, %v4937
        %v4939 = vpop.f32.mrb[0].mxu0
        %v4940 = vadd.f32 %v4899, %v4939
        %v4941 = vpop.f32.mrb[0].mxu0
        %v4942 = vpop.f32.mrb[0].mxu0
        %4943 = vdwg.mxu0
        %4944 = vmatprep.subr.bf16.mxu0 %v3464
        %4945 = vmatpush1.bf16.msra.mxu0 %v3463
        %4946 = vmatprep.subr.bf16.mxu0 %v3468
        %4947 = vmatpush1.bf16.msra.mxu0 %v3467
        %4948 = vmatprep.subr.bf16.mxu0 %v3472
        %4949 = vmatpush1.bf16.msra.mxu0 %v3471
        %4950 = vmatprep.subr.bf16.mxu0 %v3476
        %4951 = vmatpush1.bf16.msra.mxu0 %v3475
        %4952 = vmatprep.subr.bf16.mxu0 %v3480
        %4953 = vmatpush1.bf16.msra.mxu0 %v3479
        %4954 = vmatprep.subr.bf16.mxu0 %v3484
        %4955 = vmatpush1.bf16.msra.mxu0 %v3483
        %4956 = vmatprep.subr.bf16.mxu0 %v3488
        %4957 = vmatpush1.bf16.msra.mxu0 %v3487
        %4958 = vmatprep.subr.bf16.mxu0 %v3492
        %4959 = vmatpush1.bf16.msra.mxu0 %v3491
        %4960 = vmatprep.subr.bf16.mxu0 %v3496
        %4961 = vmatpush1.bf16.msra.mxu0 %v3495
        %4962 = vmatprep.subr.bf16.mxu0 %v3500
        %4963 = vmatpush1.bf16.msra.mxu0 %v3499
        %4964 = vmatprep.subr.bf16.mxu0 %v3504
        %4965 = vmatpush1.bf16.msra.mxu0 %v3503
        %4966 = vmatprep.subr.bf16.mxu0 %v3508
        %4967 = vmatpush1.bf16.msra.mxu0 %v3507
        %4968 = vmatprep.subr.bf16.mxu0 %v3512
        %4969 = vmatpush1.bf16.msra.mxu0 %v3511
        %4970 = vmatprep.subr.bf16.mxu0 %v3516
        %4971 = vmatpush1.bf16.msra.mxu0 %v3515
        %4972 = vmatprep.subr.bf16.mxu0 %v3520
        %4973 = vmatpush1.bf16.msra.mxu0 %v3519
        %4974 = vmatprep.subr.bf16.mxu0 %v3524
        %4975 = vmatpush1.bf16.msra.mxu0 %v3523
        %4976 = vmatprep.mubr.bf16.mxu0 %v302
        %4977 = vmatmul.mubr.bf16.gmra.mrb[0].mxu0 %v301
        %v4978 = vpop.f32.mrb[0].mxu0
        %v4979 = vadd.f32 %v4938, %v4978
        %v4980 = vpop.f32.mrb[0].mxu0
        %v4981 = vadd.f32 %v4940, %v4980
        %v4982 = vpop.f32.mrb[0].mxu0
        %v4983 = vpop.f32.mrb[0].mxu0
        %4984 = vdwg.mxu0
        %v4985 = vmax.f32 %v4569, 0.0
        %v4986 = vmax.f32 %v4571, 0.0
        %v4987 = vmax.f32 %v4979, 0.0
        %v4988 = vmax.f32 %v4981, 0.0
        %v4989 = vld [vmem:[%s3] sm:$0xff]
        %v4990 = vld [vmem:[%s3 + $0x8] sm:$0xff]
        %v4991 = vld [vmem:[%s3 + $0x10] sm:$0xff]
        %v4992 = vld [vmem:[%s3 + $0x18] sm:$0xff]
        %v4993 = vld [vmem:[%s3 + $0x20] sm:$0xff]
        %v4994 = vld [vmem:[%s3 + $0x28] sm:$0xff]
        %v4995 = vld [vmem:[%s3 + $0x30] sm:$0xff]
        %v4996 = vld [vmem:[%s3 + $0x38] sm:$0xff]
        %v4997 = vld [vmem:[%s3 + $0x40] sm:$0xff]
        %v4998 = vld [vmem:[%s3 + $0x48] sm:$0xff]
        %v4999 = vld [vmem:[%s3 + $0x50] sm:$0xff]
        %v5000 = vld [vmem:[%s3 + $0x58] sm:$0xff]
        %v5001 = vld [vmem:[%s3 + $0x60] sm:$0xff]
        %v5002 = vld [vmem:[%s3 + $0x68] sm:$0xff]
        %v5003 = vld [vmem:[%s3 + $0x70] sm:$0xff]
        %v5004 = vld [vmem:[%s3 + $0x78] sm:$0xff]
        %v5005 = vld [vmem:[%s3 + $0x80] sm:$0xff]
        %v5006 = vld [vmem:[%s3 + $0x88] sm:$0xff]
        %v5007 = vld [vmem:[%s3 + $0x90] sm:$0xff]
        %v5008 = vld [vmem:[%s3 + $0x98] sm:$0xff]
        %v5009 = vld [vmem:[%s3 + $0xa0] sm:$0xff]
        %v5010 = vld [vmem:[%s3 + $0xa8] sm:$0xff]
        %v5011 = vld [vmem:[%s3 + $0xb0] sm:$0xff]
        %v5012 = vld [vmem:[%s3 + $0xb8] sm:$0xff]
        %v5013 = vld [vmem:[%s3 + $0xc0] sm:$0xff]
        %v5014 = vld [vmem:[%s3 + $0xc8] sm:$0xff]
        %v5015 = vld [vmem:[%s3 + $0xd0] sm:$0xff]
        %v5016 = vld [vmem:[%s3 + $0xd8] sm:$0xff]
        %v5017 = vld [vmem:[%s3 + $0xe0] sm:$0xff]
        %v5018 = vld [vmem:[%s3 + $0xe8] sm:$0xff]
        %v5019 = vld [vmem:[%s3 + $0xf0] sm:$0xff]
        %v5020 = vld [vmem:[%s3 + $0xf8] sm:$0xff]
        %v5021 = vld [vmem:[%s3 + $0x100] sm:$0xff]
        %v5022 = vld [vmem:[%s3 + $0x108] sm:$0xff]
        %v5023 = vld [vmem:[%s3 + $0x110] sm:$0xff]
        %v5024 = vld [vmem:[%s3 + $0x118] sm:$0xff]
        %v5025 = vld [vmem:[%s3 + $0x120] sm:$0xff]
        %v5026 = vld [vmem:[%s3 + $0x128] sm:$0xff]
        %v5027 = vld [vmem:[%s3 + $0x130] sm:$0xff]
        %v5028 = vld [vmem:[%s3 + $0x138] sm:$0xff]
        %v5029 = vld [vmem:[%s3 + $0x140] sm:$0xff]
        %v5030 = vld [vmem:[%s3 + $0x148] sm:$0xff]
        %v5031 = vld [vmem:[%s3 + $0x150] sm:$0xff]
        %v5032 = vld [vmem:[%s3 + $0x158] sm:$0xff]
        %v5033 = vld [vmem:[%s3 + $0x160] sm:$0xff]
        %v5034 = vld [vmem:[%s3 + $0x168] sm:$0xff]
        %v5035 = vld [vmem:[%s3 + $0x170] sm:$0xff]
        %v5036 = vld [vmem:[%s3 + $0x178] sm:$0xff]
        %v5037 = vld [vmem:[%s3 + $0x180] sm:$0xff]
        %v5038 = vld [vmem:[%s3 + $0x188] sm:$0xff]
        %v5039 = vld [vmem:[%s3 + $0x190] sm:$0xff]
        %v5040 = vld [vmem:[%s3 + $0x198] sm:$0xff]
        %v5041 = vld [vmem:[%s3 + $0x1a0] sm:$0xff]
        %v5042 = vld [vmem:[%s3 + $0x1a8] sm:$0xff]
        %v5043 = vld [vmem:[%s3 + $0x1b0] sm:$0xff]
        %v5044 = vld [vmem:[%s3 + $0x1b8] sm:$0xff]
        %v5045 = vld [vmem:[%s3 + $0x1c0] sm:$0xff]
        %v5046 = vld [vmem:[%s3 + $0x1c8] sm:$0xff]
        %v5047 = vld [vmem:[%s3 + $0x1d0] sm:$0xff]
        %v5048 = vld [vmem:[%s3 + $0x1d8] sm:$0xff]
        %v5049 = vld [vmem:[%s3 + $0x1e0] sm:$0xff]
        %v5050 = vld [vmem:[%s3 + $0x1e8] sm:$0xff]
        %v5051 = vld [vmem:[%s3 + $0x1f0] sm:$0xff]
        %v5052 = vld [vmem:[%s3 + $0x1f8] sm:$0xff]
        %v5053 = vld [vmem:[#allocation6] sm:$0x1]
        %v5055 = vlaneseq
        %v5056 = vshrl.u32 %v5055, 7
        %v5057 = vsub.s32 0, %v5056
        %v5058 = vrot.slane %v5053, %v5057
        %5060 = vmatprep.subr.mxu0 0.0
        %5061 = vmatpush1.msra.mxu0 %v4989
        %5062 = vmatprep.subr.mxu0 0.0
        %5063 = vmatpush1.msra.mxu0 %v4990
        %5064 = vmatprep.subr.mxu0 0.0
        %5065 = vmatpush1.msra.mxu0 %v4991
        %5066 = vmatprep.subr.mxu0 0.0
        %5067 = vmatpush1.msra.mxu0 %v4992
        %5068 = vmatprep.subr.mxu0 0.0
        %5069 = vmatpush1.msra.mxu0 %v4993
        %5070 = vmatprep.subr.mxu0 0.0
        %5071 = vmatpush1.msra.mxu0 %v4994
        %5072 = vmatprep.subr.mxu0 0.0
        %5073 = vmatpush1.msra.mxu0 %v4995
        %5074 = vmatprep.subr.mxu0 0.0
        %5075 = vmatpush1.msra.mxu0 %v4996
        %5076 = vmatprep.subr.mxu0 0.0
        %5077 = vmatpush1.msra.mxu0 %v4997
        %5078 = vmatprep.subr.mxu0 0.0
        %5079 = vmatpush1.msra.mxu0 %v4998
        %5080 = vmatprep.subr.mxu0 0.0
        %5081 = vmatpush1.msra.mxu0 %v4999
        %5082 = vmatprep.subr.mxu0 0.0
        %5083 = vmatpush1.msra.mxu0 %v5000
        %5084 = vmatprep.subr.mxu0 0.0
        %5085 = vmatpush1.msra.mxu0 %v5001
        %5086 = vmatprep.subr.mxu0 0.0
        %5087 = vmatpush1.msra.mxu0 %v5002
        %5088 = vmatprep.subr.mxu0 0.0
        %5089 = vmatpush1.msra.mxu0 %v5003
        %5090 = vmatprep.subr.mxu0 0.0
        %5091 = vmatpush1.msra.mxu0 %v5004
        %5092 = vmatprep.subr.mxu0 0.0
        %5093 = vmatpush1.msra.mxu0 %v5005
        %5094 = vmatprep.subr.mxu0 0.0
        %5095 = vmatpush1.msra.mxu0 %v5006
        %5096 = vmatprep.subr.mxu0 0.0
        %5097 = vmatpush1.msra.mxu0 %v5007
        %5098 = vmatprep.subr.mxu0 0.0
        %5099 = vmatpush1.msra.mxu0 %v5008
        %5100 = vmatprep.subr.mxu0 0.0
        %5101 = vmatpush1.msra.mxu0 %v5009
        %5102 = vmatprep.subr.mxu0 0.0
        %5103 = vmatpush1.msra.mxu0 %v5010
        %5104 = vmatprep.subr.mxu0 0.0
        %5105 = vmatpush1.msra.mxu0 %v5011
        %5106 = vmatprep.subr.mxu0 0.0
        %5107 = vmatpush1.msra.mxu0 %v5012
        %5108 = vmatprep.subr.mxu0 0.0
        %5109 = vmatpush1.msra.mxu0 %v5013
        %5110 = vmatprep.subr.mxu0 0.0
        %5111 = vmatpush1.msra.mxu0 %v5014
        %5112 = vmatprep.subr.mxu0 0.0
        %5113 = vmatpush1.msra.mxu0 %v5015
        %5114 = vmatprep.subr.mxu0 0.0
        %5115 = vmatpush1.msra.mxu0 %v5016
        %5116 = vmatprep.subr.mxu0 0.0
        %5117 = vmatpush1.msra.mxu0 %v5017
        %5118 = vmatprep.subr.mxu0 0.0
        %5119 = vmatpush1.msra.mxu0 %v5018
        %5120 = vmatprep.subr.mxu0 0.0
        %5121 = vmatpush1.msra.mxu0 %v5019
        %5122 = vmatprep.subr.mxu0 0.0
        %5123 = vmatpush1.msra.mxu0 %v5020
        %5124 = vmatprep.mubr.f32.mxu0 %v4986
        %5125 = vmatmul.mubr.f32.gmra.mrb[0].mxu0 %v4985
        %v5126 = vpop.f32.mrb[0].mxu0
        %v5127 = vadd.f32 %v5058, %v5126
        %v5128 = vpop.f32.mrb[0].mxu0
        %5129 = vdwg.mxu0
        %5130 = vmatprep.subr.mxu0 0.0
        %5131 = vmatpush1.msra.mxu0 %v5021
        %5132 = vmatprep.subr.mxu0 0.0
        %5133 = vmatpush1.msra.mxu0 %v5022
        %5134 = vmatprep.subr.mxu0 0.0
        %5135 = vmatpush1.msra.mxu0 %v5023
        %5136 = vmatprep.subr.mxu0 0.0
        %5137 = vmatpush1.msra.mxu0 %v5024
        %5138 = vmatprep.subr.mxu0 0.0
        %5139 = vmatpush1.msra.mxu0 %v5025
        %5140 = vmatprep.subr.mxu0 0.0
        %5141 = vmatpush1.msra.mxu0 %v5026
        %5142 = vmatprep.subr.mxu0 0.0
        %5143 = vmatpush1.msra.mxu0 %v5027
        %5144 = vmatprep.subr.mxu0 0.0
        %5145 = vmatpush1.msra.mxu0 %v5028
        %5146 = vmatprep.subr.mxu0 0.0
        %5147 = vmatpush1.msra.mxu0 %v5029
        %5148 = vmatprep.subr.mxu0 0.0
        %5149 = vmatpush1.msra.mxu0 %v5030
        %5150 = vmatprep.subr.mxu0 0.0
        %5151 = vmatpush1.msra.mxu0 %v5031
        %5152 = vmatprep.subr.mxu0 0.0
        %5153 = vmatpush1.msra.mxu0 %v5032
        %5154 = vmatprep.subr.mxu0 0.0
        %5155 = vmatpush1.msra.mxu0 %v5033
        %5156 = vmatprep.subr.mxu0 0.0
        %5157 = vmatpush1.msra.mxu0 %v5034
        %5158 = vmatprep.subr.mxu0 0.0
        %5159 = vmatpush1.msra.mxu0 %v5035
        %5160 = vmatprep.subr.mxu0 0.0
        %5161 = vmatpush1.msra.mxu0 %v5036
        %5162 = vmatprep.subr.mxu0 0.0
        %5163 = vmatpush1.msra.mxu0 %v5037
        %5164 = vmatprep.subr.mxu0 0.0
        %5165 = vmatpush1.msra.mxu0 %v5038
        %5166 = vmatprep.subr.mxu0 0.0
        %5167 = vmatpush1.msra.mxu0 %v5039
        %5168 = vmatprep.subr.mxu0 0.0
        %5169 = vmatpush1.msra.mxu0 %v5040
        %5170 = vmatprep.subr.mxu0 0.0
        %5171 = vmatpush1.msra.mxu0 %v5041
        %5172 = vmatprep.subr.mxu0 0.0
        %5173 = vmatpush1.msra.mxu0 %v5042
        %5174 = vmatprep.subr.mxu0 0.0
        %5175 = vmatpush1.msra.mxu0 %v5043
        %5176 = vmatprep.subr.mxu0 0.0
        %5177 = vmatpush1.msra.mxu0 %v5044
        %5178 = vmatprep.subr.mxu0 0.0
        %5179 = vmatpush1.msra.mxu0 %v5045
        %5180 = vmatprep.subr.mxu0 0.0
        %5181 = vmatpush1.msra.mxu0 %v5046
        %5182 = vmatprep.subr.mxu0 0.0
        %5183 = vmatpush1.msra.mxu0 %v5047
        %5184 = vmatprep.subr.mxu0 0.0
        %5185 = vmatpush1.msra.mxu0 %v5048
        %5186 = vmatprep.subr.mxu0 0.0
        %5187 = vmatpush1.msra.mxu0 %v5049
        %5188 = vmatprep.subr.mxu0 0.0
        %5189 = vmatpush1.msra.mxu0 %v5050
        %5190 = vmatprep.subr.mxu0 0.0
        %5191 = vmatpush1.msra.mxu0 %v5051
        %5192 = vmatprep.subr.mxu0 0.0
        %5193 = vmatpush1.msra.mxu0 %v5052
        %5194 = vmatprep.mubr.f32.mxu0 %v4988
        %5195 = vmatmul.mubr.f32.gmra.mrb[0].mxu0 %v4987
        %v5196 = vpop.f32.mrb[0].mxu0
        %v5197 = vadd.f32 %v5127, %v5196
        %v5198 = vpop.f32.mrb[0].mxu0
        %5199 = vdwg.mxu0
        %vm5200 = vcmask 15360
        %v5201 = vsel %vm5200, %v5197, -inf
        %5202 = vmax.xlane.f32.xlu0 %v5201
        %v5203 = vpop.xlane.xlu0 %5202
        %v5204 = vsub.f32 %v5197, %v5203
        %v5205 = vmul.f32 %v5204, 1.442695
        %v5206 = vpow.pop %v5205
        %v5207 = vsel %vm5200, %v5206, 0.0
        %5208 = vadd.xlane.f32.xlu0 %v5207
        %v5209 = vpop.xlane.xlu0 %5208
        %v5210 = vlog2.pop %v5209
        %v5211 = vmul.f32 %v5210, 0.6931472
        %v5212 = vsub.f32 %v5204, %v5211
        %5213 = vst.msk [vmem:[%s262] sm:$0xff] %vm5200, %v5212
        %p5214 = scmp.lt.s32.totalorder %s18, 1
        %s5215 = scalar_select %p5214, %s18, 1
        %s5216 = smul.addr %s5215, 8
        %s5217 = scalar_lea.vmem %s5, %s5216
        // Predicated region
        $region53: #{classify_forward.1} parent=39 // pred_check
          %p5218 = pneg %p146
        $region54: #{classify_forward.1} parent=39 // pred_check_branch
          %5220 = sbr.rel (%p5218) target = $region56
        $region55: #{classify_forward.1} parent=39 // pred_region
          _
        $region56: #{classify_forward.1} parent=39 // pred_fallthru
          _
      $region40: #{classify_forward.1} parent=5 // pred_fallthru
        _
      %p5221 = scmp.le.s32.totalorder 2, %s13
      // Predicated region
      $region57: #{classify_forward.1} parent=5 // pred_check
        %p5222 = pneg %p5221
      $region58: #{classify_forward.1} parent=5 // pred_check_branch
        %5224 = sbr.rel (%p5222) target = $region60
      $region59: #{classify_forward.1} parent=5 // pred_region
        %s5225 = ssub.s32 %s13, 2
        // Predicated region
        $region61: #{classify_forward.1} parent=59 // pred_check
          %p5226 = pneg %p152
        $region62: #{classify_forward.1} parent=59 // pred_check_branch
          %5228 = sbr.rel (%p5226) target = $region64
        $region63: #{classify_forward.1} parent=59 // pred_region
          %p5229 = scmp.lt.s32.totalorder %s19, 1
          %s5230 = scalar_select %p5229, %s19, 1
          %s5231 = smul.addr %s5230, 8
          %s5232 = scalar_lea.vmem %s5, %s5231
        $region64: #{classify_forward.1} parent=59 // pred_fallthru
          _
      $region60: #{classify_forward.1} parent=5 // pred_fallthru
        _
    $region6: #{classify_forward.1} parent=1 // loop_footer
      %s17 = sadd.s32 1, %s13
    $region7: #{classify_forward.1} parent=1 // loop_footer_branch
      %12 = sbr.rel target = $region3
    $region8: #{classify_forward.1} parent=1 // loop_exit
      _
    %5233 = vsyncpa [#allocation3], 1
    %s5234 = scalar_lea.sflag [#allocation3], 1
    %5235 = vsyncpa %s5234, 1
    %5236 = vsyncpa [#allocation5], 1

</llo_original>
